<compile_context>
chip_gen: v7x
topology: tpu7x:2x2x1
jax: 0.10.0
libtpu: 0.0.40
codegen_flags: <defaults>
</compile_context>

<pallas_src>
import jax
import jax.numpy as jnp
from jax import lax
from jax.experimental import pallas as pl
from jax.experimental.pallas import tpu as pltpu


# -----------------------------------------------------------------------------
# Pallas kernel: forward pass for a block of `block_n` batch rows
# -----------------------------------------------------------------------------
def pointnet_seg_kernel(x_ref,
                        w1_ref, b1_ref,
                        w2_ref, b2_ref,
                        w3_ref, b3_ref,
                        w4a_ref, w4b_ref, w4c_ref, b4_ref,
                        w5t_ref, b5t_ref,
                        out_ref):
    nb, pts, _ = x_ref.shape
    m = nb * pts
    bf16 = jnp.bfloat16
    f32 = jnp.float32

    x = x_ref[...].reshape(m, 3)                                   # (M, 3) f32

    # point_features[0]: Conv1d(3->64)+BN+ReLU.  K=3 -> three VPU broadcast FMAs
    w1 = w1_ref[...]                                               # (3, 64)
    h1 = (x[:, 0:1] * w1[0:1, :]
          + x[:, 1:2] * w1[1:2, :]
          + x[:, 2:3] * w1[2:3, :]
          + b1_ref[...])
    h1 = jnp.maximum(h1, 0.0)                                      # (M, 64) f32
    h1b = h1.astype(bf16)

    # point_features[1]: Conv1d(64->128)+BN+ReLU
    h2 = jnp.dot(h1b, w2_ref[...], preferred_element_type=f32) + b2_ref[...]
    h2 = jnp.maximum(h2, 0.0)                                      # (M, 128)
    h2b = h2.astype(bf16)

    # global_features: Conv1d(128->128)+BN (no ReLU)
    g = jnp.dot(h2b, w3_ref[...], preferred_element_type=f32) + b3_ref[...]

    # pooling chain == exact global max over points, per batch row
    gmax = jnp.max(g.reshape(nb, pts, g.shape[-1]), axis=1)        # (Nb, 128)

    # classifier[0] with the concat folded away:
    #   feat @ w4 = h1 @ w4a + h2 @ w4b + broadcast(gmax @ w4c)
    glob = jnp.dot(gmax.astype(bf16), w4c_ref[...],
                   preferred_element_type=f32)                     # (Nb, 128)
    h4 = (jnp.dot(h1b, w4a_ref[...], preferred_element_type=f32)
          + jnp.dot(h2b, w4b_ref[...], preferred_element_type=f32)
          + b4_ref[...])                                           # (M, 128)
    h4 = h4.reshape(nb, pts, h4.shape[-1]) + glob[:, None, :]
    h4 = jnp.maximum(h4, 0.0)
    h4b = h4.reshape(m, h4.shape[-1]).astype(bf16)                 # (M, 128)

    # classifier[1]: compute transposed so the output block is lane-dense (S, P)
    #   out^T = w5 . h4^T   -> (S, M)
    out_t = lax.dot_general(w5t_ref[...], h4b,
                            dimension_numbers=(((1,), (1,)), ((), ())),
                            preferred_element_type=f32) + b5t_ref[...]
    # scatter back per batch row: (S, M) -> (Nb, S, P)
    for b in range(nb):
        out_ref[b] = out_t[:, b * pts:(b + 1) * pts]


# -----------------------------------------------------------------------------
# Parameter construction / BN folding (plain JAX glue)
# -----------------------------------------------------------------------------
def _fold_bn(w, b, gamma, beta, mean, var, eps=1e-5):
    """Fold eval-mode BatchNorm1d into a preceding 1x1 Conv1d.  w: (Cout, Cin)."""
    scale = gamma / jnp.sqrt(var + eps)
    return w * scale[:, None], (b - mean) * scale + beta


def make_params(key, num_seg_classes):
    """Deterministic synthetic parameters matching the PyTorch module shapes."""
    dims = [(64, 3), (128, 64), (128, 128), (128, 320), (num_seg_classes, 128)]
    folded = []
    for i, (cout, cin) in enumerate(dims):
        key, kw, kb, kg, kbe, km, kv = jax.random.split(key, 7)
        w = jax.random.normal(kw, (cout, cin), jnp.float32) * 0.1
        b = jax.random.normal(kb, (cout,), jnp.float32) * 0.05
        if i < 4:  # first four convs are followed by BatchNorm1d
            gamma = 1.0 + 0.1 * jax.random.normal(kg, (cout,), jnp.float32)
            beta = 0.05 * jax.random.normal(kbe, (cout,), jnp.float32)
            mean = 0.1 * jax.random.normal(km, (cout,), jnp.float32)
            var = jnp.abs(jax.random.normal(kv, (cout,), jnp.float32)) + 0.5
            w, b = _fold_bn(w, b, gamma, beta, mean, var)
        folded.append((w, b))

    (w1, b1), (w2, b2), (w3, b3), (w4, b4), (w5, b5) = folded
    bf16 = jnp.bfloat16
    w1_t = w1.T                                   # (3, 64)   f32 (VPU first layer)
    w2_t = w2.T.astype(bf16)                      # (64, 128)
    w3_t = w3.T.astype(bf16)                      # (128, 128)
    w4_t = w4.T                                   # (320, 128)
    w4a = w4_t[0:64].astype(bf16)                 # h1 part
    w4b = w4_t[64:192].astype(bf16)               # h2 part
    w4c = w4_t[192:320].astype(bf16)              # global-feature part
    w5_t = w5.astype(bf16)                        # (S, 128) == (Cout, Cin) already
    return (w1_t, b1[None, :],
            w2_t, b2[None, :],
            w3_t, b3[None, :],
            w4a, w4b, w4c, b4[None, :],
            w5_t, b5[:, None])


# -----------------------------------------------------------------------------
# Wrapper: pallas_call with grid over blocks of the batch dimension
# -----------------------------------------------------------------------------
def _pick_block_n(n, p, target_rows=2048):
    """Largest batch block with block_n*P <= target_rows, keeping >=2 grid steps."""
    divisors = [d for d in range(1, n + 1) if n % d == 0 and d * p <= target_rows]
    if not divisors:
        return 1
    multi_step = [d for d in divisors if n // d >= 2]
    return max(multi_step) if multi_step else max(divisors)


def mini_pointnet_segmentation(x, params, num_seg_classes, block_n=None):
    """x: (N, P, 3) float32  ->  logits (N, num_seg_classes, P) (PyTorch NCL)."""
    n, p, c = x.shape
    assert c == 3
    assert p % 8 == 0
    if block_n is None:
        block_n = _pick_block_n(n, p)
    assert n % block_n == 0

    flat_params = list(params)
    param_specs = [pl.BlockSpec(a.shape, lambda i: (0, 0)) for a in flat_params]

    out = pl.pallas_call(
        pointnet_seg_kernel,
        out_shape=jax.ShapeDtypeStruct((n, num_seg_classes, p), jnp.float32),
        grid_spec=pltpu.PrefetchScalarGridSpec(
            num_scalar_prefetch=0,
            grid=(n // block_n,),
            in_specs=[pl.BlockSpec((block_n, p, 3), lambda i: (i, 0, 0))]
                     + param_specs,
            out_specs=pl.BlockSpec((block_n, num_seg_classes, p),
                                   lambda i: (i, 0, 0)),
        ),
        compiler_params=pltpu.CompilerParams(
            dimension_semantics=("parallel",)),
    )(x, *flat_params)
    return out  # already (N, num_seg_classes, P) — no wrapper transpose


# -----------------------------------------------------------------------------
# Pure-JAX reference (same folded bf16 params, natural concat form)
# -----------------------------------------------------------------------------
def reference_forward(x, params):
    (w1, b1, w2, b2, w3, b3, w4a, w4b, w4c, b4, w5t, b5t) = params
    bf16, f32 = jnp.bfloat16, jnp.float32
    # first layer in f32, same FMA form as the kernel
    h1 = jnp.maximum(x[..., 0:1] * w1[0:1, :]
                     + x[..., 1:2] * w1[1:2, :]
                     + x[..., 2:3] * w1[2:3, :] + b1, 0.0)
    h1b = h1.astype(bf16)
    h2 = jnp.maximum(
        jnp.einsum('npc,cd->npd', h1b, w2, preferred_element_type=f32) + b2, 0.0)
    h2b = h2.astype(bf16)
    g = jnp.einsum('npc,cd->npd', h2b, w3, preferred_element_type=f32) + b3
    gmax = jnp.max(g, axis=1, keepdims=True)
    gbc = jnp.broadcast_to(gmax, g.shape)
    feat = jnp.concatenate([h1, h2, gbc], axis=-1).astype(bf16)      # (N,P,320)
    w4 = jnp.concatenate([w4a, w4b, w4c], axis=0)                    # (320,128)
    h4 = jnp.maximum(
        jnp.einsum('npc,cd->npd', feat, w4, preferred_element_type=f32) + b4, 0.0)
    out = jnp.einsum('npc,sc->nps', h4.astype(bf16), w5t,
                     preferred_element_type=f32) + b5t[:, 0]
    return jnp.transpose(out, (0, 2, 1))                             # (N, S, P)


if __name__ == "__main__":
    N = 8                   # batch
    P = 128                 # number_points (pool chain: 128 -> 16 -> 2 -> 1)
    S = 5                   # num_seg_classes

    key = jax.random.PRNGKey(0)
    kx, kp = jax.random.split(key)
    x = jax.random.normal(kx, (N, P, 3), jnp.float32)   # (N x num_points x 3)
    params = make_params(kp, S)

    y = mini_pointnet_segmentation(x, params, S)
    y = jax.block_until_ready(y)

    y_ref = reference_forward(x, params)
    assert y.shape == (N, S, P), y.shape
    assert jnp.allclose(y, y_ref, atol=1e-2, rtol=1e-2), \
        float(jnp.max(jnp.abs(y - y_ref)))

    print("KERNEL_OK")
</pallas_src>

<mosaic_0001>
module attributes {stable_mosaic.version = 11 : i64} {
  func.func @pointnet_seg_kernel(%arg0: i32, %arg1: memref<4x128x3xf32, #tpu.memory_space<vmem>>, %arg2: memref<3x64xf32, #tpu.memory_space<vmem>>, %arg3: memref<1x64xf32, #tpu.memory_space<vmem>>, %arg4: memref<64x128xbf16, #tpu.memory_space<vmem>>, %arg5: memref<1x128xf32, #tpu.memory_space<vmem>>, %arg6: memref<128x128xbf16, #tpu.memory_space<vmem>>, %arg7: memref<1x128xf32, #tpu.memory_space<vmem>>, %arg8: memref<64x128xbf16, #tpu.memory_space<vmem>>, %arg9: memref<128x128xbf16, #tpu.memory_space<vmem>>, %arg10: memref<128x128xbf16, #tpu.memory_space<vmem>>, %arg11: memref<1x128xf32, #tpu.memory_space<vmem>>, %arg12: memref<5x128xbf16, #tpu.memory_space<vmem>>, %arg13: memref<5x1xf32, #tpu.memory_space<vmem>>, %arg14: memref<4x5x128xf32, #tpu.memory_space<vmem>>) attributes {dimension_semantics = [#tpu.dimension_semantics<parallel>], iteration_bounds = array<i64: 2>, scalar_prefetch = 0 : i64, scratch_operands = 0 : i64, tpu.core_type = #tpu.core_type<tc>, window_params = [{transform_indices = @transform_0, window_bounds = array<i64: 4, 128, 3>}, {pipeline_mode = #tpu.pipeline_mode<synchronous>, transform_indices = @transform_1, window_bounds = array<i64: 3, 64>}, {pipeline_mode = #tpu.pipeline_mode<synchronous>, transform_indices = @transform_2, window_bounds = array<i64: 1, 64>}, {pipeline_mode = #tpu.pipeline_mode<synchronous>, transform_indices = @transform_3, window_bounds = array<i64: 64, 128>}, {pipeline_mode = #tpu.pipeline_mode<synchronous>, transform_indices = @transform_4, window_bounds = array<i64: 1, 128>}, {pipeline_mode = #tpu.pipeline_mode<synchronous>, transform_indices = @transform_5, window_bounds = array<i64: 128, 128>}, {pipeline_mode = #tpu.pipeline_mode<synchronous>, transform_indices = @transform_6, window_bounds = array<i64: 1, 128>}, {pipeline_mode = #tpu.pipeline_mode<synchronous>, transform_indices = @transform_7, window_bounds = array<i64: 64, 128>}, {pipeline_mode = #tpu.pipeline_mode<synchronous>, transform_indices = @transform_8, window_bounds = array<i64: 128, 128>}, {pipeline_mode = #tpu.pipeline_mode<synchronous>, transform_indices = @transform_9, window_bounds = array<i64: 128, 128>}, {pipeline_mode = #tpu.pipeline_mode<synchronous>, transform_indices = @transform_10, window_bounds = array<i64: 1, 128>}, {pipeline_mode = #tpu.pipeline_mode<synchronous>, transform_indices = @transform_11, window_bounds = array<i64: 5, 128>}, {pipeline_mode = #tpu.pipeline_mode<synchronous>, transform_indices = @transform_12, window_bounds = array<i64: 5, 1>}, {transform_indices = @transform_13, window_bounds = array<i64: 4, 5, 128>}]} {
    %c0 = arith.constant 0 : index
    %c0_0 = arith.constant 0 : index
    %c0_1 = arith.constant 0 : index
    %0 = vector.load %arg1[%c0, %c0_0, %c0_1] : memref<4x128x3xf32, #tpu.memory_space<vmem>>, vector<4x128x3xf32>
    %1 = vector.shape_cast %0 : vector<4x128x3xf32> to vector<512x3xf32>
    %c0_2 = arith.constant 0 : index
    %c0_3 = arith.constant 0 : index
    %2 = vector.load %arg2[%c0_2, %c0_3] : memref<3x64xf32, #tpu.memory_space<vmem>>, vector<3x64xf32>
    %3 = vector.extract_strided_slice %1 {offsets = [0, 0], sizes = [512, 1], strides = [1, 1]} : vector<512x3xf32> to vector<512x1xf32>
    %4 = vector.extract_strided_slice %2 {offsets = [0, 0], sizes = [1, 64], strides = [1, 1]} : vector<3x64xf32> to vector<1x64xf32>
    %5 = vector.broadcast %3 : vector<512x1xf32> to vector<512x64xf32>
    %6 = vector.broadcast %4 : vector<1x64xf32> to vector<512x64xf32>
    %7 = arith.mulf %5, %6 : vector<512x64xf32>
    %8 = vector.extract_strided_slice %1 {offsets = [0, 1], sizes = [512, 1], strides = [1, 1]} : vector<512x3xf32> to vector<512x1xf32>
    %9 = vector.extract_strided_slice %2 {offsets = [1, 0], sizes = [1, 64], strides = [1, 1]} : vector<3x64xf32> to vector<1x64xf32>
    %10 = vector.broadcast %8 : vector<512x1xf32> to vector<512x64xf32>
    %11 = vector.broadcast %9 : vector<1x64xf32> to vector<512x64xf32>
    %12 = arith.mulf %10, %11 : vector<512x64xf32>
    %13 = arith.addf %7, %12 : vector<512x64xf32>
    %14 = vector.extract_strided_slice %1 {offsets = [0, 2], sizes = [512, 1], strides = [1, 1]} : vector<512x3xf32> to vector<512x1xf32>
    %15 = vector.extract_strided_slice %2 {offsets = [2, 0], sizes = [1, 64], strides = [1, 1]} : vector<3x64xf32> to vector<1x64xf32>
    %16 = vector.broadcast %14 : vector<512x1xf32> to vector<512x64xf32>
    %17 = vector.broadcast %15 : vector<1x64xf32> to vector<512x64xf32>
    %18 = arith.mulf %16, %17 : vector<512x64xf32>
    %19 = arith.addf %13, %18 : vector<512x64xf32>
    %c0_4 = arith.constant 0 : index
    %c0_5 = arith.constant 0 : index
    %20 = vector.load %arg3[%c0_4, %c0_5] : memref<1x64xf32, #tpu.memory_space<vmem>>, vector<1x64xf32>
    %21 = vector.broadcast %20 : vector<1x64xf32> to vector<512x64xf32>
    %22 = arith.addf %19, %21 : vector<512x64xf32>
    %cst = arith.constant 0.000000e+00 : f32
    %23 = vector.broadcast %cst : f32 to vector<512x64xf32>
    %24 = arith.maximumf %22, %23 : vector<512x64xf32>
    %25 = arith.truncf %24 : vector<512x64xf32> to vector<512x64xbf16>
    %c0_6 = arith.constant 0 : index
    %c0_7 = arith.constant 0 : index
    %26 = vector.load %arg4[%c0_6, %c0_7] : memref<64x128xbf16, #tpu.memory_space<vmem>>, vector<64x128xbf16>
    %cst_8 = arith.constant dense<0.000000e+00> : vector<512x128xf32>
    %27 = tpu.matmul %25, %26, %cst_8 {dimension_numbers = #tpu.dot_dimension_numbers<[1], [0], [0], [1], [0, 0, 1, 1], [], []>} : vector<512x64xbf16>, vector<64x128xbf16>, vector<512x128xf32> -> vector<512x128xf32>
    %c0_9 = arith.constant 0 : index
    %c0_10 = arith.constant 0 : index
    %28 = vector.load %arg5[%c0_9, %c0_10] : memref<1x128xf32, #tpu.memory_space<vmem>>, vector<1x128xf32>
    %29 = vector.broadcast %28 : vector<1x128xf32> to vector<512x128xf32>
    %30 = arith.addf %27, %29 : vector<512x128xf32>
    %cst_11 = arith.constant 0.000000e+00 : f32
    %31 = vector.broadcast %cst_11 : f32 to vector<512x128xf32>
    %32 = arith.maximumf %30, %31 : vector<512x128xf32>
    %33 = arith.truncf %32 : vector<512x128xf32> to vector<512x128xbf16>
    %c0_12 = arith.constant 0 : index
    %c0_13 = arith.constant 0 : index
    %34 = vector.load %arg6[%c0_12, %c0_13] : memref<128x128xbf16, #tpu.memory_space<vmem>>, vector<128x128xbf16>
    %cst_14 = arith.constant dense<0.000000e+00> : vector<512x128xf32>
    %35 = tpu.matmul %33, %34, %cst_14 {dimension_numbers = #tpu.dot_dimension_numbers<[1], [0], [0], [1], [0, 0, 1, 1], [], []>} : vector<512x128xbf16>, vector<128x128xbf16>, vector<512x128xf32> -> vector<512x128xf32>
    %c0_15 = arith.constant 0 : index
    %c0_16 = arith.constant 0 : index
    %36 = vector.load %arg7[%c0_15, %c0_16] : memref<1x128xf32, #tpu.memory_space<vmem>>, vector<1x128xf32>
    %37 = vector.broadcast %36 : vector<1x128xf32> to vector<512x128xf32>
    %38 = arith.addf %35, %37 : vector<512x128xf32>
    %39 = vector.shape_cast %38 : vector<512x128xf32> to vector<4x128x128xf32>
    %cst_17 = arith.constant dense<0xFF800000> : vector<4x128xf32>
    %40 = vector.multi_reduction <maximumf>, %39, %cst_17 [1] : vector<4x128x128xf32> to vector<4x128xf32>
    %41 = arith.truncf %40 : vector<4x128xf32> to vector<4x128xbf16>
    %c0_18 = arith.constant 0 : index
    %c0_19 = arith.constant 0 : index
    %42 = vector.load %arg10[%c0_18, %c0_19] : memref<128x128xbf16, #tpu.memory_space<vmem>>, vector<128x128xbf16>
    %cst_20 = arith.constant dense<0.000000e+00> : vector<4x128xf32>
    %43 = tpu.matmul %41, %42, %cst_20 {dimension_numbers = #tpu.dot_dimension_numbers<[1], [0], [0], [1], [0, 0, 1, 1], [], []>} : vector<4x128xbf16>, vector<128x128xbf16>, vector<4x128xf32> -> vector<4x128xf32>
    %c0_21 = arith.constant 0 : index
    %c0_22 = arith.constant 0 : index
    %44 = vector.load %arg8[%c0_21, %c0_22] : memref<64x128xbf16, #tpu.memory_space<vmem>>, vector<64x128xbf16>
    %cst_23 = arith.constant dense<0.000000e+00> : vector<512x128xf32>
    %45 = tpu.matmul %25, %44, %cst_23 {dimension_numbers = #tpu.dot_dimension_numbers<[1], [0], [0], [1], [0, 0, 1, 1], [], []>} : vector<512x64xbf16>, vector<64x128xbf16>, vector<512x128xf32> -> vector<512x128xf32>
    %c0_24 = arith.constant 0 : index
    %c0_25 = arith.constant 0 : index
    %46 = vector.load %arg9[%c0_24, %c0_25] : memref<128x128xbf16, #tpu.memory_space<vmem>>, vector<128x128xbf16>
    %cst_26 = arith.constant dense<0.000000e+00> : vector<512x128xf32>
    %47 = tpu.matmul %33, %46, %cst_26 {dimension_numbers = #tpu.dot_dimension_numbers<[1], [0], [0], [1], [0, 0, 1, 1], [], []>} : vector<512x128xbf16>, vector<128x128xbf16>, vector<512x128xf32> -> vector<512x128xf32>
    %48 = arith.addf %45, %47 : vector<512x128xf32>
    %c0_27 = arith.constant 0 : index
    %c0_28 = arith.constant 0 : index
    %49 = vector.load %arg11[%c0_27, %c0_28] : memref<1x128xf32, #tpu.memory_space<vmem>>, vector<1x128xf32>
    %50 = vector.broadcast %49 : vector<1x128xf32> to vector<512x128xf32>
    %51 = arith.addf %48, %50 : vector<512x128xf32>
    %52 = vector.shape_cast %51 : vector<512x128xf32> to vector<4x128x128xf32>
    %53 = vector.shape_cast %43 : vector<4x128xf32> to vector<4x1x128xf32>
    %54 = vector.broadcast %53 : vector<4x1x128xf32> to vector<4x128x128xf32>
    %55 = arith.addf %52, %54 : vector<4x128x128xf32>
    %cst_29 = arith.constant 0.000000e+00 : f32
    %56 = vector.broadcast %cst_29 : f32 to vector<4x128x128xf32>
    %57 = arith.maximumf %55, %56 : vector<4x128x128xf32>
    %58 = vector.shape_cast %57 : vector<4x128x128xf32> to vector<512x128xf32>
    %59 = arith.truncf %58 : vector<512x128xf32> to vector<512x128xbf16>
    %c0_30 = arith.constant 0 : index
    %c0_31 = arith.constant 0 : index
    %60 = vector.load %arg12[%c0_30, %c0_31] : memref<5x128xbf16, #tpu.memory_space<vmem>>, vector<5x128xbf16>
    %cst_32 = arith.constant dense<0.000000e+00> : vector<5x512xf32>
    %61 = tpu.matmul %60, %59, %cst_32 {dimension_numbers = #tpu.dot_dimension_numbers<[1], [1], [0], [0], [0, 0, 1, 0], [], []>} : vector<5x128xbf16>, vector<512x128xbf16>, vector<5x512xf32> -> vector<5x512xf32>
    %c0_33 = arith.constant 0 : index
    %c0_34 = arith.constant 0 : index
    %62 = vector.load %arg13[%c0_33, %c0_34] : memref<5x1xf32, #tpu.memory_space<vmem>>, vector<5x1xf32>
    %63 = vector.broadcast %62 : vector<5x1xf32> to vector<5x512xf32>
    %64 = arith.addf %61, %63 : vector<5x512xf32>
    %65 = vector.extract_strided_slice %64 {offsets = [0, 0], sizes = [5, 128], strides = [1, 1]} : vector<5x512xf32> to vector<5x128xf32>
    %c0_35 = arith.constant 0 : index
    %c0_36 = arith.constant 0 : index
    %c0_37 = arith.constant 0 : index
    %66 = vector.load %arg14[%c0_35, %c0_36, %c0_37] : memref<4x5x128xf32, #tpu.memory_space<vmem>>, vector<1x5x128xf32>
    %67 = vector.shape_cast %66 : vector<1x5x128xf32> to vector<5x128xf32>
    %68 = vector.shape_cast %65 : vector<5x128xf32> to vector<1x5x128xf32>
    tpu.vector_store %arg14[%c0_35, %c0_36, %c0_37], %68 {strides = array<i32>} : memref<4x5x128xf32, #tpu.memory_space<vmem>>, vector<1x5x128xf32>,
    %69 = vector.extract_strided_slice %64 {offsets = [0, 128], sizes = [5, 128], strides = [1, 1]} : vector<5x512xf32> to vector<5x128xf32>
    %c1 = arith.constant 1 : index
    %c0_38 = arith.constant 0 : index
    %c0_39 = arith.constant 0 : index
    %70 = vector.load %arg14[%c1, %c0_38, %c0_39] : memref<4x5x128xf32, #tpu.memory_space<vmem>>, vector<1x5x128xf32>
    %71 = vector.shape_cast %70 : vector<1x5x128xf32> to vector<5x128xf32>
    %72 = vector.shape_cast %69 : vector<5x128xf32> to vector<1x5x128xf32>
    tpu.vector_store %arg14[%c1, %c0_38, %c0_39], %72 {strides = array<i32>} : memref<4x5x128xf32, #tpu.memory_space<vmem>>, vector<1x5x128xf32>,
    %73 = vector.extract_strided_slice %64 {offsets = [0, 256], sizes = [5, 128], strides = [1, 1]} : vector<5x512xf32> to vector<5x128xf32>
    %c2 = arith.constant 2 : index
    %c0_40 = arith.constant 0 : index
    %c0_41 = arith.constant 0 : index
    %74 = vector.load %arg14[%c2, %c0_40, %c0_41] : memref<4x5x128xf32, #tpu.memory_space<vmem>>, vector<1x5x128xf32>
    %75 = vector.shape_cast %74 : vector<1x5x128xf32> to vector<5x128xf32>
    %76 = vector.shape_cast %73 : vector<5x128xf32> to vector<1x5x128xf32>
    tpu.vector_store %arg14[%c2, %c0_40, %c0_41], %76 {strides = array<i32>} : memref<4x5x128xf32, #tpu.memory_space<vmem>>, vector<1x5x128xf32>,
    %77 = vector.extract_strided_slice %64 {offsets = [0, 384], sizes = [5, 128], strides = [1, 1]} : vector<5x512xf32> to vector<5x128xf32>
    %c3 = arith.constant 3 : index
    %c0_42 = arith.constant 0 : index
    %c0_43 = arith.constant 0 : index
    %78 = vector.load %arg14[%c3, %c0_42, %c0_43] : memref<4x5x128xf32, #tpu.memory_space<vmem>>, vector<1x5x128xf32>
    %79 = vector.shape_cast %78 : vector<1x5x128xf32> to vector<5x128xf32>
    %80 = vector.shape_cast %77 : vector<5x128xf32> to vector<1x5x128xf32>
    tpu.vector_store %arg14[%c3, %c0_42, %c0_43], %80 {strides = array<i32>} : memref<4x5x128xf32, #tpu.memory_space<vmem>>, vector<1x5x128xf32>,
    return
  }
  func.func @transform_0(%arg0: i32) -> (i32, i32, i32) {
    %c0_i32 = arith.constant 0 : i32
    %c0_i32_0 = arith.constant 0 : i32
    %c0_i32_1 = arith.constant 0 : i32
    return %arg0, %c0_i32, %c0_i32_0 : i32, i32, i32
  }
  func.func @transform_1(%arg0: i32) -> (i32, i32) {
    %c0_i32 = arith.constant 0 : i32
    %c0_i32_0 = arith.constant 0 : i32
    %c0_i32_1 = arith.constant 0 : i32
    return %c0_i32, %c0_i32_0 : i32, i32
  }
  func.func @transform_2(%arg0: i32) -> (i32, i32) {
    %c0_i32 = arith.constant 0 : i32
    %c0_i32_0 = arith.constant 0 : i32
    %c0_i32_1 = arith.constant 0 : i32
    return %c0_i32, %c0_i32_0 : i32, i32
  }
  func.func @transform_3(%arg0: i32) -> (i32, i32) {
    %c0_i32 = arith.constant 0 : i32
    %c0_i32_0 = arith.constant 0 : i32
    %c0_i32_1 = arith.constant 0 : i32
    return %c0_i32, %c0_i32_0 : i32, i32
  }
  func.func @transform_4(%arg0: i32) -> (i32, i32) {
    %c0_i32 = arith.constant 0 : i32
    %c0_i32_0 = arith.constant 0 : i32
    %c0_i32_1 = arith.constant 0 : i32
    return %c0_i32, %c0_i32_0 : i32, i32
  }
  func.func @transform_5(%arg0: i32) -> (i32, i32) {
    %c0_i32 = arith.constant 0 : i32
    %c0_i32_0 = arith.constant 0 : i32
    %c0_i32_1 = arith.constant 0 : i32
    return %c0_i32, %c0_i32_0 : i32, i32
  }
  func.func @transform_6(%arg0: i32) -> (i32, i32) {
    %c0_i32 = arith.constant 0 : i32
    %c0_i32_0 = arith.constant 0 : i32
    %c0_i32_1 = arith.constant 0 : i32
    return %c0_i32, %c0_i32_0 : i32, i32
  }
  func.func @transform_7(%arg0: i32) -> (i32, i32) {
    %c0_i32 = arith.constant 0 : i32
    %c0_i32_0 = arith.constant 0 : i32
    %c0_i32_1 = arith.constant 0 : i32
    return %c0_i32, %c0_i32_0 : i32, i32
  }
  func.func @transform_8(%arg0: i32) -> (i32, i32) {
    %c0_i32 = arith.constant 0 : i32
    %c0_i32_0 = arith.constant 0 : i32
    %c0_i32_1 = arith.constant 0 : i32
    return %c0_i32, %c0_i32_0 : i32, i32
  }
  func.func @transform_9(%arg0: i32) -> (i32, i32) {
    %c0_i32 = arith.constant 0 : i32
    %c0_i32_0 = arith.constant 0 : i32
    %c0_i32_1 = arith.constant 0 : i32
    return %c0_i32, %c0_i32_0 : i32, i32
  }
  func.func @transform_10(%arg0: i32) -> (i32, i32) {
    %c0_i32 = arith.constant 0 : i32
    %c0_i32_0 = arith.constant 0 : i32
    %c0_i32_1 = arith.constant 0 : i32
    return %c0_i32, %c0_i32_0 : i32, i32
  }
  func.func @transform_11(%arg0: i32) -> (i32, i32) {
    %c0_i32 = arith.constant 0 : i32
    %c0_i32_0 = arith.constant 0 : i32
    %c0_i32_1 = arith.constant 0 : i32
    return %c0_i32, %c0_i32_0 : i32, i32
  }
  func.func @transform_12(%arg0: i32) -> (i32, i32) {
    %c0_i32 = arith.constant 0 : i32
    %c0_i32_0 = arith.constant 0 : i32
    %c0_i32_1 = arith.constant 0 : i32
    return %c0_i32, %c0_i32_0 : i32, i32
  }
  func.func @transform_13(%arg0: i32) -> (i32, i32, i32) {
    %c0_i32 = arith.constant 0 : i32
    %c0_i32_0 = arith.constant 0 : i32
    %c0_i32_1 = arith.constant 0 : i32
    return %arg0, %c0_i32, %c0_i32_0 : i32, i32, i32
  }
}

</mosaic_0001>

<llo_original>
// kernel: tpu_custom_call.1
$region0: #{tpu_custom_call.1}
  #allocation0 [shape = 'u32[]', space=smem, size = 0x4, offset = 0x4, fixed_abs, tag = 'smem constant byte address 0x4 - core index']
  #allocation1 [shape = 'u32[144,128]{1,0:T(1,128)}', space=vmem, size = 0x12000, scoped, tag = 'internal scratch']
  %s0 = inlined_call_operand.vmem [shape: f32[8,128,3], index: 0, kind: input, shape index: {}]
  %s1 = inlined_call_operand.vmem [shape: f32[3,64], index: 1, kind: input, shape index: {}]
  %s2 = inlined_call_operand.vmem [shape: f32[1,64], index: 2, kind: input, shape index: {}]
  %s3 = inlined_call_operand.vmem [shape: bf16[64,128], index: 3, kind: input, shape index: {}]
  %s4 = inlined_call_operand.vmem [shape: f32[1,128], index: 4, kind: input, shape index: {}]
  %s5 = inlined_call_operand.vmem [shape: bf16[128,128], index: 5, kind: input, shape index: {}]
  %s6 = inlined_call_operand.vmem [shape: f32[1,128], index: 6, kind: input, shape index: {}]
  %s7 = inlined_call_operand.vmem [shape: bf16[64,128], index: 7, kind: input, shape index: {}]
  %s8 = inlined_call_operand.vmem [shape: bf16[128,128], index: 8, kind: input, shape index: {}]
  %s9 = inlined_call_operand.vmem [shape: bf16[128,128], index: 9, kind: input, shape index: {}]
  %s10 = inlined_call_operand.vmem [shape: f32[1,128], index: 10, kind: input, shape index: {}]
  %s11 = inlined_call_operand.vmem [shape: bf16[5,128], index: 11, kind: input, shape index: {}]
  %s12 = inlined_call_operand.vmem [shape: f32[5,1], index: 12, kind: input, shape index: {}]
  %s13 = inlined_call_operand.vmem [shape: f32[8,5,128], index: 13, kind: output, shape index: {}]
  %s14 = sld [smem:[#allocation0]]
  $region85: #{tpu_custom_call.1} parent=0
    _
  %s16 = ssub.s32 1, %s14
  %s17 = scalar_select 0, %s16, %s14
  loop: start=0, step=1, limit=4
  $region2: #{tpu_custom_call.1} parent=0 // loop_pre_header
    _
  $region3: #{tpu_custom_call.1} parent=0 // loop_header
    %s19 = sphi 0, %s23
    %p20 = scmp.ge.s32.totalorder %s19, 4
    %s29 = sphi 0, %s31
    %s32 = sphi 0, %s29
    %s33 = sphi 0, %s32
    %s49 = sphi 0, %s33
    %s53 = sphi 0, %s53
    %s55 = sphi 0, %s53
    %s56 = sphi 0, %s55
    %s70 = sphi 0, %s56
    %s74 = sphi 0, %s74
    %s76 = sphi 0, %s74
    %s77 = sphi 0, %s76
    %s91 = sphi 0, %s77
    %s95 = sphi 0, %s95
    %s97 = sphi 0, %s95
    %s98 = sphi 0, %s97
    %s112 = sphi 0, %s98
    %s116 = sphi 0, %s116
    %s118 = sphi 0, %s116
    %s119 = sphi 0, %s118
    %s133 = sphi 0, %s119
    %s137 = sphi 0, %s137
    %s139 = sphi 0, %s137
    %s140 = sphi 0, %s139
    %s154 = sphi 0, %s140
    %s158 = sphi 0, %s158
    %s160 = sphi 0, %s158
    %s161 = sphi 0, %s160
    %s175 = sphi 0, %s161
    %s179 = sphi 0, %s179
    %s181 = sphi 0, %s179
    %s182 = sphi 0, %s181
    %s196 = sphi 0, %s182
    %s200 = sphi 0, %s200
    %s202 = sphi 0, %s200
    %s203 = sphi 0, %s202
    %s217 = sphi 0, %s203
    %s221 = sphi 0, %s221
    %s223 = sphi 0, %s221
    %s224 = sphi 0, %s223
    %s238 = sphi 0, %s224
    %s242 = sphi 0, %s242
    %s244 = sphi 0, %s242
    %s245 = sphi 0, %s244
    %s259 = sphi 0, %s245
    %s263 = sphi 0, %s263
    %s265 = sphi 0, %s263
    %s266 = sphi 0, %s265
    %s280 = sphi 0, %s266
    %s284 = sphi 0, %s284
    %s286 = sphi 0, %s284
    %s287 = sphi 0, %s286
    %s301 = sphi 0, %s287
    %s307 = sphi 0, %s309
    %s310 = sphi 0, %s307
    %s311 = sphi 0, %s310
    %s327 = sphi 0, %s311
  $region4: #{tpu_custom_call.1} parent=0 // loop_header_branch
    %22 = sbr.rel (%p20) target = $region8
  $region5: #{tpu_custom_call.1} parent=0 // loop_body
    %s24 = ssub.s32 %s19, 1
    %s25 = ssub.s32 %s19, 2
    %s26 = sadd.s32 %s19, 1
    %s27 = ssub.s32 %s19, %s26
    %p28 = scmp.eq.s32.totalorder %s27, 0
    %s30 = sadd.s32 %s29, 1
    %s31 = scalar_select %p28, %s29, %s30
    %p34 = pneg %p28
    %p35 = scmp.eq.s32.totalorder %s19, 1
    %p36 = por %p34, %p35
    %p37 = scmp.ne.s32.totalorder %s29, %s32
    %p38 = scmp.eq.s32.totalorder %s19, 0
    %p39 = por %p37, %p38
    %p40 = scmp.ne.s32.totalorder %s29, %s32
    %p41 = scmp.eq.s32.totalorder %s24, 1
    %p42 = por %p40, %p41
    %p43 = scmp.ne.s32.totalorder %s32, %s33
    %p44 = scmp.eq.s32.totalorder %s24, 0
    %p45 = por %p43, %p44
    %p46 = scmp.ne.s32.totalorder %s32, %s33
    %p47 = scmp.eq.s32.totalorder %s25, 1
    %p48 = por %p46, %p47
    %p50 = scmp.ne.s32.totalorder %s33, %s49
    %p51 = scmp.eq.s32.totalorder %s25, 0
    %p52 = por %p50, %p51
    %s54 = sadd.s32 %s53, 1
    %p57 = scmp.eq.s32.totalorder %s19, 1
    %p58 = scmp.ne.s32.totalorder %s53, %s55
    %p59 = scmp.eq.s32.totalorder %s19, 0
    %p60 = por %p58, %p59
    %p61 = scmp.ne.s32.totalorder %s53, %s55
    %p62 = scmp.eq.s32.totalorder %s24, 1
    %p63 = por %p61, %p62
    %p64 = scmp.ne.s32.totalorder %s55, %s56
    %p65 = scmp.eq.s32.totalorder %s24, 0
    %p66 = por %p64, %p65
    %p67 = scmp.ne.s32.totalorder %s55, %s56
    %p68 = scmp.eq.s32.totalorder %s25, 1
    %p69 = por %p67, %p68
    %p71 = scmp.ne.s32.totalorder %s56, %s70
    %p72 = scmp.eq.s32.totalorder %s25, 0
    %p73 = por %p71, %p72
    %s75 = sadd.s32 %s74, 1
    %p78 = scmp.eq.s32.totalorder %s19, 1
    %p79 = scmp.ne.s32.totalorder %s74, %s76
    %p80 = scmp.eq.s32.totalorder %s19, 0
    %p81 = por %p79, %p80
    %p82 = scmp.ne.s32.totalorder %s74, %s76
    %p83 = scmp.eq.s32.totalorder %s24, 1
    %p84 = por %p82, %p83
    %p85 = scmp.ne.s32.totalorder %s76, %s77
    %p86 = scmp.eq.s32.totalorder %s24, 0
    %p87 = por %p85, %p86
    %p88 = scmp.ne.s32.totalorder %s76, %s77
    %p89 = scmp.eq.s32.totalorder %s25, 1
    %p90 = por %p88, %p89
    %p92 = scmp.ne.s32.totalorder %s77, %s91
    %p93 = scmp.eq.s32.totalorder %s25, 0
    %p94 = por %p92, %p93
    %s96 = sadd.s32 %s95, 1
    %p99 = scmp.eq.s32.totalorder %s19, 1
    %p100 = scmp.ne.s32.totalorder %s95, %s97
    %p101 = scmp.eq.s32.totalorder %s19, 0
    %p102 = por %p100, %p101
    %p103 = scmp.ne.s32.totalorder %s95, %s97
    %p104 = scmp.eq.s32.totalorder %s24, 1
    %p105 = por %p103, %p104
    %p106 = scmp.ne.s32.totalorder %s97, %s98
    %p107 = scmp.eq.s32.totalorder %s24, 0
    %p108 = por %p106, %p107
    %p109 = scmp.ne.s32.totalorder %s97, %s98
    %p110 = scmp.eq.s32.totalorder %s25, 1
    %p111 = por %p109, %p110
    %p113 = scmp.ne.s32.totalorder %s98, %s112
    %p114 = scmp.eq.s32.totalorder %s25, 0
    %p115 = por %p113, %p114
    %s117 = sadd.s32 %s116, 1
    %p120 = scmp.eq.s32.totalorder %s19, 1
    %p121 = scmp.ne.s32.totalorder %s116, %s118
    %p122 = scmp.eq.s32.totalorder %s19, 0
    %p123 = por %p121, %p122
    %p124 = scmp.ne.s32.totalorder %s116, %s118
    %p125 = scmp.eq.s32.totalorder %s24, 1
    %p126 = por %p124, %p125
    %p127 = scmp.ne.s32.totalorder %s118, %s119
    %p128 = scmp.eq.s32.totalorder %s24, 0
    %p129 = por %p127, %p128
    %p130 = scmp.ne.s32.totalorder %s118, %s119
    %p131 = scmp.eq.s32.totalorder %s25, 1
    %p132 = por %p130, %p131
    %p134 = scmp.ne.s32.totalorder %s119, %s133
    %p135 = scmp.eq.s32.totalorder %s25, 0
    %p136 = por %p134, %p135
    %s138 = sadd.s32 %s137, 1
    %p141 = scmp.eq.s32.totalorder %s19, 1
    %p142 = scmp.ne.s32.totalorder %s137, %s139
    %p143 = scmp.eq.s32.totalorder %s19, 0
    %p144 = por %p142, %p143
    %p145 = scmp.ne.s32.totalorder %s137, %s139
    %p146 = scmp.eq.s32.totalorder %s24, 1
    %p147 = por %p145, %p146
    %p148 = scmp.ne.s32.totalorder %s139, %s140
    %p149 = scmp.eq.s32.totalorder %s24, 0
    %p150 = por %p148, %p149
    %p151 = scmp.ne.s32.totalorder %s139, %s140
    %p152 = scmp.eq.s32.totalorder %s25, 1
    %p153 = por %p151, %p152
    %p155 = scmp.ne.s32.totalorder %s140, %s154
    %p156 = scmp.eq.s32.totalorder %s25, 0
    %p157 = por %p155, %p156
    %s159 = sadd.s32 %s158, 1
    %p162 = scmp.eq.s32.totalorder %s19, 1
    %p163 = scmp.ne.s32.totalorder %s158, %s160
    %p164 = scmp.eq.s32.totalorder %s19, 0
    %p165 = por %p163, %p164
    %p166 = scmp.ne.s32.totalorder %s158, %s160
    %p167 = scmp.eq.s32.totalorder %s24, 1
    %p168 = por %p166, %p167
    %p169 = scmp.ne.s32.totalorder %s160, %s161
    %p170 = scmp.eq.s32.totalorder %s24, 0
    %p171 = por %p169, %p170
    %p172 = scmp.ne.s32.totalorder %s160, %s161
    %p173 = scmp.eq.s32.totalorder %s25, 1
    %p174 = por %p172, %p173
    %p176 = scmp.ne.s32.totalorder %s161, %s175
    %p177 = scmp.eq.s32.totalorder %s25, 0
    %p178 = por %p176, %p177
    %s180 = sadd.s32 %s179, 1
    %p183 = scmp.eq.s32.totalorder %s19, 1
    %p184 = scmp.ne.s32.totalorder %s179, %s181
    %p185 = scmp.eq.s32.totalorder %s19, 0
    %p186 = por %p184, %p185
    %p187 = scmp.ne.s32.totalorder %s179, %s181
    %p188 = scmp.eq.s32.totalorder %s24, 1
    %p189 = por %p187, %p188
    %p190 = scmp.ne.s32.totalorder %s181, %s182
    %p191 = scmp.eq.s32.totalorder %s24, 0
    %p192 = por %p190, %p191
    %p193 = scmp.ne.s32.totalorder %s181, %s182
    %p194 = scmp.eq.s32.totalorder %s25, 1
    %p195 = por %p193, %p194
    %p197 = scmp.ne.s32.totalorder %s182, %s196
    %p198 = scmp.eq.s32.totalorder %s25, 0
    %p199 = por %p197, %p198
    %s201 = sadd.s32 %s200, 1
    %p204 = scmp.eq.s32.totalorder %s19, 1
    %p205 = scmp.ne.s32.totalorder %s200, %s202
    %p206 = scmp.eq.s32.totalorder %s19, 0
    %p207 = por %p205, %p206
    %p208 = scmp.ne.s32.totalorder %s200, %s202
    %p209 = scmp.eq.s32.totalorder %s24, 1
    %p210 = por %p208, %p209
    %p211 = scmp.ne.s32.totalorder %s202, %s203
    %p212 = scmp.eq.s32.totalorder %s24, 0
    %p213 = por %p211, %p212
    %p214 = scmp.ne.s32.totalorder %s202, %s203
    %p215 = scmp.eq.s32.totalorder %s25, 1
    %p216 = por %p214, %p215
    %p218 = scmp.ne.s32.totalorder %s203, %s217
    %p219 = scmp.eq.s32.totalorder %s25, 0
    %p220 = por %p218, %p219
    %s222 = sadd.s32 %s221, 1
    %p225 = scmp.eq.s32.totalorder %s19, 1
    %p226 = scmp.ne.s32.totalorder %s221, %s223
    %p227 = scmp.eq.s32.totalorder %s19, 0
    %p228 = por %p226, %p227
    %p229 = scmp.ne.s32.totalorder %s221, %s223
    %p230 = scmp.eq.s32.totalorder %s24, 1
    %p231 = por %p229, %p230
    %p232 = scmp.ne.s32.totalorder %s223, %s224
    %p233 = scmp.eq.s32.totalorder %s24, 0
    %p234 = por %p232, %p233
    %p235 = scmp.ne.s32.totalorder %s223, %s224
    %p236 = scmp.eq.s32.totalorder %s25, 1
    %p237 = por %p235, %p236
    %p239 = scmp.ne.s32.totalorder %s224, %s238
    %p240 = scmp.eq.s32.totalorder %s25, 0
    %p241 = por %p239, %p240
    %s243 = sadd.s32 %s242, 1
    %p246 = scmp.eq.s32.totalorder %s19, 1
    %p247 = scmp.ne.s32.totalorder %s242, %s244
    %p248 = scmp.eq.s32.totalorder %s19, 0
    %p249 = por %p247, %p248
    %p250 = scmp.ne.s32.totalorder %s242, %s244
    %p251 = scmp.eq.s32.totalorder %s24, 1
    %p252 = por %p250, %p251
    %p253 = scmp.ne.s32.totalorder %s244, %s245
    %p254 = scmp.eq.s32.totalorder %s24, 0
    %p255 = por %p253, %p254
    %p256 = scmp.ne.s32.totalorder %s244, %s245
    %p257 = scmp.eq.s32.totalorder %s25, 1
    %p258 = por %p256, %p257
    %p260 = scmp.ne.s32.totalorder %s245, %s259
    %p261 = scmp.eq.s32.totalorder %s25, 0
    %p262 = por %p260, %p261
    %s264 = sadd.s32 %s263, 1
    %p267 = scmp.eq.s32.totalorder %s19, 1
    %p268 = scmp.ne.s32.totalorder %s263, %s265
    %p269 = scmp.eq.s32.totalorder %s19, 0
    %p270 = por %p268, %p269
    %p271 = scmp.ne.s32.totalorder %s263, %s265
    %p272 = scmp.eq.s32.totalorder %s24, 1
    %p273 = por %p271, %p272
    %p274 = scmp.ne.s32.totalorder %s265, %s266
    %p275 = scmp.eq.s32.totalorder %s24, 0
    %p276 = por %p274, %p275
    %p277 = scmp.ne.s32.totalorder %s265, %s266
    %p278 = scmp.eq.s32.totalorder %s25, 1
    %p279 = por %p277, %p278
    %p281 = scmp.ne.s32.totalorder %s266, %s280
    %p282 = scmp.eq.s32.totalorder %s25, 0
    %p283 = por %p281, %p282
    %s285 = sadd.s32 %s284, 1
    %p288 = scmp.eq.s32.totalorder %s19, 1
    %p289 = scmp.ne.s32.totalorder %s284, %s286
    %p290 = scmp.eq.s32.totalorder %s19, 0
    %p291 = por %p289, %p290
    %p292 = scmp.ne.s32.totalorder %s284, %s286
    %p293 = scmp.eq.s32.totalorder %s24, 1
    %p294 = por %p292, %p293
    %p295 = scmp.ne.s32.totalorder %s286, %s287
    %p296 = scmp.eq.s32.totalorder %s24, 0
    %p297 = por %p295, %p296
    %p298 = scmp.ne.s32.totalorder %s286, %s287
    %p299 = scmp.eq.s32.totalorder %s25, 1
    %p300 = por %p298, %p299
    %p302 = scmp.ne.s32.totalorder %s287, %s301
    %p303 = scmp.eq.s32.totalorder %s25, 0
    %p304 = por %p302, %p303
    %s305 = ssub.s32 %s19, %s26
    %p306 = scmp.eq.s32.totalorder %s305, 0
    %s308 = sadd.s32 %s307, 1
    %s309 = scalar_select %p306, %s307, %s308
    %p312 = pneg %p306
    %p313 = scmp.eq.s32.totalorder %s19, 1
    %p314 = por %p312, %p313
    %p315 = scmp.ne.s32.totalorder %s307, %s310
    %p316 = scmp.eq.s32.totalorder %s19, 0
    %p317 = por %p315, %p316
    %p318 = scmp.ne.s32.totalorder %s307, %s310
    %p319 = scmp.eq.s32.totalorder %s24, 1
    %p320 = por %p318, %p319
    %p321 = scmp.ne.s32.totalorder %s310, %s311
    %p322 = scmp.eq.s32.totalorder %s24, 0
    %p323 = por %p321, %p322
    %p324 = scmp.ne.s32.totalorder %s310, %s311
    %p325 = scmp.eq.s32.totalorder %s25, 1
    %p326 = por %p324, %p325
    %p328 = scmp.ne.s32.totalorder %s311, %s327
    %p329 = scmp.eq.s32.totalorder %s25, 0
    %p330 = por %p328, %p329
    %p331 = scmp.le.s32.totalorder 1, %s19
    %p332 = scmp.lt.s32.totalorder %s19, 3
    %p333 = pnand %p331, %p332
    %p334 = pneg %p333
    // Predicated region
    $region9: #{tpu_custom_call.1} parent=5 // pred_check
      _
    $region10: #{tpu_custom_call.1} parent=5 // pred_check_branch
      %336 = sbr.rel (%p333) target = $region12
    $region11: #{tpu_custom_call.1} parent=5 // pred_region
      %s337 = ssub.s32 %s19, 1
      // Predicated region
      $region13: #{tpu_custom_call.1} parent=11 // pred_check
        %p338 = pneg %p66
      $region14: #{tpu_custom_call.1} parent=11 // pred_check_branch
        %340 = sbr.rel (%p338) target = $region16
      $region15: #{tpu_custom_call.1} parent=11 // pred_region
        _
      $region16: #{tpu_custom_call.1} parent=11 // pred_fallthru
        _
      // Predicated region
      $region17: #{tpu_custom_call.1} parent=11 // pred_check
        %p341 = pneg %p87
      $region18: #{tpu_custom_call.1} parent=11 // pred_check_branch
        %343 = sbr.rel (%p341) target = $region20
      $region19: #{tpu_custom_call.1} parent=11 // pred_region
        _
      $region20: #{tpu_custom_call.1} parent=11 // pred_fallthru
        _
      // Predicated region
      $region21: #{tpu_custom_call.1} parent=11 // pred_check
        %p344 = pneg %p108
      $region22: #{tpu_custom_call.1} parent=11 // pred_check_branch
        %346 = sbr.rel (%p344) target = $region24
      $region23: #{tpu_custom_call.1} parent=11 // pred_region
        _
      $region24: #{tpu_custom_call.1} parent=11 // pred_fallthru
        _
      // Predicated region
      $region25: #{tpu_custom_call.1} parent=11 // pred_check
        %p347 = pneg %p129
      $region26: #{tpu_custom_call.1} parent=11 // pred_check_branch
        %349 = sbr.rel (%p347) target = $region28
      $region27: #{tpu_custom_call.1} parent=11 // pred_region
        _
      $region28: #{tpu_custom_call.1} parent=11 // pred_fallthru
        _
      // Predicated region
      $region29: #{tpu_custom_call.1} parent=11 // pred_check
        %p350 = pneg %p150
      $region30: #{tpu_custom_call.1} parent=11 // pred_check_branch
        %352 = sbr.rel (%p350) target = $region32
      $region31: #{tpu_custom_call.1} parent=11 // pred_region
        _
      $region32: #{tpu_custom_call.1} parent=11 // pred_fallthru
        _
      // Predicated region
      $region33: #{tpu_custom_call.1} parent=11 // pred_check
        %p353 = pneg %p171
      $region34: #{tpu_custom_call.1} parent=11 // pred_check_branch
        %355 = sbr.rel (%p353) target = $region36
      $region35: #{tpu_custom_call.1} parent=11 // pred_region
        _
      $region36: #{tpu_custom_call.1} parent=11 // pred_fallthru
        _
      // Predicated region
      $region37: #{tpu_custom_call.1} parent=11 // pred_check
        %p356 = pneg %p192
      $region38: #{tpu_custom_call.1} parent=11 // pred_check_branch
        %358 = sbr.rel (%p356) target = $region40
      $region39: #{tpu_custom_call.1} parent=11 // pred_region
        _
      $region40: #{tpu_custom_call.1} parent=11 // pred_fallthru
        _
      // Predicated region
      $region41: #{tpu_custom_call.1} parent=11 // pred_check
        %p359 = pneg %p213
      $region42: #{tpu_custom_call.1} parent=11 // pred_check_branch
        %361 = sbr.rel (%p359) target = $region44
      $region43: #{tpu_custom_call.1} parent=11 // pred_region
        _
      $region44: #{tpu_custom_call.1} parent=11 // pred_fallthru
        _
      // Predicated region
      $region45: #{tpu_custom_call.1} parent=11 // pred_check
        %p362 = pneg %p234
      $region46: #{tpu_custom_call.1} parent=11 // pred_check_branch
        %364 = sbr.rel (%p362) target = $region48
      $region47: #{tpu_custom_call.1} parent=11 // pred_region
        _
      $region48: #{tpu_custom_call.1} parent=11 // pred_fallthru
        _
      // Predicated region
      $region49: #{tpu_custom_call.1} parent=11 // pred_check
        %p365 = pneg %p255
      $region50: #{tpu_custom_call.1} parent=11 // pred_check_branch
        %367 = sbr.rel (%p365) target = $region52
      $region51: #{tpu_custom_call.1} parent=11 // pred_region
        _
      $region52: #{tpu_custom_call.1} parent=11 // pred_fallthru
        _
      // Predicated region
      $region53: #{tpu_custom_call.1} parent=11 // pred_check
        %p368 = pneg %p276
      $region54: #{tpu_custom_call.1} parent=11 // pred_check_branch
        %370 = sbr.rel (%p368) target = $region56
      $region55: #{tpu_custom_call.1} parent=11 // pred_region
        _
      $region56: #{tpu_custom_call.1} parent=11 // pred_fallthru
        _
      // Predicated region
      $region57: #{tpu_custom_call.1} parent=11 // pred_check
        %p371 = pneg %p297
      $region58: #{tpu_custom_call.1} parent=11 // pred_check_branch
        %373 = sbr.rel (%p371) target = $region60
      $region59: #{tpu_custom_call.1} parent=11 // pred_region
        _
      $region60: #{tpu_custom_call.1} parent=11 // pred_fallthru
        _
    $region12: #{tpu_custom_call.1} parent=5 // pred_fallthru
      _
    %p374 = scmp.lt.s32.totalorder %s19, 2
    // Predicated region
    $region61: #{tpu_custom_call.1} parent=5 // pred_check
      %p375 = pneg %p374
    $region62: #{tpu_custom_call.1} parent=5 // pred_check_branch
      %377 = sbr.rel (%p375) target = $region64
    $region63: #{tpu_custom_call.1} parent=5 // pred_region
      // Predicated region
      $region65: #{tpu_custom_call.1} parent=63 // pred_check
        %p378 = pneg %p39
      $region66: #{tpu_custom_call.1} parent=63 // pred_check_branch
        %380 = sbr.rel (%p378) target = $region68
      $region67: #{tpu_custom_call.1} parent=63 // pred_region
        %s381 = smul.u32 4, %s19
        %p382 = scmp.lt.s32.totalorder %s381, 7
        %s383 = scalar_select %p382, %s381, 7
        %s384 = smul.addr %s383, 16
        %s385 = smul.addr %s384, 8
        %s386 = scalar_lea.vmem %s0, %s385
        %s387 = smul.u32 4, %s19
      $region68: #{tpu_custom_call.1} parent=63 // pred_fallthru
        _
    $region64: #{tpu_custom_call.1} parent=5 // pred_fallthru
      _
    %p388 = scmp.le.s32.totalorder 1, %s19
    %p389 = scmp.lt.s32.totalorder %s19, 3
    %p390 = pnand %p388, %p389
    %p391 = pneg %p390
    // Predicated region
    $region69: #{tpu_custom_call.1} parent=5 // pred_check
      _
    $region70: #{tpu_custom_call.1} parent=5 // pred_check_branch
      %393 = sbr.rel (%p390) target = $region72
    $region71: #{tpu_custom_call.1} parent=5 // pred_region
      %s394 = ssub.s32 %s19, 1
      %s395 = smul.u32 4, %s24
      %p396 = scmp.lt.s32.totalorder %s395, 7
      %s397 = scalar_select %p396, %s395, 7
      %s398 = smul.addr %s397, 16
      %s399 = smul.addr %s398, 8
      %s400 = scalar_lea.vmem %s0, %s399
      %p401 = pneg %p45
      %p402 = pneg %p42
      %p403 = pneg %p66
      %p404 = pneg %p63
      %p405 = pneg %p87
      %p406 = pneg %p84
      %p407 = pneg %p108
      %p408 = pneg %p105
      %p409 = pneg %p129
      %p410 = pneg %p126
      %p411 = pneg %p150
      %p412 = pneg %p147
      %p413 = pneg %p171
      %p414 = pneg %p168
      %p415 = pneg %p192
      %p416 = pneg %p189
      %p417 = pneg %p213
      %p418 = pneg %p210
      %p419 = pneg %p234
      %p420 = pneg %p231
      %p421 = pneg %p255
      %p422 = pneg %p252
      %p423 = pneg %p276
      %p424 = pneg %p273
      %p425 = pneg %p297
      %p426 = pneg %p294
      %p427 = pneg %p323
      %p428 = pneg %p320
      %s429 = smul.u32 4, %s24
      %p430 = scmp.lt.s32.totalorder %s429, 7
      %s431 = scalar_select %p430, %s429, 7
      %s432 = smul.addr %s431, 8
      %s433 = scalar_lea.vmem %s13, %s432
      %s434 = smul.u32 4, %s24
      %p435 = scmp.lt.s32.totalorder %s434, 7
      %s436 = scalar_select %p435, %s434, 7
      %s437 = smul.addr %s436, 16
      %s438 = smul.addr %s437, 8
      %s439 = scalar_lea.vmem %s0, %s438
      %s440 = smul.u32 4, %s24
      %s441 = smul.u32 4, %s24
      %p442 = scmp.lt.s32.totalorder %s441, 7
      %s443 = scalar_select %p442, %s441, 7
      %s444 = smul.addr %s443, 8
      %s445 = scalar_lea.vmem %s13, %s444
      %s446 = smul.u32 4, %s24
      %v448 = vld [vmem:[%s439] sm:$0xff]
      %v449 = vld [vmem:[%s439 + $0x8] sm:$0xff]
      %v450 = vld [vmem:[%s439 + $0x10] sm:$0xff]
      %v451 = vld [vmem:[%s439 + $0x18] sm:$0xff]
      %v452 = vld [vmem:[%s439 + $0x20] sm:$0xff]
      %v453 = vld [vmem:[%s439 + $0x28] sm:$0xff]
      %v454 = vld [vmem:[%s439 + $0x30] sm:$0xff]
      %v455 = vld [vmem:[%s439 + $0x38] sm:$0xff]
      %v456 = vld [vmem:[%s439 + $0x40] sm:$0xff]
      %v457 = vld [vmem:[%s439 + $0x48] sm:$0xff]
      %v458 = vld [vmem:[%s439 + $0x50] sm:$0xff]
      %v459 = vld [vmem:[%s439 + $0x58] sm:$0xff]
      %v460 = vld [vmem:[%s439 + $0x60] sm:$0xff]
      %v461 = vld [vmem:[%s439 + $0x68] sm:$0xff]
      %v462 = vld [vmem:[%s439 + $0x70] sm:$0xff]
      %v463 = vld [vmem:[%s439 + $0x78] sm:$0xff]
      %v464 = vld [vmem:[%s439 + $0x80] sm:$0xff]
      %v465 = vld [vmem:[%s439 + $0x88] sm:$0xff]
      %v466 = vld [vmem:[%s439 + $0x90] sm:$0xff]
      %v467 = vld [vmem:[%s439 + $0x98] sm:$0xff]
      %v468 = vld [vmem:[%s439 + $0xa0] sm:$0xff]
      %v469 = vld [vmem:[%s439 + $0xa8] sm:$0xff]
      %v470 = vld [vmem:[%s439 + $0xb0] sm:$0xff]
      %v471 = vld [vmem:[%s439 + $0xb8] sm:$0xff]
      %v472 = vld [vmem:[%s439 + $0xc0] sm:$0xff]
      %v473 = vld [vmem:[%s439 + $0xc8] sm:$0xff]
      %v474 = vld [vmem:[%s439 + $0xd0] sm:$0xff]
      %v475 = vld [vmem:[%s439 + $0xd8] sm:$0xff]
      %v476 = vld [vmem:[%s439 + $0xe0] sm:$0xff]
      %v477 = vld [vmem:[%s439 + $0xe8] sm:$0xff]
      %v478 = vld [vmem:[%s439 + $0xf0] sm:$0xff]
      %v479 = vld [vmem:[%s439 + $0xf8] sm:$0xff]
      %v480 = vld [vmem:[%s439 + $0x100] sm:$0xff]
      %v481 = vld [vmem:[%s439 + $0x108] sm:$0xff]
      %v482 = vld [vmem:[%s439 + $0x110] sm:$0xff]
      %v483 = vld [vmem:[%s439 + $0x118] sm:$0xff]
      %v484 = vld [vmem:[%s439 + $0x120] sm:$0xff]
      %v485 = vld [vmem:[%s439 + $0x128] sm:$0xff]
      %v486 = vld [vmem:[%s439 + $0x130] sm:$0xff]
      %v487 = vld [vmem:[%s439 + $0x138] sm:$0xff]
      %v488 = vld [vmem:[%s439 + $0x140] sm:$0xff]
      %v489 = vld [vmem:[%s439 + $0x148] sm:$0xff]
      %v490 = vld [vmem:[%s439 + $0x150] sm:$0xff]
      %v491 = vld [vmem:[%s439 + $0x158] sm:$0xff]
      %v492 = vld [vmem:[%s439 + $0x160] sm:$0xff]
      %v493 = vld [vmem:[%s439 + $0x168] sm:$0xff]
      %v494 = vld [vmem:[%s439 + $0x170] sm:$0xff]
      %v495 = vld [vmem:[%s439 + $0x178] sm:$0xff]
      %v496 = vld [vmem:[%s439 + $0x180] sm:$0xff]
      %v497 = vld [vmem:[%s439 + $0x188] sm:$0xff]
      %v498 = vld [vmem:[%s439 + $0x190] sm:$0xff]
      %v499 = vld [vmem:[%s439 + $0x198] sm:$0xff]
      %v500 = vld [vmem:[%s439 + $0x1a0] sm:$0xff]
      %v501 = vld [vmem:[%s439 + $0x1a8] sm:$0xff]
      %v502 = vld [vmem:[%s439 + $0x1b0] sm:$0xff]
      %v503 = vld [vmem:[%s439 + $0x1b8] sm:$0xff]
      %v504 = vld [vmem:[%s439 + $0x1c0] sm:$0xff]
      %v505 = vld [vmem:[%s439 + $0x1c8] sm:$0xff]
      %v506 = vld [vmem:[%s439 + $0x1d0] sm:$0xff]
      %v507 = vld [vmem:[%s439 + $0x1d8] sm:$0xff]
      %v508 = vld [vmem:[%s439 + $0x1e0] sm:$0xff]
      %v509 = vld [vmem:[%s439 + $0x1e8] sm:$0xff]
      %v510 = vld [vmem:[%s439 + $0x1f0] sm:$0xff]
      %v511 = vld [vmem:[%s439 + $0x1f8] sm:$0xff]
      %v512 = vld [vmem:[%s1] sm:$0x7]
      %514 = vset.pattern.permute.xlu0 0
      %515 = vperm.xlu0 %514, %v448
      %v516 = vpop.permute.xlu0 %515
      %519 = vset.pattern.permute.xlu0 0
      %520 = vperm.xlu0 %519, %v449
      %v521 = vpop.permute.xlu0 %520
      %524 = vset.pattern.permute.xlu0 0
      %525 = vperm.xlu0 %524, %v450
      %v526 = vpop.permute.xlu0 %525
      %529 = vset.pattern.permute.xlu0 0
      %530 = vperm.xlu0 %529, %v451
      %v531 = vpop.permute.xlu0 %530
      %534 = vset.pattern.permute.xlu0 0
      %535 = vperm.xlu0 %534, %v452
      %v536 = vpop.permute.xlu0 %535
      %539 = vset.pattern.permute.xlu0 0
      %540 = vperm.xlu0 %539, %v453
      %v541 = vpop.permute.xlu0 %540
      %544 = vset.pattern.permute.xlu0 0
      %545 = vperm.xlu0 %544, %v454
      %v546 = vpop.permute.xlu0 %545
      %549 = vset.pattern.permute.xlu0 0
      %550 = vperm.xlu0 %549, %v455
      %v551 = vpop.permute.xlu0 %550
      %554 = vset.pattern.permute.xlu0 0
      %555 = vperm.xlu0 %554, %v456
      %v556 = vpop.permute.xlu0 %555
      %559 = vset.pattern.permute.xlu0 0
      %560 = vperm.xlu0 %559, %v457
      %v561 = vpop.permute.xlu0 %560
      %564 = vset.pattern.permute.xlu0 0
      %565 = vperm.xlu0 %564, %v458
      %v566 = vpop.permute.xlu0 %565
      %569 = vset.pattern.permute.xlu0 0
      %570 = vperm.xlu0 %569, %v459
      %v571 = vpop.permute.xlu0 %570
      %574 = vset.pattern.permute.xlu0 0
      %575 = vperm.xlu0 %574, %v460
      %v576 = vpop.permute.xlu0 %575
      %579 = vset.pattern.permute.xlu0 0
      %580 = vperm.xlu0 %579, %v461
      %v581 = vpop.permute.xlu0 %580
      %584 = vset.pattern.permute.xlu0 0
      %585 = vperm.xlu0 %584, %v462
      %v586 = vpop.permute.xlu0 %585
      %589 = vset.pattern.permute.xlu0 0
      %590 = vperm.xlu0 %589, %v463
      %v591 = vpop.permute.xlu0 %590
      %594 = vset.pattern.permute.xlu0 0
      %595 = vperm.xlu0 %594, %v464
      %v596 = vpop.permute.xlu0 %595
      %599 = vset.pattern.permute.xlu0 0
      %600 = vperm.xlu0 %599, %v465
      %v601 = vpop.permute.xlu0 %600
      %604 = vset.pattern.permute.xlu0 0
      %605 = vperm.xlu0 %604, %v466
      %v606 = vpop.permute.xlu0 %605
      %609 = vset.pattern.permute.xlu0 0
      %610 = vperm.xlu0 %609, %v467
      %v611 = vpop.permute.xlu0 %610
      %614 = vset.pattern.permute.xlu0 0
      %615 = vperm.xlu0 %614, %v468
      %v616 = vpop.permute.xlu0 %615
      %619 = vset.pattern.permute.xlu0 0
      %620 = vperm.xlu0 %619, %v469
      %v621 = vpop.permute.xlu0 %620
      %624 = vset.pattern.permute.xlu0 0
      %625 = vperm.xlu0 %624, %v470
      %v626 = vpop.permute.xlu0 %625
      %629 = vset.pattern.permute.xlu0 0
      %630 = vperm.xlu0 %629, %v471
      %v631 = vpop.permute.xlu0 %630
      %634 = vset.pattern.permute.xlu0 0
      %635 = vperm.xlu0 %634, %v472
      %v636 = vpop.permute.xlu0 %635
      %639 = vset.pattern.permute.xlu0 0
      %640 = vperm.xlu0 %639, %v473
      %v641 = vpop.permute.xlu0 %640
      %644 = vset.pattern.permute.xlu0 0
      %645 = vperm.xlu0 %644, %v474
      %v646 = vpop.permute.xlu0 %645
      %649 = vset.pattern.permute.xlu0 0
      %650 = vperm.xlu0 %649, %v475
      %v651 = vpop.permute.xlu0 %650
      %654 = vset.pattern.permute.xlu0 0
      %655 = vperm.xlu0 %654, %v476
      %v656 = vpop.permute.xlu0 %655
      %659 = vset.pattern.permute.xlu0 0
      %660 = vperm.xlu0 %659, %v477
      %v661 = vpop.permute.xlu0 %660
      %664 = vset.pattern.permute.xlu0 0
      %665 = vperm.xlu0 %664, %v478
      %v666 = vpop.permute.xlu0 %665
      %669 = vset.pattern.permute.xlu0 0
      %670 = vperm.xlu0 %669, %v479
      %v671 = vpop.permute.xlu0 %670
      %674 = vset.pattern.permute.xlu0 0
      %675 = vperm.xlu0 %674, %v480
      %v676 = vpop.permute.xlu0 %675
      %679 = vset.pattern.permute.xlu0 0
      %680 = vperm.xlu0 %679, %v481
      %v681 = vpop.permute.xlu0 %680
      %684 = vset.pattern.permute.xlu0 0
      %685 = vperm.xlu0 %684, %v482
      %v686 = vpop.permute.xlu0 %685
      %689 = vset.pattern.permute.xlu0 0
      %690 = vperm.xlu0 %689, %v483
      %v691 = vpop.permute.xlu0 %690
      %694 = vset.pattern.permute.xlu0 0
      %695 = vperm.xlu0 %694, %v484
      %v696 = vpop.permute.xlu0 %695
      %699 = vset.pattern.permute.xlu0 0
      %700 = vperm.xlu0 %699, %v485
      %v701 = vpop.permute.xlu0 %700
      %704 = vset.pattern.permute.xlu0 0
      %705 = vperm.xlu0 %704, %v486
      %v706 = vpop.permute.xlu0 %705
      %709 = vset.pattern.permute.xlu0 0
      %710 = vperm.xlu0 %709, %v487
      %v711 = vpop.permute.xlu0 %710
      %714 = vset.pattern.permute.xlu0 0
      %715 = vperm.xlu0 %714, %v488
      %v716 = vpop.permute.xlu0 %715
      %719 = vset.pattern.permute.xlu0 0
      %720 = vperm.xlu0 %719, %v489
      %v721 = vpop.permute.xlu0 %720
      %724 = vset.pattern.permute.xlu0 0
      %725 = vperm.xlu0 %724, %v490
      %v726 = vpop.permute.xlu0 %725
      %729 = vset.pattern.permute.xlu0 0
      %730 = vperm.xlu0 %729, %v491
      %v731 = vpop.permute.xlu0 %730
      %734 = vset.pattern.permute.xlu0 0
      %735 = vperm.xlu0 %734, %v492
      %v736 = vpop.permute.xlu0 %735
      %739 = vset.pattern.permute.xlu0 0
      %740 = vperm.xlu0 %739, %v493
      %v741 = vpop.permute.xlu0 %740
      %744 = vset.pattern.permute.xlu0 0
      %745 = vperm.xlu0 %744, %v494
      %v746 = vpop.permute.xlu0 %745
      %749 = vset.pattern.permute.xlu0 0
      %750 = vperm.xlu0 %749, %v495
      %v751 = vpop.permute.xlu0 %750
      %754 = vset.pattern.permute.xlu0 0
      %755 = vperm.xlu0 %754, %v496
      %v756 = vpop.permute.xlu0 %755
      %759 = vset.pattern.permute.xlu0 0
      %760 = vperm.xlu0 %759, %v497
      %v761 = vpop.permute.xlu0 %760
      %764 = vset.pattern.permute.xlu0 0
      %765 = vperm.xlu0 %764, %v498
      %v766 = vpop.permute.xlu0 %765
      %769 = vset.pattern.permute.xlu0 0
      %770 = vperm.xlu0 %769, %v499
      %v771 = vpop.permute.xlu0 %770
      %774 = vset.pattern.permute.xlu0 0
      %775 = vperm.xlu0 %774, %v500
      %v776 = vpop.permute.xlu0 %775
      %779 = vset.pattern.permute.xlu0 0
      %780 = vperm.xlu0 %779, %v501
      %v781 = vpop.permute.xlu0 %780
      %784 = vset.pattern.permute.xlu0 0
      %785 = vperm.xlu0 %784, %v502
      %v786 = vpop.permute.xlu0 %785
      %789 = vset.pattern.permute.xlu0 0
      %790 = vperm.xlu0 %789, %v503
      %v791 = vpop.permute.xlu0 %790
      %794 = vset.pattern.permute.xlu0 0
      %795 = vperm.xlu0 %794, %v504
      %v796 = vpop.permute.xlu0 %795
      %799 = vset.pattern.permute.xlu0 0
      %800 = vperm.xlu0 %799, %v505
      %v801 = vpop.permute.xlu0 %800
      %804 = vset.pattern.permute.xlu0 0
      %805 = vperm.xlu0 %804, %v506
      %v806 = vpop.permute.xlu0 %805
      %809 = vset.pattern.permute.xlu0 0
      %810 = vperm.xlu0 %809, %v507
      %v811 = vpop.permute.xlu0 %810
      %814 = vset.pattern.permute.xlu0 0
      %815 = vperm.xlu0 %814, %v508
      %v816 = vpop.permute.xlu0 %815
      %819 = vset.pattern.permute.xlu0 0
      %820 = vperm.xlu0 %819, %v509
      %v821 = vpop.permute.xlu0 %820
      %824 = vset.pattern.permute.xlu0 0
      %825 = vperm.xlu0 %824, %v510
      %v826 = vpop.permute.xlu0 %825
      %829 = vset.pattern.permute.xlu0 0
      %830 = vperm.xlu0 %829, %v511
      %v831 = vpop.permute.xlu0 %830
      %v833 = vlaneseq
      %v834 = vshrl.u32 %v833, 7
      %v835 = vsub.s32 0, %v834
      %v836 = vrot.slane %v512, %v835
      %v837 = vmul.f32 %v516, %v836
      %v838 = vmul.f32 %v521, %v836
      %v839 = vmul.f32 %v526, %v836
      %v840 = vmul.f32 %v531, %v836
      %v841 = vmul.f32 %v536, %v836
      %v842 = vmul.f32 %v541, %v836
      %v843 = vmul.f32 %v546, %v836
      %v844 = vmul.f32 %v551, %v836
      %v845 = vmul.f32 %v556, %v836
      %v846 = vmul.f32 %v561, %v836
      %v847 = vmul.f32 %v566, %v836
      %v848 = vmul.f32 %v571, %v836
      %v849 = vmul.f32 %v576, %v836
      %v850 = vmul.f32 %v581, %v836
      %v851 = vmul.f32 %v586, %v836
      %v852 = vmul.f32 %v591, %v836
      %v853 = vmul.f32 %v596, %v836
      %v854 = vmul.f32 %v601, %v836
      %v855 = vmul.f32 %v606, %v836
      %v856 = vmul.f32 %v611, %v836
      %v857 = vmul.f32 %v616, %v836
      %v858 = vmul.f32 %v621, %v836
      %v859 = vmul.f32 %v626, %v836
      %v860 = vmul.f32 %v631, %v836
      %v861 = vmul.f32 %v636, %v836
      %v862 = vmul.f32 %v641, %v836
      %v863 = vmul.f32 %v646, %v836
      %v864 = vmul.f32 %v651, %v836
      %v865 = vmul.f32 %v656, %v836
      %v866 = vmul.f32 %v661, %v836
      %v867 = vmul.f32 %v666, %v836
      %v868 = vmul.f32 %v671, %v836
      %v869 = vmul.f32 %v676, %v836
      %v870 = vmul.f32 %v681, %v836
      %v871 = vmul.f32 %v686, %v836
      %v872 = vmul.f32 %v691, %v836
      %v873 = vmul.f32 %v696, %v836
      %v874 = vmul.f32 %v701, %v836
      %v875 = vmul.f32 %v706, %v836
      %v876 = vmul.f32 %v711, %v836
      %v877 = vmul.f32 %v716, %v836
      %v878 = vmul.f32 %v721, %v836
      %v879 = vmul.f32 %v726, %v836
      %v880 = vmul.f32 %v731, %v836
      %v881 = vmul.f32 %v736, %v836
      %v882 = vmul.f32 %v741, %v836
      %v883 = vmul.f32 %v746, %v836
      %v884 = vmul.f32 %v751, %v836
      %v885 = vmul.f32 %v756, %v836
      %v886 = vmul.f32 %v761, %v836
      %v887 = vmul.f32 %v766, %v836
      %v888 = vmul.f32 %v771, %v836
      %v889 = vmul.f32 %v776, %v836
      %v890 = vmul.f32 %v781, %v836
      %v891 = vmul.f32 %v786, %v836
      %v892 = vmul.f32 %v791, %v836
      %v893 = vmul.f32 %v796, %v836
      %v894 = vmul.f32 %v801, %v836
      %v895 = vmul.f32 %v806, %v836
      %v896 = vmul.f32 %v811, %v836
      %v897 = vmul.f32 %v816, %v836
      %v898 = vmul.f32 %v821, %v836
      %v899 = vmul.f32 %v826, %v836
      %v900 = vmul.f32 %v831, %v836
      %901 = vset.pattern.permute.xlu0 1
      %902 = vperm.xlu0 %901, %v448
      %v903 = vpop.permute.xlu0 %902
      %905 = vset.pattern.permute.xlu0 1
      %906 = vperm.xlu0 %905, %v449
      %v907 = vpop.permute.xlu0 %906
      %909 = vset.pattern.permute.xlu0 1
      %910 = vperm.xlu0 %909, %v450
      %v911 = vpop.permute.xlu0 %910
      %913 = vset.pattern.permute.xlu0 1
      %914 = vperm.xlu0 %913, %v451
      %v915 = vpop.permute.xlu0 %914
      %917 = vset.pattern.permute.xlu0 1
      %918 = vperm.xlu0 %917, %v452
      %v919 = vpop.permute.xlu0 %918
      %921 = vset.pattern.permute.xlu0 1
      %922 = vperm.xlu0 %921, %v453
      %v923 = vpop.permute.xlu0 %922
      %925 = vset.pattern.permute.xlu0 1
      %926 = vperm.xlu0 %925, %v454
      %v927 = vpop.permute.xlu0 %926
      %929 = vset.pattern.permute.xlu0 1
      %930 = vperm.xlu0 %929, %v455
      %v931 = vpop.permute.xlu0 %930
      %933 = vset.pattern.permute.xlu0 1
      %934 = vperm.xlu0 %933, %v456
      %v935 = vpop.permute.xlu0 %934
      %937 = vset.pattern.permute.xlu0 1
      %938 = vperm.xlu0 %937, %v457
      %v939 = vpop.permute.xlu0 %938
      %941 = vset.pattern.permute.xlu0 1
      %942 = vperm.xlu0 %941, %v458
      %v943 = vpop.permute.xlu0 %942
      %945 = vset.pattern.permute.xlu0 1
      %946 = vperm.xlu0 %945, %v459
      %v947 = vpop.permute.xlu0 %946
      %949 = vset.pattern.permute.xlu0 1
      %950 = vperm.xlu0 %949, %v460
      %v951 = vpop.permute.xlu0 %950
      %953 = vset.pattern.permute.xlu0 1
      %954 = vperm.xlu0 %953, %v461
      %v955 = vpop.permute.xlu0 %954
      %957 = vset.pattern.permute.xlu0 1
      %958 = vperm.xlu0 %957, %v462
      %v959 = vpop.permute.xlu0 %958
      %961 = vset.pattern.permute.xlu0 1
      %962 = vperm.xlu0 %961, %v463
      %v963 = vpop.permute.xlu0 %962
      %965 = vset.pattern.permute.xlu0 1
      %966 = vperm.xlu0 %965, %v464
      %v967 = vpop.permute.xlu0 %966
      %969 = vset.pattern.permute.xlu0 1
      %970 = vperm.xlu0 %969, %v465
      %v971 = vpop.permute.xlu0 %970
      %973 = vset.pattern.permute.xlu0 1
      %974 = vperm.xlu0 %973, %v466
      %v975 = vpop.permute.xlu0 %974
      %977 = vset.pattern.permute.xlu0 1
      %978 = vperm.xlu0 %977, %v467
      %v979 = vpop.permute.xlu0 %978
      %981 = vset.pattern.permute.xlu0 1
      %982 = vperm.xlu0 %981, %v468
      %v983 = vpop.permute.xlu0 %982
      %985 = vset.pattern.permute.xlu0 1
      %986 = vperm.xlu0 %985, %v469
      %v987 = vpop.permute.xlu0 %986
      %989 = vset.pattern.permute.xlu0 1
      %990 = vperm.xlu0 %989, %v470
      %v991 = vpop.permute.xlu0 %990
      %993 = vset.pattern.permute.xlu0 1
      %994 = vperm.xlu0 %993, %v471
      %v995 = vpop.permute.xlu0 %994
      %997 = vset.pattern.permute.xlu0 1
      %998 = vperm.xlu0 %997, %v472
      %v999 = vpop.permute.xlu0 %998
      %1001 = vset.pattern.permute.xlu0 1
      %1002 = vperm.xlu0 %1001, %v473
      %v1003 = vpop.permute.xlu0 %1002
      %1005 = vset.pattern.permute.xlu0 1
      %1006 = vperm.xlu0 %1005, %v474
      %v1007 = vpop.permute.xlu0 %1006
      %1009 = vset.pattern.permute.xlu0 1
      %1010 = vperm.xlu0 %1009, %v475
      %v1011 = vpop.permute.xlu0 %1010
      %1013 = vset.pattern.permute.xlu0 1
      %1014 = vperm.xlu0 %1013, %v476
      %v1015 = vpop.permute.xlu0 %1014
      %1017 = vset.pattern.permute.xlu0 1
      %1018 = vperm.xlu0 %1017, %v477
      %v1019 = vpop.permute.xlu0 %1018
      %1021 = vset.pattern.permute.xlu0 1
      %1022 = vperm.xlu0 %1021, %v478
      %v1023 = vpop.permute.xlu0 %1022
      %1025 = vset.pattern.permute.xlu0 1
      %1026 = vperm.xlu0 %1025, %v479
      %v1027 = vpop.permute.xlu0 %1026
      %1029 = vset.pattern.permute.xlu0 1
      %1030 = vperm.xlu0 %1029, %v480
      %v1031 = vpop.permute.xlu0 %1030
      %1033 = vset.pattern.permute.xlu0 1
      %1034 = vperm.xlu0 %1033, %v481
      %v1035 = vpop.permute.xlu0 %1034
      %1037 = vset.pattern.permute.xlu0 1
      %1038 = vperm.xlu0 %1037, %v482
      %v1039 = vpop.permute.xlu0 %1038
      %1041 = vset.pattern.permute.xlu0 1
      %1042 = vperm.xlu0 %1041, %v483
      %v1043 = vpop.permute.xlu0 %1042
      %1045 = vset.pattern.permute.xlu0 1
      %1046 = vperm.xlu0 %1045, %v484
      %v1047 = vpop.permute.xlu0 %1046
      %1049 = vset.pattern.permute.xlu0 1
      %1050 = vperm.xlu0 %1049, %v485
      %v1051 = vpop.permute.xlu0 %1050
      %1053 = vset.pattern.permute.xlu0 1
      %1054 = vperm.xlu0 %1053, %v486
      %v1055 = vpop.permute.xlu0 %1054
      %1057 = vset.pattern.permute.xlu0 1
      %1058 = vperm.xlu0 %1057, %v487
      %v1059 = vpop.permute.xlu0 %1058
      %1061 = vset.pattern.permute.xlu0 1
      %1062 = vperm.xlu0 %1061, %v488
      %v1063 = vpop.permute.xlu0 %1062
      %1065 = vset.pattern.permute.xlu0 1
      %1066 = vperm.xlu0 %1065, %v489
      %v1067 = vpop.permute.xlu0 %1066
      %1069 = vset.pattern.permute.xlu0 1
      %1070 = vperm.xlu0 %1069, %v490
      %v1071 = vpop.permute.xlu0 %1070
      %1073 = vset.pattern.permute.xlu0 1
      %1074 = vperm.xlu0 %1073, %v491
      %v1075 = vpop.permute.xlu0 %1074
      %1077 = vset.pattern.permute.xlu0 1
      %1078 = vperm.xlu0 %1077, %v492
      %v1079 = vpop.permute.xlu0 %1078
      %1081 = vset.pattern.permute.xlu0 1
      %1082 = vperm.xlu0 %1081, %v493
      %v1083 = vpop.permute.xlu0 %1082
      %1085 = vset.pattern.permute.xlu0 1
      %1086 = vperm.xlu0 %1085, %v494
      %v1087 = vpop.permute.xlu0 %1086
      %1089 = vset.pattern.permute.xlu0 1
      %1090 = vperm.xlu0 %1089, %v495
      %v1091 = vpop.permute.xlu0 %1090
      %1093 = vset.pattern.permute.xlu0 1
      %1094 = vperm.xlu0 %1093, %v496
      %v1095 = vpop.permute.xlu0 %1094
      %1097 = vset.pattern.permute.xlu0 1
      %1098 = vperm.xlu0 %1097, %v497
      %v1099 = vpop.permute.xlu0 %1098
      %1101 = vset.pattern.permute.xlu0 1
      %1102 = vperm.xlu0 %1101, %v498
      %v1103 = vpop.permute.xlu0 %1102
      %1105 = vset.pattern.permute.xlu0 1
      %1106 = vperm.xlu0 %1105, %v499
      %v1107 = vpop.permute.xlu0 %1106
      %1109 = vset.pattern.permute.xlu0 1
      %1110 = vperm.xlu0 %1109, %v500
      %v1111 = vpop.permute.xlu0 %1110
      %1113 = vset.pattern.permute.xlu0 1
      %1114 = vperm.xlu0 %1113, %v501
      %v1115 = vpop.permute.xlu0 %1114
      %1117 = vset.pattern.permute.xlu0 1
      %1118 = vperm.xlu0 %1117, %v502
      %v1119 = vpop.permute.xlu0 %1118
      %1121 = vset.pattern.permute.xlu0 1
      %1122 = vperm.xlu0 %1121, %v503
      %v1123 = vpop.permute.xlu0 %1122
      %1125 = vset.pattern.permute.xlu0 1
      %1126 = vperm.xlu0 %1125, %v504
      %v1127 = vpop.permute.xlu0 %1126
      %1129 = vset.pattern.permute.xlu0 1
      %1130 = vperm.xlu0 %1129, %v505
      %v1131 = vpop.permute.xlu0 %1130
      %1133 = vset.pattern.permute.xlu0 1
      %1134 = vperm.xlu0 %1133, %v506
      %v1135 = vpop.permute.xlu0 %1134
      %1137 = vset.pattern.permute.xlu0 1
      %1138 = vperm.xlu0 %1137, %v507
      %v1139 = vpop.permute.xlu0 %1138
      %1141 = vset.pattern.permute.xlu0 1
      %1142 = vperm.xlu0 %1141, %v508
      %v1143 = vpop.permute.xlu0 %1142
      %1145 = vset.pattern.permute.xlu0 1
      %1146 = vperm.xlu0 %1145, %v509
      %v1147 = vpop.permute.xlu0 %1146
      %1149 = vset.pattern.permute.xlu0 1
      %1150 = vperm.xlu0 %1149, %v510
      %v1151 = vpop.permute.xlu0 %1150
      %1153 = vset.pattern.permute.xlu0 1
      %1154 = vperm.xlu0 %1153, %v511
      %v1155 = vpop.permute.xlu0 %1154
      %v1157 = vlaneseq
      %v1158 = vshrl.u32 %v1157, 7
      %v1159 = vsub.s32 1, %v1158
      %v1160 = vrot.slane %v512, %v1159
      %v1161 = vmul.f32 %v903, %v1160
      %v1162 = vmul.f32 %v907, %v1160
      %v1163 = vmul.f32 %v911, %v1160
      %v1164 = vmul.f32 %v915, %v1160
      %v1165 = vmul.f32 %v919, %v1160
      %v1166 = vmul.f32 %v923, %v1160
      %v1167 = vmul.f32 %v927, %v1160
      %v1168 = vmul.f32 %v931, %v1160
      %v1169 = vmul.f32 %v935, %v1160
      %v1170 = vmul.f32 %v939, %v1160
      %v1171 = vmul.f32 %v943, %v1160
      %v1172 = vmul.f32 %v947, %v1160
      %v1173 = vmul.f32 %v951, %v1160
      %v1174 = vmul.f32 %v955, %v1160
      %v1175 = vmul.f32 %v959, %v1160
      %v1176 = vmul.f32 %v963, %v1160
      %v1177 = vmul.f32 %v967, %v1160
      %v1178 = vmul.f32 %v971, %v1160
      %v1179 = vmul.f32 %v975, %v1160
      %v1180 = vmul.f32 %v979, %v1160
      %v1181 = vmul.f32 %v983, %v1160
      %v1182 = vmul.f32 %v987, %v1160
      %v1183 = vmul.f32 %v991, %v1160
      %v1184 = vmul.f32 %v995, %v1160
      %v1185 = vmul.f32 %v999, %v1160
      %v1186 = vmul.f32 %v1003, %v1160
      %v1187 = vmul.f32 %v1007, %v1160
      %v1188 = vmul.f32 %v1011, %v1160
      %v1189 = vmul.f32 %v1015, %v1160
      %v1190 = vmul.f32 %v1019, %v1160
      %v1191 = vmul.f32 %v1023, %v1160
      %v1192 = vmul.f32 %v1027, %v1160
      %v1193 = vmul.f32 %v1031, %v1160
      %v1194 = vmul.f32 %v1035, %v1160
      %v1195 = vmul.f32 %v1039, %v1160
      %v1196 = vmul.f32 %v1043, %v1160
      %v1197 = vmul.f32 %v1047, %v1160
      %v1198 = vmul.f32 %v1051, %v1160
      %v1199 = vmul.f32 %v1055, %v1160
      %v1200 = vmul.f32 %v1059, %v1160
      %v1201 = vmul.f32 %v1063, %v1160
      %v1202 = vmul.f32 %v1067, %v1160
      %v1203 = vmul.f32 %v1071, %v1160
      %v1204 = vmul.f32 %v1075, %v1160
      %v1205 = vmul.f32 %v1079, %v1160
      %v1206 = vmul.f32 %v1083, %v1160
      %v1207 = vmul.f32 %v1087, %v1160
      %v1208 = vmul.f32 %v1091, %v1160
      %v1209 = vmul.f32 %v1095, %v1160
      %v1210 = vmul.f32 %v1099, %v1160
      %v1211 = vmul.f32 %v1103, %v1160
      %v1212 = vmul.f32 %v1107, %v1160
      %v1213 = vmul.f32 %v1111, %v1160
      %v1214 = vmul.f32 %v1115, %v1160
      %v1215 = vmul.f32 %v1119, %v1160
      %v1216 = vmul.f32 %v1123, %v1160
      %v1217 = vmul.f32 %v1127, %v1160
      %v1218 = vmul.f32 %v1131, %v1160
      %v1219 = vmul.f32 %v1135, %v1160
      %v1220 = vmul.f32 %v1139, %v1160
      %v1221 = vmul.f32 %v1143, %v1160
      %v1222 = vmul.f32 %v1147, %v1160
      %v1223 = vmul.f32 %v1151, %v1160
      %v1224 = vmul.f32 %v1155, %v1160
      %v1225 = vadd.f32 %v837, %v1161
      %v1226 = vadd.f32 %v838, %v1162
      %v1227 = vadd.f32 %v839, %v1163
      %v1228 = vadd.f32 %v840, %v1164
      %v1229 = vadd.f32 %v841, %v1165
      %v1230 = vadd.f32 %v842, %v1166
      %v1231 = vadd.f32 %v843, %v1167
      %v1232 = vadd.f32 %v844, %v1168
      %v1233 = vadd.f32 %v845, %v1169
      %v1234 = vadd.f32 %v846, %v1170
      %v1235 = vadd.f32 %v847, %v1171
      %v1236 = vadd.f32 %v848, %v1172
      %v1237 = vadd.f32 %v849, %v1173
      %v1238 = vadd.f32 %v850, %v1174
      %v1239 = vadd.f32 %v851, %v1175
      %v1240 = vadd.f32 %v852, %v1176
      %v1241 = vadd.f32 %v853, %v1177
      %v1242 = vadd.f32 %v854, %v1178
      %v1243 = vadd.f32 %v855, %v1179
      %v1244 = vadd.f32 %v856, %v1180
      %v1245 = vadd.f32 %v857, %v1181
      %v1246 = vadd.f32 %v858, %v1182
      %v1247 = vadd.f32 %v859, %v1183
      %v1248 = vadd.f32 %v860, %v1184
      %v1249 = vadd.f32 %v861, %v1185
      %v1250 = vadd.f32 %v862, %v1186
      %v1251 = vadd.f32 %v863, %v1187
      %v1252 = vadd.f32 %v864, %v1188
      %v1253 = vadd.f32 %v865, %v1189
      %v1254 = vadd.f32 %v866, %v1190
      %v1255 = vadd.f32 %v867, %v1191
      %v1256 = vadd.f32 %v868, %v1192
      %v1257 = vadd.f32 %v869, %v1193
      %v1258 = vadd.f32 %v870, %v1194
      %v1259 = vadd.f32 %v871, %v1195
      %v1260 = vadd.f32 %v872, %v1196
      %v1261 = vadd.f32 %v873, %v1197
      %v1262 = vadd.f32 %v874, %v1198
      %v1263 = vadd.f32 %v875, %v1199
      %v1264 = vadd.f32 %v876, %v1200
      %v1265 = vadd.f32 %v877, %v1201
      %v1266 = vadd.f32 %v878, %v1202
      %v1267 = vadd.f32 %v879, %v1203
      %v1268 = vadd.f32 %v880, %v1204
      %v1269 = vadd.f32 %v881, %v1205
      %v1270 = vadd.f32 %v882, %v1206
      %v1271 = vadd.f32 %v883, %v1207
      %v1272 = vadd.f32 %v884, %v1208
      %v1273 = vadd.f32 %v885, %v1209
      %v1274 = vadd.f32 %v886, %v1210
      %v1275 = vadd.f32 %v887, %v1211
      %v1276 = vadd.f32 %v888, %v1212
      %v1277 = vadd.f32 %v889, %v1213
      %v1278 = vadd.f32 %v890, %v1214
      %v1279 = vadd.f32 %v891, %v1215
      %v1280 = vadd.f32 %v892, %v1216
      %v1281 = vadd.f32 %v893, %v1217
      %v1282 = vadd.f32 %v894, %v1218
      %v1283 = vadd.f32 %v895, %v1219
      %v1284 = vadd.f32 %v896, %v1220
      %v1285 = vadd.f32 %v897, %v1221
      %v1286 = vadd.f32 %v898, %v1222
      %v1287 = vadd.f32 %v899, %v1223
      %v1288 = vadd.f32 %v900, %v1224
      %1289 = vset.pattern.permute.xlu0 2
      %1290 = vperm.xlu0 %1289, %v448
      %v1291 = vpop.permute.xlu0 %1290
      %1293 = vset.pattern.permute.xlu0 2
      %1294 = vperm.xlu0 %1293, %v449
      %v1295 = vpop.permute.xlu0 %1294
      %1297 = vset.pattern.permute.xlu0 2
      %1298 = vperm.xlu0 %1297, %v450
      %v1299 = vpop.permute.xlu0 %1298
      %1301 = vset.pattern.permute.xlu0 2
      %1302 = vperm.xlu0 %1301, %v451
      %v1303 = vpop.permute.xlu0 %1302
      %1305 = vset.pattern.permute.xlu0 2
      %1306 = vperm.xlu0 %1305, %v452
      %v1307 = vpop.permute.xlu0 %1306
      %1309 = vset.pattern.permute.xlu0 2
      %1310 = vperm.xlu0 %1309, %v453
      %v1311 = vpop.permute.xlu0 %1310
      %1313 = vset.pattern.permute.xlu0 2
      %1314 = vperm.xlu0 %1313, %v454
      %v1315 = vpop.permute.xlu0 %1314
      %1317 = vset.pattern.permute.xlu0 2
      %1318 = vperm.xlu0 %1317, %v455
      %v1319 = vpop.permute.xlu0 %1318
      %1321 = vset.pattern.permute.xlu0 2
      %1322 = vperm.xlu0 %1321, %v456
      %v1323 = vpop.permute.xlu0 %1322
      %1325 = vset.pattern.permute.xlu0 2
      %1326 = vperm.xlu0 %1325, %v457
      %v1327 = vpop.permute.xlu0 %1326
      %1329 = vset.pattern.permute.xlu0 2
      %1330 = vperm.xlu0 %1329, %v458
      %v1331 = vpop.permute.xlu0 %1330
      %1333 = vset.pattern.permute.xlu0 2
      %1334 = vperm.xlu0 %1333, %v459
      %v1335 = vpop.permute.xlu0 %1334
      %1337 = vset.pattern.permute.xlu0 2
      %1338 = vperm.xlu0 %1337, %v460
      %v1339 = vpop.permute.xlu0 %1338
      %1341 = vset.pattern.permute.xlu0 2
      %1342 = vperm.xlu0 %1341, %v461
      %v1343 = vpop.permute.xlu0 %1342
      %1345 = vset.pattern.permute.xlu0 2
      %1346 = vperm.xlu0 %1345, %v462
      %v1347 = vpop.permute.xlu0 %1346
      %1349 = vset.pattern.permute.xlu0 2
      %1350 = vperm.xlu0 %1349, %v463
      %v1351 = vpop.permute.xlu0 %1350
      %1353 = vset.pattern.permute.xlu0 2
      %1354 = vperm.xlu0 %1353, %v464
      %v1355 = vpop.permute.xlu0 %1354
      %1357 = vset.pattern.permute.xlu0 2
      %1358 = vperm.xlu0 %1357, %v465
      %v1359 = vpop.permute.xlu0 %1358
      %1361 = vset.pattern.permute.xlu0 2
      %1362 = vperm.xlu0 %1361, %v466
      %v1363 = vpop.permute.xlu0 %1362
      %1365 = vset.pattern.permute.xlu0 2
      %1366 = vperm.xlu0 %1365, %v467
      %v1367 = vpop.permute.xlu0 %1366
      %1369 = vset.pattern.permute.xlu0 2
      %1370 = vperm.xlu0 %1369, %v468
      %v1371 = vpop.permute.xlu0 %1370
      %1373 = vset.pattern.permute.xlu0 2
      %1374 = vperm.xlu0 %1373, %v469
      %v1375 = vpop.permute.xlu0 %1374
      %1377 = vset.pattern.permute.xlu0 2
      %1378 = vperm.xlu0 %1377, %v470
      %v1379 = vpop.permute.xlu0 %1378
      %1381 = vset.pattern.permute.xlu0 2
      %1382 = vperm.xlu0 %1381, %v471
      %v1383 = vpop.permute.xlu0 %1382
      %1385 = vset.pattern.permute.xlu0 2
      %1386 = vperm.xlu0 %1385, %v472
      %v1387 = vpop.permute.xlu0 %1386
      %1389 = vset.pattern.permute.xlu0 2
      %1390 = vperm.xlu0 %1389, %v473
      %v1391 = vpop.permute.xlu0 %1390
      %1393 = vset.pattern.permute.xlu0 2
      %1394 = vperm.xlu0 %1393, %v474
      %v1395 = vpop.permute.xlu0 %1394
      %1397 = vset.pattern.permute.xlu0 2
      %1398 = vperm.xlu0 %1397, %v475
      %v1399 = vpop.permute.xlu0 %1398
      %1401 = vset.pattern.permute.xlu0 2
      %1402 = vperm.xlu0 %1401, %v476
      %v1403 = vpop.permute.xlu0 %1402
      %1405 = vset.pattern.permute.xlu0 2
      %1406 = vperm.xlu0 %1405, %v477
      %v1407 = vpop.permute.xlu0 %1406
      %1409 = vset.pattern.permute.xlu0 2
      %1410 = vperm.xlu0 %1409, %v478
      %v1411 = vpop.permute.xlu0 %1410
      %1413 = vset.pattern.permute.xlu0 2
      %1414 = vperm.xlu0 %1413, %v479
      %v1415 = vpop.permute.xlu0 %1414
      %1417 = vset.pattern.permute.xlu0 2
      %1418 = vperm.xlu0 %1417, %v480
      %v1419 = vpop.permute.xlu0 %1418
      %1421 = vset.pattern.permute.xlu0 2
      %1422 = vperm.xlu0 %1421, %v481
      %v1423 = vpop.permute.xlu0 %1422
      %1425 = vset.pattern.permute.xlu0 2
      %1426 = vperm.xlu0 %1425, %v482
      %v1427 = vpop.permute.xlu0 %1426
      %1429 = vset.pattern.permute.xlu0 2
      %1430 = vperm.xlu0 %1429, %v483
      %v1431 = vpop.permute.xlu0 %1430
      %1433 = vset.pattern.permute.xlu0 2
      %1434 = vperm.xlu0 %1433, %v484
      %v1435 = vpop.permute.xlu0 %1434
      %1437 = vset.pattern.permute.xlu0 2
      %1438 = vperm.xlu0 %1437, %v485
      %v1439 = vpop.permute.xlu0 %1438
      %1441 = vset.pattern.permute.xlu0 2
      %1442 = vperm.xlu0 %1441, %v486
      %v1443 = vpop.permute.xlu0 %1442
      %1445 = vset.pattern.permute.xlu0 2
      %1446 = vperm.xlu0 %1445, %v487
      %v1447 = vpop.permute.xlu0 %1446
      %1449 = vset.pattern.permute.xlu0 2
      %1450 = vperm.xlu0 %1449, %v488
      %v1451 = vpop.permute.xlu0 %1450
      %1453 = vset.pattern.permute.xlu0 2
      %1454 = vperm.xlu0 %1453, %v489
      %v1455 = vpop.permute.xlu0 %1454
      %1457 = vset.pattern.permute.xlu0 2
      %1458 = vperm.xlu0 %1457, %v490
      %v1459 = vpop.permute.xlu0 %1458
      %1461 = vset.pattern.permute.xlu0 2
      %1462 = vperm.xlu0 %1461, %v491
      %v1463 = vpop.permute.xlu0 %1462
      %1465 = vset.pattern.permute.xlu0 2
      %1466 = vperm.xlu0 %1465, %v492
      %v1467 = vpop.permute.xlu0 %1466
      %1469 = vset.pattern.permute.xlu0 2
      %1470 = vperm.xlu0 %1469, %v493
      %v1471 = vpop.permute.xlu0 %1470
      %1473 = vset.pattern.permute.xlu0 2
      %1474 = vperm.xlu0 %1473, %v494
      %v1475 = vpop.permute.xlu0 %1474
      %1477 = vset.pattern.permute.xlu0 2
      %1478 = vperm.xlu0 %1477, %v495
      %v1479 = vpop.permute.xlu0 %1478
      %1481 = vset.pattern.permute.xlu0 2
      %1482 = vperm.xlu0 %1481, %v496
      %v1483 = vpop.permute.xlu0 %1482
      %1485 = vset.pattern.permute.xlu0 2
      %1486 = vperm.xlu0 %1485, %v497
      %v1487 = vpop.permute.xlu0 %1486
      %1489 = vset.pattern.permute.xlu0 2
      %1490 = vperm.xlu0 %1489, %v498
      %v1491 = vpop.permute.xlu0 %1490
      %1493 = vset.pattern.permute.xlu0 2
      %1494 = vperm.xlu0 %1493, %v499
      %v1495 = vpop.permute.xlu0 %1494
      %1497 = vset.pattern.permute.xlu0 2
      %1498 = vperm.xlu0 %1497, %v500
      %v1499 = vpop.permute.xlu0 %1498
      %1501 = vset.pattern.permute.xlu0 2
      %1502 = vperm.xlu0 %1501, %v501
      %v1503 = vpop.permute.xlu0 %1502
      %1505 = vset.pattern.permute.xlu0 2
      %1506 = vperm.xlu0 %1505, %v502
      %v1507 = vpop.permute.xlu0 %1506
      %1509 = vset.pattern.permute.xlu0 2
      %1510 = vperm.xlu0 %1509, %v503
      %v1511 = vpop.permute.xlu0 %1510
      %1513 = vset.pattern.permute.xlu0 2
      %1514 = vperm.xlu0 %1513, %v504
      %v1515 = vpop.permute.xlu0 %1514
      %1517 = vset.pattern.permute.xlu0 2
      %1518 = vperm.xlu0 %1517, %v505
      %v1519 = vpop.permute.xlu0 %1518
      %1521 = vset.pattern.permute.xlu0 2
      %1522 = vperm.xlu0 %1521, %v506
      %v1523 = vpop.permute.xlu0 %1522
      %1525 = vset.pattern.permute.xlu0 2
      %1526 = vperm.xlu0 %1525, %v507
      %v1527 = vpop.permute.xlu0 %1526
      %1529 = vset.pattern.permute.xlu0 2
      %1530 = vperm.xlu0 %1529, %v508
      %v1531 = vpop.permute.xlu0 %1530
      %1533 = vset.pattern.permute.xlu0 2
      %1534 = vperm.xlu0 %1533, %v509
      %v1535 = vpop.permute.xlu0 %1534
      %1537 = vset.pattern.permute.xlu0 2
      %1538 = vperm.xlu0 %1537, %v510
      %v1539 = vpop.permute.xlu0 %1538
      %1541 = vset.pattern.permute.xlu0 2
      %1542 = vperm.xlu0 %1541, %v511
      %v1543 = vpop.permute.xlu0 %1542
      %v1545 = vlaneseq
      %v1546 = vshrl.u32 %v1545, 7
      %v1547 = vsub.s32 2, %v1546
      %v1548 = vrot.slane %v512, %v1547
      %v1549 = vmul.f32 %v1291, %v1548
      %v1550 = vmul.f32 %v1295, %v1548
      %v1551 = vmul.f32 %v1299, %v1548
      %v1552 = vmul.f32 %v1303, %v1548
      %v1553 = vmul.f32 %v1307, %v1548
      %v1554 = vmul.f32 %v1311, %v1548
      %v1555 = vmul.f32 %v1315, %v1548
      %v1556 = vmul.f32 %v1319, %v1548
      %v1557 = vmul.f32 %v1323, %v1548
      %v1558 = vmul.f32 %v1327, %v1548
      %v1559 = vmul.f32 %v1331, %v1548
      %v1560 = vmul.f32 %v1335, %v1548
      %v1561 = vmul.f32 %v1339, %v1548
      %v1562 = vmul.f32 %v1343, %v1548
      %v1563 = vmul.f32 %v1347, %v1548
      %v1564 = vmul.f32 %v1351, %v1548
      %v1565 = vmul.f32 %v1355, %v1548
      %v1566 = vmul.f32 %v1359, %v1548
      %v1567 = vmul.f32 %v1363, %v1548
      %v1568 = vmul.f32 %v1367, %v1548
      %v1569 = vmul.f32 %v1371, %v1548
      %v1570 = vmul.f32 %v1375, %v1548
      %v1571 = vmul.f32 %v1379, %v1548
      %v1572 = vmul.f32 %v1383, %v1548
      %v1573 = vmul.f32 %v1387, %v1548
      %v1574 = vmul.f32 %v1391, %v1548
      %v1575 = vmul.f32 %v1395, %v1548
      %v1576 = vmul.f32 %v1399, %v1548
      %v1577 = vmul.f32 %v1403, %v1548
      %v1578 = vmul.f32 %v1407, %v1548
      %v1579 = vmul.f32 %v1411, %v1548
      %v1580 = vmul.f32 %v1415, %v1548
      %v1581 = vmul.f32 %v1419, %v1548
      %v1582 = vmul.f32 %v1423, %v1548
      %v1583 = vmul.f32 %v1427, %v1548
      %v1584 = vmul.f32 %v1431, %v1548
      %v1585 = vmul.f32 %v1435, %v1548
      %v1586 = vmul.f32 %v1439, %v1548
      %v1587 = vmul.f32 %v1443, %v1548
      %v1588 = vmul.f32 %v1447, %v1548
      %v1589 = vmul.f32 %v1451, %v1548
      %v1590 = vmul.f32 %v1455, %v1548
      %v1591 = vmul.f32 %v1459, %v1548
      %v1592 = vmul.f32 %v1463, %v1548
      %v1593 = vmul.f32 %v1467, %v1548
      %v1594 = vmul.f32 %v1471, %v1548
      %v1595 = vmul.f32 %v1475, %v1548
      %v1596 = vmul.f32 %v1479, %v1548
      %v1597 = vmul.f32 %v1483, %v1548
      %v1598 = vmul.f32 %v1487, %v1548
      %v1599 = vmul.f32 %v1491, %v1548
      %v1600 = vmul.f32 %v1495, %v1548
      %v1601 = vmul.f32 %v1499, %v1548
      %v1602 = vmul.f32 %v1503, %v1548
      %v1603 = vmul.f32 %v1507, %v1548
      %v1604 = vmul.f32 %v1511, %v1548
      %v1605 = vmul.f32 %v1515, %v1548
      %v1606 = vmul.f32 %v1519, %v1548
      %v1607 = vmul.f32 %v1523, %v1548
      %v1608 = vmul.f32 %v1527, %v1548
      %v1609 = vmul.f32 %v1531, %v1548
      %v1610 = vmul.f32 %v1535, %v1548
      %v1611 = vmul.f32 %v1539, %v1548
      %v1612 = vmul.f32 %v1543, %v1548
      %v1613 = vadd.f32 %v1225, %v1549
      %v1614 = vadd.f32 %v1226, %v1550
      %v1615 = vadd.f32 %v1227, %v1551
      %v1616 = vadd.f32 %v1228, %v1552
      %v1617 = vadd.f32 %v1229, %v1553
      %v1618 = vadd.f32 %v1230, %v1554
      %v1619 = vadd.f32 %v1231, %v1555
      %v1620 = vadd.f32 %v1232, %v1556
      %v1621 = vadd.f32 %v1233, %v1557
      %v1622 = vadd.f32 %v1234, %v1558
      %v1623 = vadd.f32 %v1235, %v1559
      %v1624 = vadd.f32 %v1236, %v1560
      %v1625 = vadd.f32 %v1237, %v1561
      %v1626 = vadd.f32 %v1238, %v1562
      %v1627 = vadd.f32 %v1239, %v1563
      %v1628 = vadd.f32 %v1240, %v1564
      %v1629 = vadd.f32 %v1241, %v1565
      %v1630 = vadd.f32 %v1242, %v1566
      %v1631 = vadd.f32 %v1243, %v1567
      %v1632 = vadd.f32 %v1244, %v1568
      %v1633 = vadd.f32 %v1245, %v1569
      %v1634 = vadd.f32 %v1246, %v1570
      %v1635 = vadd.f32 %v1247, %v1571
      %v1636 = vadd.f32 %v1248, %v1572
      %v1637 = vadd.f32 %v1249, %v1573
      %v1638 = vadd.f32 %v1250, %v1574
      %v1639 = vadd.f32 %v1251, %v1575
      %v1640 = vadd.f32 %v1252, %v1576
      %v1641 = vadd.f32 %v1253, %v1577
      %v1642 = vadd.f32 %v1254, %v1578
      %v1643 = vadd.f32 %v1255, %v1579
      %v1644 = vadd.f32 %v1256, %v1580
      %v1645 = vadd.f32 %v1257, %v1581
      %v1646 = vadd.f32 %v1258, %v1582
      %v1647 = vadd.f32 %v1259, %v1583
      %v1648 = vadd.f32 %v1260, %v1584
      %v1649 = vadd.f32 %v1261, %v1585
      %v1650 = vadd.f32 %v1262, %v1586
      %v1651 = vadd.f32 %v1263, %v1587
      %v1652 = vadd.f32 %v1264, %v1588
      %v1653 = vadd.f32 %v1265, %v1589
      %v1654 = vadd.f32 %v1266, %v1590
      %v1655 = vadd.f32 %v1267, %v1591
      %v1656 = vadd.f32 %v1268, %v1592
      %v1657 = vadd.f32 %v1269, %v1593
      %v1658 = vadd.f32 %v1270, %v1594
      %v1659 = vadd.f32 %v1271, %v1595
      %v1660 = vadd.f32 %v1272, %v1596
      %v1661 = vadd.f32 %v1273, %v1597
      %v1662 = vadd.f32 %v1274, %v1598
      %v1663 = vadd.f32 %v1275, %v1599
      %v1664 = vadd.f32 %v1276, %v1600
      %v1665 = vadd.f32 %v1277, %v1601
      %v1666 = vadd.f32 %v1278, %v1602
      %v1667 = vadd.f32 %v1279, %v1603
      %v1668 = vadd.f32 %v1280, %v1604
      %v1669 = vadd.f32 %v1281, %v1605
      %v1670 = vadd.f32 %v1282, %v1606
      %v1671 = vadd.f32 %v1283, %v1607
      %v1672 = vadd.f32 %v1284, %v1608
      %v1673 = vadd.f32 %v1285, %v1609
      %v1674 = vadd.f32 %v1286, %v1610
      %v1675 = vadd.f32 %v1287, %v1611
      %v1676 = vadd.f32 %v1288, %v1612
      %v1677 = vld [vmem:[%s2] sm:$0x1]
      %v1679 = vlaneseq
      %v1680 = vshrl.u32 %v1679, 7
      %v1681 = vsub.s32 0, %v1680
      %v1682 = vrot.slane %v1677, %v1681
      %v1684 = vadd.f32 %v1613, %v1682
      %v1685 = vadd.f32 %v1614, %v1682
      %v1686 = vadd.f32 %v1615, %v1682
      %v1687 = vadd.f32 %v1616, %v1682
      %v1688 = vadd.f32 %v1617, %v1682
      %v1689 = vadd.f32 %v1618, %v1682
      %v1690 = vadd.f32 %v1619, %v1682
      %v1691 = vadd.f32 %v1620, %v1682
      %v1692 = vadd.f32 %v1621, %v1682
      %v1693 = vadd.f32 %v1622, %v1682
      %v1694 = vadd.f32 %v1623, %v1682
      %v1695 = vadd.f32 %v1624, %v1682
      %v1696 = vadd.f32 %v1625, %v1682
      %v1697 = vadd.f32 %v1626, %v1682
      %v1698 = vadd.f32 %v1627, %v1682
      %v1699 = vadd.f32 %v1628, %v1682
      %v1700 = vadd.f32 %v1629, %v1682
      %v1701 = vadd.f32 %v1630, %v1682
      %v1702 = vadd.f32 %v1631, %v1682
      %v1703 = vadd.f32 %v1632, %v1682
      %v1704 = vadd.f32 %v1633, %v1682
      %v1705 = vadd.f32 %v1634, %v1682
      %v1706 = vadd.f32 %v1635, %v1682
      %v1707 = vadd.f32 %v1636, %v1682
      %v1708 = vadd.f32 %v1637, %v1682
      %v1709 = vadd.f32 %v1638, %v1682
      %v1710 = vadd.f32 %v1639, %v1682
      %v1711 = vadd.f32 %v1640, %v1682
      %v1712 = vadd.f32 %v1641, %v1682
      %v1713 = vadd.f32 %v1642, %v1682
      %v1714 = vadd.f32 %v1643, %v1682
      %v1715 = vadd.f32 %v1644, %v1682
      %v1716 = vadd.f32 %v1645, %v1682
      %v1717 = vadd.f32 %v1646, %v1682
      %v1718 = vadd.f32 %v1647, %v1682
      %v1719 = vadd.f32 %v1648, %v1682
      %v1720 = vadd.f32 %v1649, %v1682
      %v1721 = vadd.f32 %v1650, %v1682
      %v1722 = vadd.f32 %v1651, %v1682
      %v1723 = vadd.f32 %v1652, %v1682
      %v1724 = vadd.f32 %v1653, %v1682
      %v1725 = vadd.f32 %v1654, %v1682
      %v1726 = vadd.f32 %v1655, %v1682
      %v1727 = vadd.f32 %v1656, %v1682
      %v1728 = vadd.f32 %v1657, %v1682
      %v1729 = vadd.f32 %v1658, %v1682
      %v1730 = vadd.f32 %v1659, %v1682
      %v1731 = vadd.f32 %v1660, %v1682
      %v1732 = vadd.f32 %v1661, %v1682
      %v1733 = vadd.f32 %v1662, %v1682
      %v1734 = vadd.f32 %v1663, %v1682
      %v1735 = vadd.f32 %v1664, %v1682
      %v1736 = vadd.f32 %v1665, %v1682
      %v1737 = vadd.f32 %v1666, %v1682
      %v1738 = vadd.f32 %v1667, %v1682
      %v1739 = vadd.f32 %v1668, %v1682
      %v1740 = vadd.f32 %v1669, %v1682
      %v1741 = vadd.f32 %v1670, %v1682
      %v1742 = vadd.f32 %v1671, %v1682
      %v1743 = vadd.f32 %v1672, %v1682
      %v1744 = vadd.f32 %v1673, %v1682
      %v1745 = vadd.f32 %v1674, %v1682
      %v1746 = vadd.f32 %v1675, %v1682
      %v1747 = vadd.f32 %v1676, %v1682
      %v1748 = vmax.f32 %v1684, 0.0
      %v1749 = vmax.f32 %v1685, 0.0
      %v1750 = vmax.f32 %v1686, 0.0
      %v1751 = vmax.f32 %v1687, 0.0
      %v1752 = vmax.f32 %v1688, 0.0
      %v1753 = vmax.f32 %v1689, 0.0
      %v1754 = vmax.f32 %v1690, 0.0
      %v1755 = vmax.f32 %v1691, 0.0
      %v1756 = vmax.f32 %v1692, 0.0
      %v1757 = vmax.f32 %v1693, 0.0
      %v1758 = vmax.f32 %v1694, 0.0
      %v1759 = vmax.f32 %v1695, 0.0
      %v1760 = vmax.f32 %v1696, 0.0
      %v1761 = vmax.f32 %v1697, 0.0
      %v1762 = vmax.f32 %v1698, 0.0
      %v1763 = vmax.f32 %v1699, 0.0
      %v1764 = vmax.f32 %v1700, 0.0
      %v1765 = vmax.f32 %v1701, 0.0
      %v1766 = vmax.f32 %v1702, 0.0
      %v1767 = vmax.f32 %v1703, 0.0
      %v1768 = vmax.f32 %v1704, 0.0
      %v1769 = vmax.f32 %v1705, 0.0
      %v1770 = vmax.f32 %v1706, 0.0
      %v1771 = vmax.f32 %v1707, 0.0
      %v1772 = vmax.f32 %v1708, 0.0
      %v1773 = vmax.f32 %v1709, 0.0
      %v1774 = vmax.f32 %v1710, 0.0
      %v1775 = vmax.f32 %v1711, 0.0
      %v1776 = vmax.f32 %v1712, 0.0
      %v1777 = vmax.f32 %v1713, 0.0
      %v1778 = vmax.f32 %v1714, 0.0
      %v1779 = vmax.f32 %v1715, 0.0
      %v1780 = vmax.f32 %v1716, 0.0
      %v1781 = vmax.f32 %v1717, 0.0
      %v1782 = vmax.f32 %v1718, 0.0
      %v1783 = vmax.f32 %v1719, 0.0
      %v1784 = vmax.f32 %v1720, 0.0
      %v1785 = vmax.f32 %v1721, 0.0
      %v1786 = vmax.f32 %v1722, 0.0
      %v1787 = vmax.f32 %v1723, 0.0
      %v1788 = vmax.f32 %v1724, 0.0
      %v1789 = vmax.f32 %v1725, 0.0
      %v1790 = vmax.f32 %v1726, 0.0
      %v1791 = vmax.f32 %v1727, 0.0
      %v1792 = vmax.f32 %v1728, 0.0
      %v1793 = vmax.f32 %v1729, 0.0
      %v1794 = vmax.f32 %v1730, 0.0
      %v1795 = vmax.f32 %v1731, 0.0
      %v1796 = vmax.f32 %v1732, 0.0
      %v1797 = vmax.f32 %v1733, 0.0
      %v1798 = vmax.f32 %v1734, 0.0
      %v1799 = vmax.f32 %v1735, 0.0
      %v1800 = vmax.f32 %v1736, 0.0
      %v1801 = vmax.f32 %v1737, 0.0
      %v1802 = vmax.f32 %v1738, 0.0
      %v1803 = vmax.f32 %v1739, 0.0
      %v1804 = vmax.f32 %v1740, 0.0
      %v1805 = vmax.f32 %v1741, 0.0
      %v1806 = vmax.f32 %v1742, 0.0
      %v1807 = vmax.f32 %v1743, 0.0
      %v1808 = vmax.f32 %v1744, 0.0
      %v1809 = vmax.f32 %v1745, 0.0
      %v1810 = vmax.f32 %v1746, 0.0
      %v1811 = vmax.f32 %v1747, 0.0
      %v1812 = vpack.c.bf16 %v1749, %v1748
      %v1813 = vpack.c.bf16 %v1751, %v1750
      %v1814 = vpack.c.bf16 %v1753, %v1752
      %v1815 = vpack.c.bf16 %v1755, %v1754
      %v1816 = vpack.c.bf16 %v1757, %v1756
      %v1817 = vpack.c.bf16 %v1759, %v1758
      %v1818 = vpack.c.bf16 %v1761, %v1760
      %v1819 = vpack.c.bf16 %v1763, %v1762
      %v1820 = vpack.c.bf16 %v1765, %v1764
      %v1821 = vpack.c.bf16 %v1767, %v1766
      %v1822 = vpack.c.bf16 %v1769, %v1768
      %v1823 = vpack.c.bf16 %v1771, %v1770
      %v1824 = vpack.c.bf16 %v1773, %v1772
      %v1825 = vpack.c.bf16 %v1775, %v1774
      %v1826 = vpack.c.bf16 %v1777, %v1776
      %v1827 = vpack.c.bf16 %v1779, %v1778
      %v1828 = vpack.c.bf16 %v1781, %v1780
      %v1829 = vpack.c.bf16 %v1783, %v1782
      %v1830 = vpack.c.bf16 %v1785, %v1784
      %v1831 = vpack.c.bf16 %v1787, %v1786
      %v1832 = vpack.c.bf16 %v1789, %v1788
      %v1833 = vpack.c.bf16 %v1791, %v1790
      %v1834 = vpack.c.bf16 %v1793, %v1792
      %v1835 = vpack.c.bf16 %v1795, %v1794
      %v1836 = vpack.c.bf16 %v1797, %v1796
      %v1837 = vpack.c.bf16 %v1799, %v1798
      %v1838 = vpack.c.bf16 %v1801, %v1800
      %v1839 = vpack.c.bf16 %v1803, %v1802
      %v1840 = vpack.c.bf16 %v1805, %v1804
      %v1841 = vpack.c.bf16 %v1807, %v1806
      %v1842 = vpack.c.bf16 %v1809, %v1808
      %v1843 = vpack.c.bf16 %v1811, %v1810
      %v1844 = vld [vmem:[%s3] sm:$0xf]
      %v1845 = vld [vmem:[%s3 + $0x4] sm:$0xf]
      %v1846 = vld [vmem:[%s3 + $0x8] sm:$0xf]
      %v1847 = vld [vmem:[%s3 + $0xc] sm:$0xf]
      %v1848 = vld [vmem:[%s3 + $0x10] sm:$0xf]
      %v1849 = vld [vmem:[%s3 + $0x14] sm:$0xf]
      %v1850 = vld [vmem:[%s3 + $0x18] sm:$0xf]
      %v1851 = vld [vmem:[%s3 + $0x1c] sm:$0xf]
      %v1852 = vld [vmem:[%s4] sm:$0x1]
      %v1854 = vlaneseq
      %v1855 = vshrl.u32 %v1854, 7
      %v1856 = vsub.s32 0, %v1855
      %v1857 = vrot.slane %v1852, %v1856
      %v1867 = vunpack.c.l.b16 %v1844
      %v1868 = vunpack.c.l.b16 %v1845
      %v1869 = vunpack.c.l.b16 %v1846
      %v1870 = vunpack.c.l.b16 %v1847
      %v1871 = vunpack.c.l.b16 %v1848
      %v1872 = vunpack.c.l.b16 %v1849
      %v1873 = vunpack.c.l.b16 %v1850
      %v1874 = vunpack.c.l.b16 %v1851
      %v1875 = vpack.c.b16 %v1868, %v1867
      %v1876 = vpack.c.b16 %v1870, %v1869
      %v1877 = vpack.c.b16 %v1872, %v1871
      %v1878 = vpack.c.b16 %v1874, %v1873
      %vm1883 = vcmask 523264
      %v1885 = vsel %vm1883, %v1812, 0
      %v1888 = vsel %vm1883, %v1813, 0
      %v1891 = vsel %vm1883, %v1814, 0
      %v1894 = vsel %vm1883, %v1815, 0
      %v1897 = vsel %vm1883, %v1816, 0
      %v1900 = vsel %vm1883, %v1817, 0
      %v1903 = vsel %vm1883, %v1818, 0
      %v1906 = vsel %vm1883, %v1819, 0
      %v1909 = vsel %vm1883, %v1820, 0
      %v1912 = vsel %vm1883, %v1821, 0
      %v1915 = vsel %vm1883, %v1822, 0
      %v1918 = vsel %vm1883, %v1823, 0
      %v1921 = vsel %vm1883, %v1824, 0
      %v1924 = vsel %vm1883, %v1825, 0
      %v1927 = vsel %vm1883, %v1826, 0
      %v1930 = vsel %vm1883, %v1827, 0
      %v1933 = vsel %vm1883, %v1828, 0
      %v1936 = vsel %vm1883, %v1829, 0
      %v1939 = vsel %vm1883, %v1830, 0
      %v1942 = vsel %vm1883, %v1831, 0
      %v1945 = vsel %vm1883, %v1832, 0
      %v1948 = vsel %vm1883, %v1833, 0
      %v1951 = vsel %vm1883, %v1834, 0
      %v1954 = vsel %vm1883, %v1835, 0
      %v1957 = vsel %vm1883, %v1836, 0
      %v1960 = vsel %vm1883, %v1837, 0
      %v1963 = vsel %vm1883, %v1838, 0
      %v1966 = vsel %vm1883, %v1839, 0
      %v1969 = vsel %vm1883, %v1840, 0
      %v1972 = vsel %vm1883, %v1841, 0
      %v1975 = vsel %vm1883, %v1842, 0
      %v1978 = vsel %vm1883, %v1843, 0
      %1980 = vmatprep.subr.bf16.mxu0 0
      %1981 = vmatpush1.bf16.msra.mxu0 %v1875
      %1982 = vmatprep.subr.bf16.mxu0 0
      %1983 = vmatpush1.bf16.msra.mxu0 %v1876
      %1984 = vmatprep.subr.bf16.mxu0 0
      %1985 = vmatpush1.bf16.msra.mxu0 %v1877
      %1986 = vmatprep.subr.bf16.mxu0 0
      %1987 = vmatpush1.bf16.msra.mxu0 %v1878
      %1988 = vmatprep.subr.bf16.mxu0 0
      %1989 = vmatpush1.bf16.msra.mxu0 0
      %1990 = vmatprep.subr.bf16.mxu0 0
      %1991 = vmatpush1.bf16.msra.mxu0 0
      %1992 = vmatprep.subr.bf16.mxu0 0
      %1993 = vmatpush1.bf16.msra.mxu0 0
      %1994 = vmatprep.subr.bf16.mxu0 0
      %1995 = vmatpush1.bf16.msra.mxu0 0
      %1996 = vmatprep.subr.bf16.mxu0 0
      %1997 = vmatpush1.bf16.msra.mxu0 0
      %1998 = vmatprep.subr.bf16.mxu0 0
      %1999 = vmatpush1.bf16.msra.mxu0 0
      %2000 = vmatprep.subr.bf16.mxu0 0
      %2001 = vmatpush1.bf16.msra.mxu0 0
      %2002 = vmatprep.subr.bf16.mxu0 0
      %2003 = vmatpush1.bf16.msra.mxu0 0
      %2004 = vmatprep.subr.bf16.mxu0 0
      %2005 = vmatpush1.bf16.msra.mxu0 0
      %2006 = vmatprep.subr.bf16.mxu0 0
      %2007 = vmatpush1.bf16.msra.mxu0 0
      %2008 = vmatprep.subr.bf16.mxu0 0
      %2009 = vmatpush1.bf16.msra.mxu0 0
      %2010 = vmatprep.subr.bf16.mxu0 0
      %2011 = vmatpush1.bf16.msra.mxu0 0
      %2012 = vmatprep.mubr.bf16.mxu0 0
      %2013 = vmatmul.mubr.bf16.gmra.mrb[0].mxu0 %v1885
      %v2014 = vpop.f32.mrb[0].mxu0
      %v2015 = vadd.f32 %v1857, %v2014
      %v2016 = vpop.f32.mrb[0].mxu0
      %v2017 = vpop.f32.mrb[0].mxu0
      %v2018 = vadd.f32 %v1857, %v2017
      %v2019 = vpop.f32.mrb[0].mxu0
      %2020 = vmatprep.mubr.bf16.mxu0 0
      %2021 = vmatmul.mubr.bf16.gmra.mrb[0].mxu0 %v1888
      %v2022 = vpop.f32.mrb[0].mxu0
      %v2023 = vadd.f32 %v1857, %v2022
      %v2024 = vpop.f32.mrb[0].mxu0
      %v2025 = vpop.f32.mrb[0].mxu0
      %v2026 = vadd.f32 %v1857, %v2025
      %v2027 = vpop.f32.mrb[0].mxu0
      %2028 = vmatprep.mubr.bf16.mxu0 0
      %2029 = vmatmul.mubr.bf16.gmra.mrb[0].mxu0 %v1891
      %v2030 = vpop.f32.mrb[0].mxu0
      %v2031 = vadd.f32 %v1857, %v2030
      %v2032 = vpop.f32.mrb[0].mxu0
      %v2033 = vpop.f32.mrb[0].mxu0
      %v2034 = vadd.f32 %v1857, %v2033
      %v2035 = vpop.f32.mrb[0].mxu0
      %2036 = vmatprep.mubr.bf16.mxu0 0
      %2037 = vmatmul.mubr.bf16.gmra.mrb[0].mxu0 %v1894
      %v2038 = vpop.f32.mrb[0].mxu0
      %v2039 = vadd.f32 %v1857, %v2038
      %v2040 = vpop.f32.mrb[0].mxu0
      %v2041 = vpop.f32.mrb[0].mxu0
      %v2042 = vadd.f32 %v1857, %v2041
      %v2043 = vpop.f32.mrb[0].mxu0
      %2044 = vmatprep.mubr.bf16.mxu0 0
      %2045 = vmatmul.mubr.bf16.gmra.mrb[0].mxu0 %v1897
      %v2046 = vpop.f32.mrb[0].mxu0
      %v2047 = vadd.f32 %v1857, %v2046
      %v2048 = vpop.f32.mrb[0].mxu0
      %v2049 = vpop.f32.mrb[0].mxu0
      %v2050 = vadd.f32 %v1857, %v2049
      %v2051 = vpop.f32.mrb[0].mxu0
      %2052 = vmatprep.mubr.bf16.mxu0 0
      %2053 = vmatmul.mubr.bf16.gmra.mrb[0].mxu0 %v1900
      %v2054 = vpop.f32.mrb[0].mxu0
      %v2055 = vadd.f32 %v1857, %v2054
      %v2056 = vpop.f32.mrb[0].mxu0
      %v2057 = vpop.f32.mrb[0].mxu0
      %v2058 = vadd.f32 %v1857, %v2057
      %v2059 = vpop.f32.mrb[0].mxu0
      %2060 = vmatprep.mubr.bf16.mxu0 0
      %2061 = vmatmul.mubr.bf16.gmra.mrb[0].mxu0 %v1903
      %v2062 = vpop.f32.mrb[0].mxu0
      %v2063 = vadd.f32 %v1857, %v2062
      %v2064 = vpop.f32.mrb[0].mxu0
      %v2065 = vpop.f32.mrb[0].mxu0
      %v2066 = vadd.f32 %v1857, %v2065
      %v2067 = vpop.f32.mrb[0].mxu0
      %2068 = vmatprep.mubr.bf16.mxu0 0
      %2069 = vmatmul.mubr.bf16.gmra.mrb[0].mxu0 %v1906
      %v2070 = vpop.f32.mrb[0].mxu0
      %v2071 = vadd.f32 %v1857, %v2070
      %v2072 = vpop.f32.mrb[0].mxu0
      %v2073 = vpop.f32.mrb[0].mxu0
      %v2074 = vadd.f32 %v1857, %v2073
      %v2075 = vpop.f32.mrb[0].mxu0
      %2076 = vmatprep.mubr.bf16.mxu0 0
      %2077 = vmatmul.mubr.bf16.gmra.mrb[0].mxu0 %v1909
      %v2078 = vpop.f32.mrb[0].mxu0
      %v2079 = vadd.f32 %v1857, %v2078
      %v2080 = vpop.f32.mrb[0].mxu0
      %v2081 = vpop.f32.mrb[0].mxu0
      %v2082 = vadd.f32 %v1857, %v2081
      %v2083 = vpop.f32.mrb[0].mxu0
      %2084 = vmatprep.mubr.bf16.mxu0 0
      %2085 = vmatmul.mubr.bf16.gmra.mrb[0].mxu0 %v1912
      %v2086 = vpop.f32.mrb[0].mxu0
      %v2087 = vadd.f32 %v1857, %v2086
      %v2088 = vpop.f32.mrb[0].mxu0
      %v2089 = vpop.f32.mrb[0].mxu0
      %v2090 = vadd.f32 %v1857, %v2089
      %v2091 = vpop.f32.mrb[0].mxu0
      %2092 = vmatprep.mubr.bf16.mxu0 0
      %2093 = vmatmul.mubr.bf16.gmra.mrb[0].mxu0 %v1915
      %v2094 = vpop.f32.mrb[0].mxu0
      %v2095 = vadd.f32 %v1857, %v2094
      %v2096 = vpop.f32.mrb[0].mxu0
      %v2097 = vpop.f32.mrb[0].mxu0
      %v2098 = vadd.f32 %v1857, %v2097
      %v2099 = vpop.f32.mrb[0].mxu0
      %2100 = vmatprep.mubr.bf16.mxu0 0
      %2101 = vmatmul.mubr.bf16.gmra.mrb[0].mxu0 %v1918
      %v2102 = vpop.f32.mrb[0].mxu0
      %v2103 = vadd.f32 %v1857, %v2102
      %v2104 = vpop.f32.mrb[0].mxu0
      %v2105 = vpop.f32.mrb[0].mxu0
      %v2106 = vadd.f32 %v1857, %v2105
      %v2107 = vpop.f32.mrb[0].mxu0
      %2108 = vmatprep.mubr.bf16.mxu0 0
      %2109 = vmatmul.mubr.bf16.gmra.mrb[0].mxu0 %v1921
      %v2110 = vpop.f32.mrb[0].mxu0
      %v2111 = vadd.f32 %v1857, %v2110
      %v2112 = vpop.f32.mrb[0].mxu0
      %v2113 = vpop.f32.mrb[0].mxu0
      %v2114 = vadd.f32 %v1857, %v2113
      %v2115 = vpop.f32.mrb[0].mxu0
      %2116 = vmatprep.mubr.bf16.mxu0 0
      %2117 = vmatmul.mubr.bf16.gmra.mrb[0].mxu0 %v1924
      %v2118 = vpop.f32.mrb[0].mxu0
      %v2119 = vadd.f32 %v1857, %v2118
      %v2120 = vpop.f32.mrb[0].mxu0
      %v2121 = vpop.f32.mrb[0].mxu0
      %v2122 = vadd.f32 %v1857, %v2121
      %v2123 = vpop.f32.mrb[0].mxu0
      %2124 = vmatprep.mubr.bf16.mxu0 0
      %2125 = vmatmul.mubr.bf16.gmra.mrb[0].mxu0 %v1927
      %v2126 = vpop.f32.mrb[0].mxu0
      %v2127 = vadd.f32 %v1857, %v2126
      %v2128 = vpop.f32.mrb[0].mxu0
      %v2129 = vpop.f32.mrb[0].mxu0
      %v2130 = vadd.f32 %v1857, %v2129
      %v2131 = vpop.f32.mrb[0].mxu0
      %2132 = vmatprep.mubr.bf16.mxu0 0
      %2133 = vmatmul.mubr.bf16.gmra.mrb[0].mxu0 %v1930
      %v2134 = vpop.f32.mrb[0].mxu0
      %v2135 = vadd.f32 %v1857, %v2134
      %v2136 = vpop.f32.mrb[0].mxu0
      %v2137 = vpop.f32.mrb[0].mxu0
      %v2138 = vadd.f32 %v1857, %v2137
      %v2139 = vpop.f32.mrb[0].mxu0
      %2140 = vmatprep.mubr.bf16.mxu0 0
      %2141 = vmatmul.mubr.bf16.gmra.mrb[0].mxu0 %v1933
      %v2142 = vpop.f32.mrb[0].mxu0
      %v2143 = vadd.f32 %v1857, %v2142
      %v2144 = vpop.f32.mrb[0].mxu0
      %v2145 = vpop.f32.mrb[0].mxu0
      %v2146 = vadd.f32 %v1857, %v2145
      %v2147 = vpop.f32.mrb[0].mxu0
      %2148 = vmatprep.mubr.bf16.mxu0 0
      %2149 = vmatmul.mubr.bf16.gmra.mrb[0].mxu0 %v1936
      %v2150 = vpop.f32.mrb[0].mxu0
      %v2151 = vadd.f32 %v1857, %v2150
      %v2152 = vpop.f32.mrb[0].mxu0
      %v2153 = vpop.f32.mrb[0].mxu0
      %v2154 = vadd.f32 %v1857, %v2153
      %v2155 = vpop.f32.mrb[0].mxu0
      %2156 = vmatprep.mubr.bf16.mxu0 0
      %2157 = vmatmul.mubr.bf16.gmra.mrb[0].mxu0 %v1939
      %v2158 = vpop.f32.mrb[0].mxu0
      %v2159 = vadd.f32 %v1857, %v2158
      %v2160 = vpop.f32.mrb[0].mxu0
      %v2161 = vpop.f32.mrb[0].mxu0
      %v2162 = vadd.f32 %v1857, %v2161
      %v2163 = vpop.f32.mrb[0].mxu0
      %2164 = vmatprep.mubr.bf16.mxu0 0
      %2165 = vmatmul.mubr.bf16.gmra.mrb[0].mxu0 %v1942
      %v2166 = vpop.f32.mrb[0].mxu0
      %v2167 = vadd.f32 %v1857, %v2166
      %v2168 = vpop.f32.mrb[0].mxu0
      %v2169 = vpop.f32.mrb[0].mxu0
      %v2170 = vadd.f32 %v1857, %v2169
      %v2171 = vpop.f32.mrb[0].mxu0
      %2172 = vmatprep.mubr.bf16.mxu0 0
      %2173 = vmatmul.mubr.bf16.gmra.mrb[0].mxu0 %v1945
      %v2174 = vpop.f32.mrb[0].mxu0
      %v2175 = vadd.f32 %v1857, %v2174
      %v2176 = vpop.f32.mrb[0].mxu0
      %v2177 = vpop.f32.mrb[0].mxu0
      %v2178 = vadd.f32 %v1857, %v2177
      %v2179 = vpop.f32.mrb[0].mxu0
      %2180 = vmatprep.mubr.bf16.mxu0 0
      %2181 = vmatmul.mubr.bf16.gmra.mrb[0].mxu0 %v1948
      %v2182 = vpop.f32.mrb[0].mxu0
      %v2183 = vadd.f32 %v1857, %v2182
      %v2184 = vpop.f32.mrb[0].mxu0
      %v2185 = vpop.f32.mrb[0].mxu0
      %v2186 = vadd.f32 %v1857, %v2185
      %v2187 = vpop.f32.mrb[0].mxu0
      %2188 = vmatprep.mubr.bf16.mxu0 0
      %2189 = vmatmul.mubr.bf16.gmra.mrb[0].mxu0 %v1951
      %v2190 = vpop.f32.mrb[0].mxu0
      %v2191 = vadd.f32 %v1857, %v2190
      %v2192 = vpop.f32.mrb[0].mxu0
      %v2193 = vpop.f32.mrb[0].mxu0
      %v2194 = vadd.f32 %v1857, %v2193
      %v2195 = vpop.f32.mrb[0].mxu0
      %2196 = vmatprep.mubr.bf16.mxu0 0
      %2197 = vmatmul.mubr.bf16.gmra.mrb[0].mxu0 %v1954
      %v2198 = vpop.f32.mrb[0].mxu0
      %v2199 = vadd.f32 %v1857, %v2198
      %v2200 = vpop.f32.mrb[0].mxu0
      %v2201 = vpop.f32.mrb[0].mxu0
      %v2202 = vadd.f32 %v1857, %v2201
      %v2203 = vpop.f32.mrb[0].mxu0
      %2204 = vmatprep.mubr.bf16.mxu0 0
      %2205 = vmatmul.mubr.bf16.gmra.mrb[0].mxu0 %v1957
      %v2206 = vpop.f32.mrb[0].mxu0
      %v2207 = vadd.f32 %v1857, %v2206
      %v2208 = vpop.f32.mrb[0].mxu0
      %v2209 = vpop.f32.mrb[0].mxu0
      %v2210 = vadd.f32 %v1857, %v2209
      %v2211 = vpop.f32.mrb[0].mxu0
      %2212 = vmatprep.mubr.bf16.mxu0 0
      %2213 = vmatmul.mubr.bf16.gmra.mrb[0].mxu0 %v1960
      %v2214 = vpop.f32.mrb[0].mxu0
      %v2215 = vadd.f32 %v1857, %v2214
      %v2216 = vpop.f32.mrb[0].mxu0
      %v2217 = vpop.f32.mrb[0].mxu0
      %v2218 = vadd.f32 %v1857, %v2217
      %v2219 = vpop.f32.mrb[0].mxu0
      %2220 = vmatprep.mubr.bf16.mxu0 0
      %2221 = vmatmul.mubr.bf16.gmra.mrb[0].mxu0 %v1963
      %v2222 = vpop.f32.mrb[0].mxu0
      %v2223 = vadd.f32 %v1857, %v2222
      %v2224 = vpop.f32.mrb[0].mxu0
      %v2225 = vpop.f32.mrb[0].mxu0
      %v2226 = vadd.f32 %v1857, %v2225
      %v2227 = vpop.f32.mrb[0].mxu0
      %2228 = vmatprep.mubr.bf16.mxu0 0
      %2229 = vmatmul.mubr.bf16.gmra.mrb[0].mxu0 %v1966
      %v2230 = vpop.f32.mrb[0].mxu0
      %v2231 = vadd.f32 %v1857, %v2230
      %v2232 = vpop.f32.mrb[0].mxu0
      %v2233 = vpop.f32.mrb[0].mxu0
      %v2234 = vadd.f32 %v1857, %v2233
      %v2235 = vpop.f32.mrb[0].mxu0
      %2236 = vmatprep.mubr.bf16.mxu0 0
      %2237 = vmatmul.mubr.bf16.gmra.mrb[0].mxu0 %v1969
      %v2238 = vpop.f32.mrb[0].mxu0
      %v2239 = vadd.f32 %v1857, %v2238
      %v2240 = vpop.f32.mrb[0].mxu0
      %v2241 = vpop.f32.mrb[0].mxu0
      %v2242 = vadd.f32 %v1857, %v2241
      %v2243 = vpop.f32.mrb[0].mxu0
      %2244 = vmatprep.mubr.bf16.mxu0 0
      %2245 = vmatmul.mubr.bf16.gmra.mrb[0].mxu0 %v1972
      %v2246 = vpop.f32.mrb[0].mxu0
      %v2247 = vadd.f32 %v1857, %v2246
      %v2248 = vpop.f32.mrb[0].mxu0
      %v2249 = vpop.f32.mrb[0].mxu0
      %v2250 = vadd.f32 %v1857, %v2249
      %v2251 = vpop.f32.mrb[0].mxu0
      %2252 = vmatprep.mubr.bf16.mxu0 0
      %2253 = vmatmul.mubr.bf16.gmra.mrb[0].mxu0 %v1975
      %v2254 = vpop.f32.mrb[0].mxu0
      %v2255 = vadd.f32 %v1857, %v2254
      %v2256 = vpop.f32.mrb[0].mxu0
      %v2257 = vpop.f32.mrb[0].mxu0
      %v2258 = vadd.f32 %v1857, %v2257
      %v2259 = vpop.f32.mrb[0].mxu0
      %2260 = vmatprep.mubr.bf16.mxu0 0
      %2261 = vmatmul.mubr.bf16.gmra.mrb[0].mxu0 %v1978
      %v2262 = vpop.f32.mrb[0].mxu0
      %v2263 = vadd.f32 %v1857, %v2262
      %v2264 = vpop.f32.mrb[0].mxu0
      %v2265 = vpop.f32.mrb[0].mxu0
      %v2266 = vadd.f32 %v1857, %v2265
      %v2267 = vpop.f32.mrb[0].mxu0
      %2268 = vdwg.mxu0
      %v2269 = vmax.f32 %v2015, 0.0
      %v2270 = vmax.f32 %v2018, 0.0
      %v2271 = vmax.f32 %v2023, 0.0
      %v2272 = vmax.f32 %v2026, 0.0
      %v2273 = vmax.f32 %v2031, 0.0
      %v2274 = vmax.f32 %v2034, 0.0
      %v2275 = vmax.f32 %v2039, 0.0
      %v2276 = vmax.f32 %v2042, 0.0
      %v2277 = vmax.f32 %v2047, 0.0
      %v2278 = vmax.f32 %v2050, 0.0
      %v2279 = vmax.f32 %v2055, 0.0
      %v2280 = vmax.f32 %v2058, 0.0
      %v2281 = vmax.f32 %v2063, 0.0
      %v2282 = vmax.f32 %v2066, 0.0
      %v2283 = vmax.f32 %v2071, 0.0
      %v2284 = vmax.f32 %v2074, 0.0
      %v2285 = vmax.f32 %v2079, 0.0
      %v2286 = vmax.f32 %v2082, 0.0
      %v2287 = vmax.f32 %v2087, 0.0
      %v2288 = vmax.f32 %v2090, 0.0
      %v2289 = vmax.f32 %v2095, 0.0
      %v2290 = vmax.f32 %v2098, 0.0
      %v2291 = vmax.f32 %v2103, 0.0
      %v2292 = vmax.f32 %v2106, 0.0
      %v2293 = vmax.f32 %v2111, 0.0
      %v2294 = vmax.f32 %v2114, 0.0
      %v2295 = vmax.f32 %v2119, 0.0
      %v2296 = vmax.f32 %v2122, 0.0
      %v2297 = vmax.f32 %v2127, 0.0
      %v2298 = vmax.f32 %v2130, 0.0
      %v2299 = vmax.f32 %v2135, 0.0
      %v2300 = vmax.f32 %v2138, 0.0
      %v2301 = vmax.f32 %v2143, 0.0
      %v2302 = vmax.f32 %v2146, 0.0
      %v2303 = vmax.f32 %v2151, 0.0
      %v2304 = vmax.f32 %v2154, 0.0
      %v2305 = vmax.f32 %v2159, 0.0
      %v2306 = vmax.f32 %v2162, 0.0
      %v2307 = vmax.f32 %v2167, 0.0
      %v2308 = vmax.f32 %v2170, 0.0
      %v2309 = vmax.f32 %v2175, 0.0
      %v2310 = vmax.f32 %v2178, 0.0
      %v2311 = vmax.f32 %v2183, 0.0
      %v2312 = vmax.f32 %v2186, 0.0
      %v2313 = vmax.f32 %v2191, 0.0
      %v2314 = vmax.f32 %v2194, 0.0
      %v2315 = vmax.f32 %v2199, 0.0
      %v2316 = vmax.f32 %v2202, 0.0
      %v2317 = vmax.f32 %v2207, 0.0
      %v2318 = vmax.f32 %v2210, 0.0
      %v2319 = vmax.f32 %v2215, 0.0
      %v2320 = vmax.f32 %v2218, 0.0
      %v2321 = vmax.f32 %v2223, 0.0
      %v2322 = vmax.f32 %v2226, 0.0
      %v2323 = vmax.f32 %v2231, 0.0
      %v2324 = vmax.f32 %v2234, 0.0
      %v2325 = vmax.f32 %v2239, 0.0
      %v2326 = vmax.f32 %v2242, 0.0
      %v2327 = vmax.f32 %v2247, 0.0
      %v2328 = vmax.f32 %v2250, 0.0
      %v2329 = vmax.f32 %v2255, 0.0
      %v2330 = vmax.f32 %v2258, 0.0
      %v2331 = vmax.f32 %v2263, 0.0
      %v2332 = vmax.f32 %v2266, 0.0
      %v2333 = vpack.c.bf16 %v2270, %v2269
      %v2334 = vpack.c.bf16 %v2272, %v2271
      %v2335 = vpack.c.bf16 %v2274, %v2273
      %v2336 = vpack.c.bf16 %v2276, %v2275
      %v2337 = vpack.c.bf16 %v2278, %v2277
      %v2338 = vpack.c.bf16 %v2280, %v2279
      %v2339 = vpack.c.bf16 %v2282, %v2281
      %v2340 = vpack.c.bf16 %v2284, %v2283
      %v2341 = vpack.c.bf16 %v2286, %v2285
      %v2342 = vpack.c.bf16 %v2288, %v2287
      %v2343 = vpack.c.bf16 %v2290, %v2289
      %v2344 = vpack.c.bf16 %v2292, %v2291
      %v2345 = vpack.c.bf16 %v2294, %v2293
      %v2346 = vpack.c.bf16 %v2296, %v2295
      %v2347 = vpack.c.bf16 %v2298, %v2297
      %v2348 = vpack.c.bf16 %v2300, %v2299
      %v2349 = vpack.c.bf16 %v2302, %v2301
      %v2350 = vpack.c.bf16 %v2304, %v2303
      %v2351 = vpack.c.bf16 %v2306, %v2305
      %v2352 = vpack.c.bf16 %v2308, %v2307
      %v2353 = vpack.c.bf16 %v2310, %v2309
      %v2354 = vpack.c.bf16 %v2312, %v2311
      %v2355 = vpack.c.bf16 %v2314, %v2313
      %v2356 = vpack.c.bf16 %v2316, %v2315
      %v2357 = vpack.c.bf16 %v2318, %v2317
      %v2358 = vpack.c.bf16 %v2320, %v2319
      %v2359 = vpack.c.bf16 %v2322, %v2321
      %v2360 = vpack.c.bf16 %v2324, %v2323
      %v2361 = vpack.c.bf16 %v2326, %v2325
      %v2362 = vpack.c.bf16 %v2328, %v2327
      %v2363 = vpack.c.bf16 %v2330, %v2329
      %v2364 = vpack.c.bf16 %v2332, %v2331
      %v2365 = vld [vmem:[%s5] sm:$0xf]
      %v2366 = vld [vmem:[%s5 + $0x4] sm:$0xf]
      %v2367 = vld [vmem:[%s5 + $0x8] sm:$0xf]
      %v2368 = vld [vmem:[%s5 + $0xc] sm:$0xf]
      %v2369 = vld [vmem:[%s5 + $0x10] sm:$0xf]
      %v2370 = vld [vmem:[%s5 + $0x14] sm:$0xf]
      %v2371 = vld [vmem:[%s5 + $0x18] sm:$0xf]
      %v2372 = vld [vmem:[%s5 + $0x1c] sm:$0xf]
      %v2373 = vld [vmem:[%s5 + $0x20] sm:$0xf]
      %v2374 = vld [vmem:[%s5 + $0x24] sm:$0xf]
      %v2375 = vld [vmem:[%s5 + $0x28] sm:$0xf]
      %v2376 = vld [vmem:[%s5 + $0x2c] sm:$0xf]
      %v2377 = vld [vmem:[%s5 + $0x30] sm:$0xf]
      %v2378 = vld [vmem:[%s5 + $0x34] sm:$0xf]
      %v2379 = vld [vmem:[%s5 + $0x38] sm:$0xf]
      %v2380 = vld [vmem:[%s5 + $0x3c] sm:$0xf]
      %v2381 = vld [vmem:[%s6] sm:$0x1]
      %v2383 = vlaneseq
      %v2384 = vshrl.u32 %v2383, 7
      %v2385 = vsub.s32 0, %v2384
      %v2386 = vrot.slane %v2381, %v2385
      %v2404 = vunpack.c.l.b16 %v2365
      %v2405 = vunpack.c.l.b16 %v2366
      %v2406 = vunpack.c.l.b16 %v2367
      %v2407 = vunpack.c.l.b16 %v2368
      %v2408 = vunpack.c.l.b16 %v2369
      %v2409 = vunpack.c.l.b16 %v2370
      %v2410 = vunpack.c.l.b16 %v2371
      %v2411 = vunpack.c.l.b16 %v2372
      %v2412 = vunpack.c.l.b16 %v2373
      %v2413 = vunpack.c.l.b16 %v2374
      %v2414 = vunpack.c.l.b16 %v2375
      %v2415 = vunpack.c.l.b16 %v2376
      %v2416 = vunpack.c.l.b16 %v2377
      %v2417 = vunpack.c.l.b16 %v2378
      %v2418 = vunpack.c.l.b16 %v2379
      %v2419 = vunpack.c.l.b16 %v2380
      %v2420 = vpack.c.b16 %v2405, %v2404
      %v2421 = vpack.c.b16 %v2407, %v2406
      %v2422 = vpack.c.b16 %v2409, %v2408
      %v2423 = vpack.c.b16 %v2411, %v2410
      %v2424 = vpack.c.b16 %v2413, %v2412
      %v2425 = vpack.c.b16 %v2415, %v2414
      %v2426 = vpack.c.b16 %v2417, %v2416
      %v2427 = vpack.c.b16 %v2419, %v2418
      %2436 = vmatprep.subr.bf16.mxu0 0
      %2437 = vmatpush1.bf16.msra.mxu0 %v2420
      %2438 = vmatprep.subr.bf16.mxu0 0
      %2439 = vmatpush1.bf16.msra.mxu0 %v2421
      %2440 = vmatprep.subr.bf16.mxu0 0
      %2441 = vmatpush1.bf16.msra.mxu0 %v2422
      %2442 = vmatprep.subr.bf16.mxu0 0
      %2443 = vmatpush1.bf16.msra.mxu0 %v2423
      %2444 = vmatprep.subr.bf16.mxu0 0
      %2445 = vmatpush1.bf16.msra.mxu0 %v2424
      %2446 = vmatprep.subr.bf16.mxu0 0
      %2447 = vmatpush1.bf16.msra.mxu0 %v2425
      %2448 = vmatprep.subr.bf16.mxu0 0
      %2449 = vmatpush1.bf16.msra.mxu0 %v2426
      %2450 = vmatprep.subr.bf16.mxu0 0
      %2451 = vmatpush1.bf16.msra.mxu0 %v2427
      %2452 = vmatprep.subr.bf16.mxu0 0
      %2453 = vmatpush1.bf16.msra.mxu0 0
      %2454 = vmatprep.subr.bf16.mxu0 0
      %2455 = vmatpush1.bf16.msra.mxu0 0
      %2456 = vmatprep.subr.bf16.mxu0 0
      %2457 = vmatpush1.bf16.msra.mxu0 0
      %2458 = vmatprep.subr.bf16.mxu0 0
      %2459 = vmatpush1.bf16.msra.mxu0 0
      %2460 = vmatprep.subr.bf16.mxu0 0
      %2461 = vmatpush1.bf16.msra.mxu0 0
      %2462 = vmatprep.subr.bf16.mxu0 0
      %2463 = vmatpush1.bf16.msra.mxu0 0
      %2464 = vmatprep.subr.bf16.mxu0 0
      %2465 = vmatpush1.bf16.msra.mxu0 0
      %2466 = vmatprep.subr.bf16.mxu0 0
      %2467 = vmatpush1.bf16.msra.mxu0 0
      %2468 = vmatprep.mubr.bf16.mxu0 0
      %2469 = vmatmul.mubr.bf16.gmra.mrb[0].mxu0 %v2333
      %v2470 = vpop.f32.mrb[0].mxu0
      %v2471 = vadd.f32 %v2386, %v2470
      %v2472 = vpop.f32.mrb[0].mxu0
      %v2473 = vpop.f32.mrb[0].mxu0
      %v2474 = vadd.f32 %v2386, %v2473
      %v2475 = vpop.f32.mrb[0].mxu0
      %2476 = vmatprep.mubr.bf16.mxu0 0
      %2477 = vmatmul.mubr.bf16.gmra.mrb[0].mxu0 %v2334
      %v2478 = vpop.f32.mrb[0].mxu0
      %v2479 = vadd.f32 %v2386, %v2478
      %v2480 = vpop.f32.mrb[0].mxu0
      %v2481 = vpop.f32.mrb[0].mxu0
      %v2482 = vadd.f32 %v2386, %v2481
      %v2483 = vpop.f32.mrb[0].mxu0
      %2484 = vmatprep.mubr.bf16.mxu0 0
      %2485 = vmatmul.mubr.bf16.gmra.mrb[0].mxu0 %v2335
      %v2486 = vpop.f32.mrb[0].mxu0
      %v2487 = vadd.f32 %v2386, %v2486
      %v2488 = vpop.f32.mrb[0].mxu0
      %v2489 = vpop.f32.mrb[0].mxu0
      %v2490 = vadd.f32 %v2386, %v2489
      %v2491 = vpop.f32.mrb[0].mxu0
      %2492 = vmatprep.mubr.bf16.mxu0 0
      %2493 = vmatmul.mubr.bf16.gmra.mrb[0].mxu0 %v2336
      %v2494 = vpop.f32.mrb[0].mxu0
      %v2495 = vadd.f32 %v2386, %v2494
      %v2496 = vpop.f32.mrb[0].mxu0
      %v2497 = vpop.f32.mrb[0].mxu0
      %v2498 = vadd.f32 %v2386, %v2497
      %v2499 = vpop.f32.mrb[0].mxu0
      %2500 = vmatprep.mubr.bf16.mxu0 0
      %2501 = vmatmul.mubr.bf16.gmra.mrb[0].mxu0 %v2337
      %v2502 = vpop.f32.mrb[0].mxu0
      %v2503 = vadd.f32 %v2386, %v2502
      %v2504 = vpop.f32.mrb[0].mxu0
      %v2505 = vpop.f32.mrb[0].mxu0
      %v2506 = vadd.f32 %v2386, %v2505
      %v2507 = vpop.f32.mrb[0].mxu0
      %2508 = vmatprep.mubr.bf16.mxu0 0
      %2509 = vmatmul.mubr.bf16.gmra.mrb[0].mxu0 %v2338
      %v2510 = vpop.f32.mrb[0].mxu0
      %v2511 = vadd.f32 %v2386, %v2510
      %v2512 = vpop.f32.mrb[0].mxu0
      %v2513 = vpop.f32.mrb[0].mxu0
      %v2514 = vadd.f32 %v2386, %v2513
      %v2515 = vpop.f32.mrb[0].mxu0
      %2516 = vmatprep.mubr.bf16.mxu0 0
      %2517 = vmatmul.mubr.bf16.gmra.mrb[0].mxu0 %v2339
      %v2518 = vpop.f32.mrb[0].mxu0
      %v2519 = vadd.f32 %v2386, %v2518
      %v2520 = vpop.f32.mrb[0].mxu0
      %v2521 = vpop.f32.mrb[0].mxu0
      %v2522 = vadd.f32 %v2386, %v2521
      %v2523 = vpop.f32.mrb[0].mxu0
      %2524 = vmatprep.mubr.bf16.mxu0 0
      %2525 = vmatmul.mubr.bf16.gmra.mrb[0].mxu0 %v2340
      %v2526 = vpop.f32.mrb[0].mxu0
      %v2527 = vadd.f32 %v2386, %v2526
      %v2528 = vpop.f32.mrb[0].mxu0
      %v2529 = vpop.f32.mrb[0].mxu0
      %v2530 = vadd.f32 %v2386, %v2529
      %v2531 = vpop.f32.mrb[0].mxu0
      %2532 = vmatprep.mubr.bf16.mxu0 0
      %2533 = vmatmul.mubr.bf16.gmra.mrb[0].mxu0 %v2341
      %v2534 = vpop.f32.mrb[0].mxu0
      %v2535 = vadd.f32 %v2386, %v2534
      %v2536 = vpop.f32.mrb[0].mxu0
      %v2537 = vpop.f32.mrb[0].mxu0
      %v2538 = vadd.f32 %v2386, %v2537
      %v2539 = vpop.f32.mrb[0].mxu0
      %2540 = vmatprep.mubr.bf16.mxu0 0
      %2541 = vmatmul.mubr.bf16.gmra.mrb[0].mxu0 %v2342
      %v2542 = vpop.f32.mrb[0].mxu0
      %v2543 = vadd.f32 %v2386, %v2542
      %v2544 = vpop.f32.mrb[0].mxu0
      %v2545 = vpop.f32.mrb[0].mxu0
      %v2546 = vadd.f32 %v2386, %v2545
      %v2547 = vpop.f32.mrb[0].mxu0
      %2548 = vmatprep.mubr.bf16.mxu0 0
      %2549 = vmatmul.mubr.bf16.gmra.mrb[0].mxu0 %v2343
      %v2550 = vpop.f32.mrb[0].mxu0
      %v2551 = vadd.f32 %v2386, %v2550
      %v2552 = vpop.f32.mrb[0].mxu0
      %v2553 = vpop.f32.mrb[0].mxu0
      %v2554 = vadd.f32 %v2386, %v2553
      %v2555 = vpop.f32.mrb[0].mxu0
      %2556 = vmatprep.mubr.bf16.mxu0 0
      %2557 = vmatmul.mubr.bf16.gmra.mrb[0].mxu0 %v2344
      %v2558 = vpop.f32.mrb[0].mxu0
      %v2559 = vadd.f32 %v2386, %v2558
      %v2560 = vpop.f32.mrb[0].mxu0
      %v2561 = vpop.f32.mrb[0].mxu0
      %v2562 = vadd.f32 %v2386, %v2561
      %v2563 = vpop.f32.mrb[0].mxu0
      %2564 = vmatprep.mubr.bf16.mxu0 0
      %2565 = vmatmul.mubr.bf16.gmra.mrb[0].mxu0 %v2345
      %v2566 = vpop.f32.mrb[0].mxu0
      %v2567 = vadd.f32 %v2386, %v2566
      %v2568 = vpop.f32.mrb[0].mxu0
      %v2569 = vpop.f32.mrb[0].mxu0
      %v2570 = vadd.f32 %v2386, %v2569
      %v2571 = vpop.f32.mrb[0].mxu0
      %2572 = vmatprep.mubr.bf16.mxu0 0
      %2573 = vmatmul.mubr.bf16.gmra.mrb[0].mxu0 %v2346
      %v2574 = vpop.f32.mrb[0].mxu0
      %v2575 = vadd.f32 %v2386, %v2574
      %v2576 = vpop.f32.mrb[0].mxu0
      %v2577 = vpop.f32.mrb[0].mxu0
      %v2578 = vadd.f32 %v2386, %v2577
      %v2579 = vpop.f32.mrb[0].mxu0
      %2580 = vmatprep.mubr.bf16.mxu0 0
      %2581 = vmatmul.mubr.bf16.gmra.mrb[0].mxu0 %v2347
      %v2582 = vpop.f32.mrb[0].mxu0
      %v2583 = vadd.f32 %v2386, %v2582
      %v2584 = vpop.f32.mrb[0].mxu0
      %v2585 = vpop.f32.mrb[0].mxu0
      %v2586 = vadd.f32 %v2386, %v2585
      %v2587 = vpop.f32.mrb[0].mxu0
      %2588 = vmatprep.mubr.bf16.mxu0 0
      %2589 = vmatmul.mubr.bf16.gmra.mrb[0].mxu0 %v2348
      %v2590 = vpop.f32.mrb[0].mxu0
      %v2591 = vadd.f32 %v2386, %v2590
      %v2592 = vpop.f32.mrb[0].mxu0
      %v2593 = vpop.f32.mrb[0].mxu0
      %v2594 = vadd.f32 %v2386, %v2593
      %v2595 = vpop.f32.mrb[0].mxu0
      %2596 = vmatprep.mubr.bf16.mxu0 0
      %2597 = vmatmul.mubr.bf16.gmra.mrb[0].mxu0 %v2349
      %v2598 = vpop.f32.mrb[0].mxu0
      %v2599 = vadd.f32 %v2386, %v2598
      %v2600 = vpop.f32.mrb[0].mxu0
      %v2601 = vpop.f32.mrb[0].mxu0
      %v2602 = vadd.f32 %v2386, %v2601
      %v2603 = vpop.f32.mrb[0].mxu0
      %2604 = vmatprep.mubr.bf16.mxu0 0
      %2605 = vmatmul.mubr.bf16.gmra.mrb[0].mxu0 %v2350
      %v2606 = vpop.f32.mrb[0].mxu0
      %v2607 = vadd.f32 %v2386, %v2606
      %v2608 = vpop.f32.mrb[0].mxu0
      %v2609 = vpop.f32.mrb[0].mxu0
      %v2610 = vadd.f32 %v2386, %v2609
      %v2611 = vpop.f32.mrb[0].mxu0
      %2612 = vmatprep.mubr.bf16.mxu0 0
      %2613 = vmatmul.mubr.bf16.gmra.mrb[0].mxu0 %v2351
      %v2614 = vpop.f32.mrb[0].mxu0
      %v2615 = vadd.f32 %v2386, %v2614
      %v2616 = vpop.f32.mrb[0].mxu0
      %v2617 = vpop.f32.mrb[0].mxu0
      %v2618 = vadd.f32 %v2386, %v2617
      %v2619 = vpop.f32.mrb[0].mxu0
      %2620 = vmatprep.mubr.bf16.mxu0 0
      %2621 = vmatmul.mubr.bf16.gmra.mrb[0].mxu0 %v2352
      %v2622 = vpop.f32.mrb[0].mxu0
      %v2623 = vadd.f32 %v2386, %v2622
      %v2624 = vpop.f32.mrb[0].mxu0
      %v2625 = vpop.f32.mrb[0].mxu0
      %v2626 = vadd.f32 %v2386, %v2625
      %v2627 = vpop.f32.mrb[0].mxu0
      %2628 = vmatprep.mubr.bf16.mxu0 0
      %2629 = vmatmul.mubr.bf16.gmra.mrb[0].mxu0 %v2353
      %v2630 = vpop.f32.mrb[0].mxu0
      %v2631 = vadd.f32 %v2386, %v2630
      %v2632 = vpop.f32.mrb[0].mxu0
      %v2633 = vpop.f32.mrb[0].mxu0
      %v2634 = vadd.f32 %v2386, %v2633
      %v2635 = vpop.f32.mrb[0].mxu0
      %2636 = vmatprep.mubr.bf16.mxu0 0
      %2637 = vmatmul.mubr.bf16.gmra.mrb[0].mxu0 %v2354
      %v2638 = vpop.f32.mrb[0].mxu0
      %v2639 = vadd.f32 %v2386, %v2638
      %v2640 = vpop.f32.mrb[0].mxu0
      %v2641 = vpop.f32.mrb[0].mxu0
      %v2642 = vadd.f32 %v2386, %v2641
      %v2643 = vpop.f32.mrb[0].mxu0
      %2644 = vmatprep.mubr.bf16.mxu0 0
      %2645 = vmatmul.mubr.bf16.gmra.mrb[0].mxu0 %v2355
      %v2646 = vpop.f32.mrb[0].mxu0
      %v2647 = vadd.f32 %v2386, %v2646
      %v2648 = vpop.f32.mrb[0].mxu0
      %v2649 = vpop.f32.mrb[0].mxu0
      %v2650 = vadd.f32 %v2386, %v2649
      %v2651 = vpop.f32.mrb[0].mxu0
      %2652 = vmatprep.mubr.bf16.mxu0 0
      %2653 = vmatmul.mubr.bf16.gmra.mrb[0].mxu0 %v2356
      %v2654 = vpop.f32.mrb[0].mxu0
      %v2655 = vadd.f32 %v2386, %v2654
      %v2656 = vpop.f32.mrb[0].mxu0
      %v2657 = vpop.f32.mrb[0].mxu0
      %v2658 = vadd.f32 %v2386, %v2657
      %v2659 = vpop.f32.mrb[0].mxu0
      %2660 = vmatprep.mubr.bf16.mxu0 0
      %2661 = vmatmul.mubr.bf16.gmra.mrb[0].mxu0 %v2357
      %v2662 = vpop.f32.mrb[0].mxu0
      %v2663 = vadd.f32 %v2386, %v2662
      %v2664 = vpop.f32.mrb[0].mxu0
      %v2665 = vpop.f32.mrb[0].mxu0
      %v2666 = vadd.f32 %v2386, %v2665
      %v2667 = vpop.f32.mrb[0].mxu0
      %2668 = vmatprep.mubr.bf16.mxu0 0
      %2669 = vmatmul.mubr.bf16.gmra.mrb[0].mxu0 %v2358
      %v2670 = vpop.f32.mrb[0].mxu0
      %v2671 = vadd.f32 %v2386, %v2670
      %v2672 = vpop.f32.mrb[0].mxu0
      %v2673 = vpop.f32.mrb[0].mxu0
      %v2674 = vadd.f32 %v2386, %v2673
      %v2675 = vpop.f32.mrb[0].mxu0
      %2676 = vmatprep.mubr.bf16.mxu0 0
      %2677 = vmatmul.mubr.bf16.gmra.mrb[0].mxu0 %v2359
      %v2678 = vpop.f32.mrb[0].mxu0
      %v2679 = vadd.f32 %v2386, %v2678
      %v2680 = vpop.f32.mrb[0].mxu0
      %v2681 = vpop.f32.mrb[0].mxu0
      %v2682 = vadd.f32 %v2386, %v2681
      %v2683 = vpop.f32.mrb[0].mxu0
      %2684 = vmatprep.mubr.bf16.mxu0 0
      %2685 = vmatmul.mubr.bf16.gmra.mrb[0].mxu0 %v2360
      %v2686 = vpop.f32.mrb[0].mxu0
      %v2687 = vadd.f32 %v2386, %v2686
      %v2688 = vpop.f32.mrb[0].mxu0
      %v2689 = vpop.f32.mrb[0].mxu0
      %v2690 = vadd.f32 %v2386, %v2689
      %v2691 = vpop.f32.mrb[0].mxu0
      %2692 = vmatprep.mubr.bf16.mxu0 0
      %2693 = vmatmul.mubr.bf16.gmra.mrb[0].mxu0 %v2361
      %v2694 = vpop.f32.mrb[0].mxu0
      %v2695 = vadd.f32 %v2386, %v2694
      %v2696 = vpop.f32.mrb[0].mxu0
      %v2697 = vpop.f32.mrb[0].mxu0
      %v2698 = vadd.f32 %v2386, %v2697
      %v2699 = vpop.f32.mrb[0].mxu0
      %2700 = vmatprep.mubr.bf16.mxu0 0
      %2701 = vmatmul.mubr.bf16.gmra.mrb[0].mxu0 %v2362
      %v2702 = vpop.f32.mrb[0].mxu0
      %v2703 = vadd.f32 %v2386, %v2702
      %v2704 = vpop.f32.mrb[0].mxu0
      %v2705 = vpop.f32.mrb[0].mxu0
      %v2706 = vadd.f32 %v2386, %v2705
      %v2707 = vpop.f32.mrb[0].mxu0
      %2708 = vmatprep.mubr.bf16.mxu0 0
      %2709 = vmatmul.mubr.bf16.gmra.mrb[0].mxu0 %v2363
      %v2710 = vpop.f32.mrb[0].mxu0
      %v2711 = vadd.f32 %v2386, %v2710
      %v2712 = vpop.f32.mrb[0].mxu0
      %v2713 = vpop.f32.mrb[0].mxu0
      %v2714 = vadd.f32 %v2386, %v2713
      %v2715 = vpop.f32.mrb[0].mxu0
      %2716 = vmatprep.mubr.bf16.mxu0 0
      %2717 = vmatmul.mubr.bf16.gmra.mrb[0].mxu0 %v2364
      %v2718 = vpop.f32.mrb[0].mxu0
      %v2719 = vadd.f32 %v2386, %v2718
      %v2720 = vpop.f32.mrb[0].mxu0
      %v2721 = vpop.f32.mrb[0].mxu0
      %v2722 = vadd.f32 %v2386, %v2721
      %v2723 = vpop.f32.mrb[0].mxu0
      %2724 = vdwg.mxu0
      %v2725 = vmax.f32 %v2471, %v2474
      %v2726 = vmax.f32 %v2725, %v2479
      %v2727 = vmax.f32 %v2726, %v2482
      %v2728 = vmax.f32 %v2727, %v2487
      %v2729 = vmax.f32 %v2728, %v2490
      %v2730 = vmax.f32 %v2729, %v2495
      %v2731 = vmax.f32 %v2730, %v2498
      %v2732 = vmax.f32 %v2731, %v2503
      %v2733 = vmax.f32 %v2732, %v2506
      %v2734 = vmax.f32 %v2733, %v2511
      %v2735 = vmax.f32 %v2734, %v2514
      %v2736 = vmax.f32 %v2735, %v2519
      %v2737 = vmax.f32 %v2736, %v2522
      %v2738 = vmax.f32 %v2737, %v2527
      %v2739 = vmax.f32 %v2738, %v2530
      %v2740 = vrot.slane %v2739, 4
      %v2741 = vmax.f32 %v2739, %v2740
      %v2742 = vrot.slane %v2741, 2
      %v2743 = vmax.f32 %v2741, %v2742
      %v2744 = vrot.slane %v2743, 1
      %v2745 = vmax.f32 %v2743, %v2744
      %v2746 = vmax.f32 %v2535, %v2538
      %v2747 = vmax.f32 %v2746, %v2543
      %v2748 = vmax.f32 %v2747, %v2546
      %v2749 = vmax.f32 %v2748, %v2551
      %v2750 = vmax.f32 %v2749, %v2554
      %v2751 = vmax.f32 %v2750, %v2559
      %v2752 = vmax.f32 %v2751, %v2562
      %v2753 = vmax.f32 %v2752, %v2567
      %v2754 = vmax.f32 %v2753, %v2570
      %v2755 = vmax.f32 %v2754, %v2575
      %v2756 = vmax.f32 %v2755, %v2578
      %v2757 = vmax.f32 %v2756, %v2583
      %v2758 = vmax.f32 %v2757, %v2586
      %v2759 = vmax.f32 %v2758, %v2591
      %v2760 = vmax.f32 %v2759, %v2594
      %v2761 = vrot.slane %v2760, 4
      %v2762 = vmax.f32 %v2760, %v2761
      %v2763 = vrot.slane %v2762, 2
      %v2764 = vmax.f32 %v2762, %v2763
      %v2765 = vrot.slane %v2764, 1
      %v2766 = vmax.f32 %v2764, %v2765
      %v2767 = vmax.f32 %v2599, %v2602
      %v2768 = vmax.f32 %v2767, %v2607
      %v2769 = vmax.f32 %v2768, %v2610
      %v2770 = vmax.f32 %v2769, %v2615
      %v2771 = vmax.f32 %v2770, %v2618
      %v2772 = vmax.f32 %v2771, %v2623
      %v2773 = vmax.f32 %v2772, %v2626
      %v2774 = vmax.f32 %v2773, %v2631
      %v2775 = vmax.f32 %v2774, %v2634
      %v2776 = vmax.f32 %v2775, %v2639
      %v2777 = vmax.f32 %v2776, %v2642
      %v2778 = vmax.f32 %v2777, %v2647
      %v2779 = vmax.f32 %v2778, %v2650
      %v2780 = vmax.f32 %v2779, %v2655
      %v2781 = vmax.f32 %v2780, %v2658
      %v2782 = vrot.slane %v2781, 4
      %v2783 = vmax.f32 %v2781, %v2782
      %v2784 = vrot.slane %v2783, 2
      %v2785 = vmax.f32 %v2783, %v2784
      %v2786 = vrot.slane %v2785, 1
      %v2787 = vmax.f32 %v2785, %v2786
      %v2788 = vmax.f32 %v2663, %v2666
      %v2789 = vmax.f32 %v2788, %v2671
      %v2790 = vmax.f32 %v2789, %v2674
      %v2791 = vmax.f32 %v2790, %v2679
      %v2792 = vmax.f32 %v2791, %v2682
      %v2793 = vmax.f32 %v2792, %v2687
      %v2794 = vmax.f32 %v2793, %v2690
      %v2795 = vmax.f32 %v2794, %v2695
      %v2796 = vmax.f32 %v2795, %v2698
      %v2797 = vmax.f32 %v2796, %v2703
      %v2798 = vmax.f32 %v2797, %v2706
      %v2799 = vmax.f32 %v2798, %v2711
      %v2800 = vmax.f32 %v2799, %v2714
      %v2801 = vmax.f32 %v2800, %v2719
      %v2802 = vmax.f32 %v2801, %v2722
      %v2803 = vrot.slane %v2802, 4
      %v2804 = vmax.f32 %v2802, %v2803
      %v2805 = vrot.slane %v2804, 2
      %v2806 = vmax.f32 %v2804, %v2805
      %v2807 = vrot.slane %v2806, 1
      %v2808 = vmax.f32 %v2806, %v2807
      %v2809 = vpack.c.bf16 %v2745, %v2745
      %v2810 = vpack.c.bf16 %v2766, %v2766
      %v2811 = vpack.c.bf16 %v2787, %v2787
      %v2812 = vpack.c.bf16 %v2808, %v2808
      %v2813 = vld [vmem:[%s9] sm:$0xf]
      %v2814 = vld [vmem:[%s9 + $0x4] sm:$0xf]
      %v2815 = vld [vmem:[%s9 + $0x8] sm:$0xf]
      %v2816 = vld [vmem:[%s9 + $0xc] sm:$0xf]
      %v2817 = vld [vmem:[%s9 + $0x10] sm:$0xf]
      %v2818 = vld [vmem:[%s9 + $0x14] sm:$0xf]
      %v2819 = vld [vmem:[%s9 + $0x18] sm:$0xf]
      %v2820 = vld [vmem:[%s9 + $0x1c] sm:$0xf]
      %v2821 = vld [vmem:[%s9 + $0x20] sm:$0xf]
      %v2822 = vld [vmem:[%s9 + $0x24] sm:$0xf]
      %v2823 = vld [vmem:[%s9 + $0x28] sm:$0xf]
      %v2824 = vld [vmem:[%s9 + $0x2c] sm:$0xf]
      %v2825 = vld [vmem:[%s9 + $0x30] sm:$0xf]
      %v2826 = vld [vmem:[%s9 + $0x34] sm:$0xf]
      %v2827 = vld [vmem:[%s9 + $0x38] sm:$0xf]
      %v2828 = vld [vmem:[%s9 + $0x3c] sm:$0xf]
      %v2833 = vunpack.c.l.b16 %v2809
      %v2834 = vunpack.c.l.b16 %v2810
      %v2835 = vunpack.c.l.b16 %v2811
      %v2836 = vunpack.c.l.b16 %v2812
      %vm2837 = vcmask 1041409
      %v2838 = vsel %vm2837, %v2834, %v2833
      %vm2839 = vcmask 1042434
      %v2840 = vsel %vm2839, %v2835, %v2838
      %vm2841 = vcmask 1043459
      %v2842 = vsel %vm2841, %v2836, %v2840
      %v2843 = vpack.c.b16 %v2842, %v2842
      %v2861 = vunpack.c.l.b16 %v2813
      %v2862 = vunpack.c.l.b16 %v2814
      %v2863 = vunpack.c.l.b16 %v2815
      %v2864 = vunpack.c.l.b16 %v2816
      %v2865 = vunpack.c.l.b16 %v2817
      %v2866 = vunpack.c.l.b16 %v2818
      %v2867 = vunpack.c.l.b16 %v2819
      %v2868 = vunpack.c.l.b16 %v2820
      %v2869 = vunpack.c.l.b16 %v2821
      %v2870 = vunpack.c.l.b16 %v2822
      %v2871 = vunpack.c.l.b16 %v2823
      %v2872 = vunpack.c.l.b16 %v2824
      %v2873 = vunpack.c.l.b16 %v2825
      %v2874 = vunpack.c.l.b16 %v2826
      %v2875 = vunpack.c.l.b16 %v2827
      %v2876 = vunpack.c.l.b16 %v2828
      %v2877 = vpack.c.b16 %v2862, %v2861
      %v2878 = vpack.c.b16 %v2864, %v2863
      %v2879 = vpack.c.b16 %v2866, %v2865
      %v2880 = vpack.c.b16 %v2868, %v2867
      %v2881 = vpack.c.b16 %v2870, %v2869
      %v2882 = vpack.c.b16 %v2872, %v2871
      %v2883 = vpack.c.b16 %v2874, %v2873
      %v2884 = vpack.c.b16 %v2876, %v2875
      %2893 = vmatprep.subr.bf16.mxu0 0
      %2894 = vmatpush1.bf16.msra.mxu0 %v2877
      %2895 = vmatprep.subr.bf16.mxu0 0
      %2896 = vmatpush1.bf16.msra.mxu0 %v2878
      %2897 = vmatprep.subr.bf16.mxu0 0
      %2898 = vmatpush1.bf16.msra.mxu0 %v2879
      %2899 = vmatprep.subr.bf16.mxu0 0
      %2900 = vmatpush1.bf16.msra.mxu0 %v2880
      %2901 = vmatprep.subr.bf16.mxu0 0
      %2902 = vmatpush1.bf16.msra.mxu0 %v2881
      %2903 = vmatprep.subr.bf16.mxu0 0
      %2904 = vmatpush1.bf16.msra.mxu0 %v2882
      %2905 = vmatprep.subr.bf16.mxu0 0
      %2906 = vmatpush1.bf16.msra.mxu0 %v2883
      %2907 = vmatprep.subr.bf16.mxu0 0
      %2908 = vmatpush1.bf16.msra.mxu0 %v2884
      %2909 = vmatprep.subr.bf16.mxu0 0
      %2910 = vmatpush1.bf16.msra.mxu0 0
      %2911 = vmatprep.subr.bf16.mxu0 0
      %2912 = vmatpush1.bf16.msra.mxu0 0
      %2913 = vmatprep.subr.bf16.mxu0 0
      %2914 = vmatpush1.bf16.msra.mxu0 0
      %2915 = vmatprep.subr.bf16.mxu0 0
      %2916 = vmatpush1.bf16.msra.mxu0 0
      %2917 = vmatprep.subr.bf16.mxu0 0
      %2918 = vmatpush1.bf16.msra.mxu0 0
      %2919 = vmatprep.subr.bf16.mxu0 0
      %2920 = vmatpush1.bf16.msra.mxu0 0
      %2921 = vmatprep.subr.bf16.mxu0 0
      %2922 = vmatpush1.bf16.msra.mxu0 0
      %2923 = vmatprep.subr.bf16.mxu0 0
      %2924 = vmatpush1.bf16.msra.mxu0 0
      %2925 = vmatprep.mubr.bf16.mxu0 0
      %2926 = vmatmul.mubr.bf16.gmra.mrb[0].mxu0 %v2843
      %v2927 = vpop.f32.mrb[0].mxu0
      %v2928 = vadd.f32 0.0, %v2927
      %v2929 = vpop.f32.mrb[0].mxu0
      %v2930 = vpop.f32.mrb[0].mxu0
      %v2931 = vpop.f32.mrb[0].mxu0
      %2932 = vdwg.mxu0
      %v2933 = vld [vmem:[%s7] sm:$0xf]
      %v2934 = vld [vmem:[%s7 + $0x4] sm:$0xf]
      %v2935 = vld [vmem:[%s7 + $0x8] sm:$0xf]
      %v2936 = vld [vmem:[%s7 + $0xc] sm:$0xf]
      %v2937 = vld [vmem:[%s7 + $0x10] sm:$0xf]
      %v2938 = vld [vmem:[%s7 + $0x14] sm:$0xf]
      %v2939 = vld [vmem:[%s7 + $0x18] sm:$0xf]
      %v2940 = vld [vmem:[%s7 + $0x1c] sm:$0xf]
      %v2941 = vld [vmem:[%s8] sm:$0xf]
      %v2942 = vld [vmem:[%s8 + $0x4] sm:$0xf]
      %v2943 = vld [vmem:[%s8 + $0x8] sm:$0xf]
      %v2944 = vld [vmem:[%s8 + $0xc] sm:$0xf]
      %v2945 = vld [vmem:[%s8 + $0x10] sm:$0xf]
      %v2946 = vld [vmem:[%s8 + $0x14] sm:$0xf]
      %v2947 = vld [vmem:[%s8 + $0x18] sm:$0xf]
      %v2948 = vld [vmem:[%s8 + $0x1c] sm:$0xf]
      %v2949 = vld [vmem:[%s8 + $0x20] sm:$0xf]
      %v2950 = vld [vmem:[%s8 + $0x24] sm:$0xf]
      %v2951 = vld [vmem:[%s8 + $0x28] sm:$0xf]
      %v2952 = vld [vmem:[%s8 + $0x2c] sm:$0xf]
      %v2953 = vld [vmem:[%s8 + $0x30] sm:$0xf]
      %v2954 = vld [vmem:[%s8 + $0x34] sm:$0xf]
      %v2955 = vld [vmem:[%s8 + $0x38] sm:$0xf]
      %v2956 = vld [vmem:[%s8 + $0x3c] sm:$0xf]
      %v2973 = vunpack.c.l.b16 %v2941
      %v2974 = vunpack.c.l.b16 %v2942
      %v2975 = vunpack.c.l.b16 %v2943
      %v2976 = vunpack.c.l.b16 %v2944
      %v2977 = vunpack.c.l.b16 %v2945
      %v2978 = vunpack.c.l.b16 %v2946
      %v2979 = vunpack.c.l.b16 %v2947
      %v2980 = vunpack.c.l.b16 %v2948
      %v2981 = vunpack.c.l.b16 %v2949
      %v2982 = vunpack.c.l.b16 %v2950
      %v2983 = vunpack.c.l.b16 %v2951
      %v2984 = vunpack.c.l.b16 %v2952
      %v2985 = vunpack.c.l.b16 %v2953
      %v2986 = vunpack.c.l.b16 %v2954
      %v2987 = vunpack.c.l.b16 %v2955
      %v2988 = vunpack.c.l.b16 %v2956
      %v2989 = vpack.c.b16 %v2974, %v2973
      %v2990 = vpack.c.b16 %v2976, %v2975
      %v2991 = vpack.c.b16 %v2978, %v2977
      %v2992 = vpack.c.b16 %v2980, %v2979
      %v2993 = vpack.c.b16 %v2982, %v2981
      %v2994 = vpack.c.b16 %v2984, %v2983
      %v2995 = vpack.c.b16 %v2986, %v2985
      %v2996 = vpack.c.b16 %v2988, %v2987
      %3005 = vmatprep.subr.bf16.mxu0 0
      %3006 = vmatpush1.bf16.msra.mxu0 %v2989
      %3007 = vmatprep.subr.bf16.mxu0 0
      %3008 = vmatpush1.bf16.msra.mxu0 %v2990
      %3009 = vmatprep.subr.bf16.mxu0 0
      %3010 = vmatpush1.bf16.msra.mxu0 %v2991
      %3011 = vmatprep.subr.bf16.mxu0 0
      %3012 = vmatpush1.bf16.msra.mxu0 %v2992
      %3013 = vmatprep.subr.bf16.mxu0 0
      %3014 = vmatpush1.bf16.msra.mxu0 %v2993
      %3015 = vmatprep.subr.bf16.mxu0 0
      %3016 = vmatpush1.bf16.msra.mxu0 %v2994
      %3017 = vmatprep.subr.bf16.mxu0 0
      %3018 = vmatpush1.bf16.msra.mxu0 %v2995
      %3019 = vmatprep.subr.bf16.mxu0 0
      %3020 = vmatpush1.bf16.msra.mxu0 %v2996
      %3021 = vmatprep.subr.bf16.mxu0 0
      %3022 = vmatpush1.bf16.msra.mxu0 0
      %3023 = vmatprep.subr.bf16.mxu0 0
      %3024 = vmatpush1.bf16.msra.mxu0 0
      %3025 = vmatprep.subr.bf16.mxu0 0
      %3026 = vmatpush1.bf16.msra.mxu0 0
      %3027 = vmatprep.subr.bf16.mxu0 0
      %3028 = vmatpush1.bf16.msra.mxu0 0
      %3029 = vmatprep.subr.bf16.mxu0 0
      %3030 = vmatpush1.bf16.msra.mxu0 0
      %3031 = vmatprep.subr.bf16.mxu0 0
      %3032 = vmatpush1.bf16.msra.mxu0 0
      %3033 = vmatprep.subr.bf16.mxu0 0
      %3034 = vmatpush1.bf16.msra.mxu0 0
      %3035 = vmatprep.subr.bf16.mxu0 0
      %3036 = vmatpush1.bf16.msra.mxu0 0
      %3037 = vmatprep.mubr.bf16.mxu0 0
      %3038 = vmatmul.mubr.bf16.gmra.mrb[0].mxu0 %v2333
      %v3039 = vpop.f32.mrb[0].mxu0
      %v3040 = vadd.f32 0.0, %v3039
      %v3041 = vpop.f32.mrb[0].mxu0
      %v3042 = vpop.f32.mrb[0].mxu0
      %v3043 = vadd.f32 0.0, %v3042
      %v3044 = vpop.f32.mrb[0].mxu0
      %3045 = vmatprep.mubr.bf16.mxu0 0
      %3046 = vmatmul.mubr.bf16.gmra.mrb[0].mxu0 %v2334
      %v3047 = vpop.f32.mrb[0].mxu0
      %v3048 = vadd.f32 0.0, %v3047
      %v3049 = vpop.f32.mrb[0].mxu0
      %v3050 = vpop.f32.mrb[0].mxu0
      %v3051 = vadd.f32 0.0, %v3050
      %v3052 = vpop.f32.mrb[0].mxu0
      %3053 = vmatprep.mubr.bf16.mxu0 0
      %3054 = vmatmul.mubr.bf16.gmra.mrb[0].mxu0 %v2335
      %v3055 = vpop.f32.mrb[0].mxu0
      %v3056 = vadd.f32 0.0, %v3055
      %v3057 = vpop.f32.mrb[0].mxu0
      %v3058 = vpop.f32.mrb[0].mxu0
      %v3059 = vadd.f32 0.0, %v3058
      %v3060 = vpop.f32.mrb[0].mxu0
      %3061 = vmatprep.mubr.bf16.mxu0 0
      %3062 = vmatmul.mubr.bf16.gmra.mrb[0].mxu0 %v2336
      %v3063 = vpop.f32.mrb[0].mxu0
      %v3064 = vadd.f32 0.0, %v3063
      %v3065 = vpop.f32.mrb[0].mxu0
      %v3066 = vpop.f32.mrb[0].mxu0
      %v3067 = vadd.f32 0.0, %v3066
      %v3068 = vpop.f32.mrb[0].mxu0
      %3069 = vmatprep.mubr.bf16.mxu0 0
      %3070 = vmatmul.mubr.bf16.gmra.mrb[0].mxu0 %v2337
      %v3071 = vpop.f32.mrb[0].mxu0
      %v3072 = vadd.f32 0.0, %v3071
      %v3073 = vpop.f32.mrb[0].mxu0
      %v3074 = vpop.f32.mrb[0].mxu0
      %v3075 = vadd.f32 0.0, %v3074
      %v3076 = vpop.f32.mrb[0].mxu0
      %3077 = vmatprep.mubr.bf16.mxu0 0
      %3078 = vmatmul.mubr.bf16.gmra.mrb[0].mxu0 %v2338
      %v3079 = vpop.f32.mrb[0].mxu0
      %v3080 = vadd.f32 0.0, %v3079
      %v3081 = vpop.f32.mrb[0].mxu0
      %v3082 = vpop.f32.mrb[0].mxu0
      %v3083 = vadd.f32 0.0, %v3082
      %v3084 = vpop.f32.mrb[0].mxu0
      %3085 = vmatprep.mubr.bf16.mxu0 0
      %3086 = vmatmul.mubr.bf16.gmra.mrb[0].mxu0 %v2339
      %v3087 = vpop.f32.mrb[0].mxu0
      %v3088 = vadd.f32 0.0, %v3087
      %v3089 = vpop.f32.mrb[0].mxu0
      %v3090 = vpop.f32.mrb[0].mxu0
      %v3091 = vadd.f32 0.0, %v3090
      %v3092 = vpop.f32.mrb[0].mxu0
      %3093 = vmatprep.mubr.bf16.mxu0 0
      %3094 = vmatmul.mubr.bf16.gmra.mrb[0].mxu0 %v2340
      %v3095 = vpop.f32.mrb[0].mxu0
      %v3096 = vadd.f32 0.0, %v3095
      %v3097 = vpop.f32.mrb[0].mxu0
      %v3098 = vpop.f32.mrb[0].mxu0
      %v3099 = vadd.f32 0.0, %v3098
      %v3100 = vpop.f32.mrb[0].mxu0
      %3101 = vmatprep.mubr.bf16.mxu0 0
      %3102 = vmatmul.mubr.bf16.gmra.mrb[0].mxu0 %v2341
      %v3103 = vpop.f32.mrb[0].mxu0
      %v3104 = vadd.f32 0.0, %v3103
      %v3105 = vpop.f32.mrb[0].mxu0
      %v3106 = vpop.f32.mrb[0].mxu0
      %v3107 = vadd.f32 0.0, %v3106
      %v3108 = vpop.f32.mrb[0].mxu0
      %3109 = vmatprep.mubr.bf16.mxu0 0
      %3110 = vmatmul.mubr.bf16.gmra.mrb[0].mxu0 %v2342
      %v3111 = vpop.f32.mrb[0].mxu0
      %v3112 = vadd.f32 0.0, %v3111
      %v3113 = vpop.f32.mrb[0].mxu0
      %v3114 = vpop.f32.mrb[0].mxu0
      %v3115 = vadd.f32 0.0, %v3114
      %v3116 = vpop.f32.mrb[0].mxu0
      %3117 = vmatprep.mubr.bf16.mxu0 0
      %3118 = vmatmul.mubr.bf16.gmra.mrb[0].mxu0 %v2343
      %v3119 = vpop.f32.mrb[0].mxu0
      %v3120 = vadd.f32 0.0, %v3119
      %v3121 = vpop.f32.mrb[0].mxu0
      %v3122 = vpop.f32.mrb[0].mxu0
      %v3123 = vadd.f32 0.0, %v3122
      %v3124 = vpop.f32.mrb[0].mxu0
      %3125 = vmatprep.mubr.bf16.mxu0 0
      %3126 = vmatmul.mubr.bf16.gmra.mrb[0].mxu0 %v2344
      %v3127 = vpop.f32.mrb[0].mxu0
      %v3128 = vadd.f32 0.0, %v3127
      %v3129 = vpop.f32.mrb[0].mxu0
      %v3130 = vpop.f32.mrb[0].mxu0
      %v3131 = vadd.f32 0.0, %v3130
      %v3132 = vpop.f32.mrb[0].mxu0
      %3133 = vmatprep.mubr.bf16.mxu0 0
      %3134 = vmatmul.mubr.bf16.gmra.mrb[0].mxu0 %v2345
      %v3135 = vpop.f32.mrb[0].mxu0
      %v3136 = vadd.f32 0.0, %v3135
      %v3137 = vpop.f32.mrb[0].mxu0
      %v3138 = vpop.f32.mrb[0].mxu0
      %v3139 = vadd.f32 0.0, %v3138
      %v3140 = vpop.f32.mrb[0].mxu0
      %3141 = vmatprep.mubr.bf16.mxu0 0
      %3142 = vmatmul.mubr.bf16.gmra.mrb[0].mxu0 %v2346
      %v3143 = vpop.f32.mrb[0].mxu0
      %v3144 = vadd.f32 0.0, %v3143
      %v3145 = vpop.f32.mrb[0].mxu0
      %v3146 = vpop.f32.mrb[0].mxu0
      %v3147 = vadd.f32 0.0, %v3146
      %v3148 = vpop.f32.mrb[0].mxu0
      %3149 = vmatprep.mubr.bf16.mxu0 0
      %3150 = vmatmul.mubr.bf16.gmra.mrb[0].mxu0 %v2347
      %v3151 = vpop.f32.mrb[0].mxu0
      %v3152 = vadd.f32 0.0, %v3151
      %v3153 = vpop.f32.mrb[0].mxu0
      %v3154 = vpop.f32.mrb[0].mxu0
      %v3155 = vadd.f32 0.0, %v3154
      %v3156 = vpop.f32.mrb[0].mxu0
      %3157 = vmatprep.mubr.bf16.mxu0 0
      %3158 = vmatmul.mubr.bf16.gmra.mrb[0].mxu0 %v2348
      %v3159 = vpop.f32.mrb[0].mxu0
      %v3160 = vadd.f32 0.0, %v3159
      %v3161 = vpop.f32.mrb[0].mxu0
      %v3162 = vpop.f32.mrb[0].mxu0
      %v3163 = vadd.f32 0.0, %v3162
      %v3164 = vpop.f32.mrb[0].mxu0
      %3165 = vmatprep.mubr.bf16.mxu0 0
      %3166 = vmatmul.mubr.bf16.gmra.mrb[0].mxu0 %v2349
      %v3167 = vpop.f32.mrb[0].mxu0
      %v3168 = vadd.f32 0.0, %v3167
      %v3169 = vpop.f32.mrb[0].mxu0
      %v3170 = vpop.f32.mrb[0].mxu0
      %v3171 = vadd.f32 0.0, %v3170
      %v3172 = vpop.f32.mrb[0].mxu0
      %3173 = vmatprep.mubr.bf16.mxu0 0
      %3174 = vmatmul.mubr.bf16.gmra.mrb[0].mxu0 %v2350
      %v3175 = vpop.f32.mrb[0].mxu0
      %v3176 = vadd.f32 0.0, %v3175
      %v3177 = vpop.f32.mrb[0].mxu0
      %v3178 = vpop.f32.mrb[0].mxu0
      %v3179 = vadd.f32 0.0, %v3178
      %v3180 = vpop.f32.mrb[0].mxu0
      %3181 = vmatprep.mubr.bf16.mxu0 0
      %3182 = vmatmul.mubr.bf16.gmra.mrb[0].mxu0 %v2351
      %v3183 = vpop.f32.mrb[0].mxu0
      %v3184 = vadd.f32 0.0, %v3183
      %v3185 = vpop.f32.mrb[0].mxu0
      %v3186 = vpop.f32.mrb[0].mxu0
      %v3187 = vadd.f32 0.0, %v3186
      %v3188 = vpop.f32.mrb[0].mxu0
      %3189 = vmatprep.mubr.bf16.mxu0 0
      %3190 = vmatmul.mubr.bf16.gmra.mrb[0].mxu0 %v2352
      %v3191 = vpop.f32.mrb[0].mxu0
      %v3192 = vadd.f32 0.0, %v3191
      %v3193 = vpop.f32.mrb[0].mxu0
      %v3194 = vpop.f32.mrb[0].mxu0
      %v3195 = vadd.f32 0.0, %v3194
      %v3196 = vpop.f32.mrb[0].mxu0
      %3197 = vmatprep.mubr.bf16.mxu0 0
      %3198 = vmatmul.mubr.bf16.gmra.mrb[0].mxu0 %v2353
      %v3199 = vpop.f32.mrb[0].mxu0
      %v3200 = vadd.f32 0.0, %v3199
      %v3201 = vpop.f32.mrb[0].mxu0
      %v3202 = vpop.f32.mrb[0].mxu0
      %v3203 = vadd.f32 0.0, %v3202
      %v3204 = vpop.f32.mrb[0].mxu0
      %3205 = vmatprep.mubr.bf16.mxu0 0
      %3206 = vmatmul.mubr.bf16.gmra.mrb[0].mxu0 %v2354
      %v3207 = vpop.f32.mrb[0].mxu0
      %v3208 = vadd.f32 0.0, %v3207
      %v3209 = vpop.f32.mrb[0].mxu0
      %v3210 = vpop.f32.mrb[0].mxu0
      %v3211 = vadd.f32 0.0, %v3210
      %v3212 = vpop.f32.mrb[0].mxu0
      %3213 = vmatprep.mubr.bf16.mxu0 0
      %3214 = vmatmul.mubr.bf16.gmra.mrb[0].mxu0 %v2355
      %v3215 = vpop.f32.mrb[0].mxu0
      %v3216 = vadd.f32 0.0, %v3215
      %v3217 = vpop.f32.mrb[0].mxu0
      %v3218 = vpop.f32.mrb[0].mxu0
      %v3219 = vadd.f32 0.0, %v3218
      %v3220 = vpop.f32.mrb[0].mxu0
      %3221 = vmatprep.mubr.bf16.mxu0 0
      %3222 = vmatmul.mubr.bf16.gmra.mrb[0].mxu0 %v2356
      %v3223 = vpop.f32.mrb[0].mxu0
      %v3224 = vadd.f32 0.0, %v3223
      %v3225 = vpop.f32.mrb[0].mxu0
      %v3226 = vpop.f32.mrb[0].mxu0
      %v3227 = vadd.f32 0.0, %v3226
      %v3228 = vpop.f32.mrb[0].mxu0
      %3229 = vmatprep.mubr.bf16.mxu0 0
      %3230 = vmatmul.mubr.bf16.gmra.mrb[0].mxu0 %v2357
      %v3231 = vpop.f32.mrb[0].mxu0
      %v3232 = vadd.f32 0.0, %v3231
      %v3233 = vpop.f32.mrb[0].mxu0
      %v3234 = vpop.f32.mrb[0].mxu0
      %v3235 = vadd.f32 0.0, %v3234
      %v3236 = vpop.f32.mrb[0].mxu0
      %3237 = vmatprep.mubr.bf16.mxu0 0
      %3238 = vmatmul.mubr.bf16.gmra.mrb[0].mxu0 %v2358
      %v3239 = vpop.f32.mrb[0].mxu0
      %v3240 = vadd.f32 0.0, %v3239
      %v3241 = vpop.f32.mrb[0].mxu0
      %v3242 = vpop.f32.mrb[0].mxu0
      %v3243 = vadd.f32 0.0, %v3242
      %v3244 = vpop.f32.mrb[0].mxu0
      %3245 = vmatprep.mubr.bf16.mxu0 0
      %3246 = vmatmul.mubr.bf16.gmra.mrb[0].mxu0 %v2359
      %v3247 = vpop.f32.mrb[0].mxu0
      %v3248 = vadd.f32 0.0, %v3247
      %v3249 = vpop.f32.mrb[0].mxu0
      %v3250 = vpop.f32.mrb[0].mxu0
      %v3251 = vadd.f32 0.0, %v3250
      %v3252 = vpop.f32.mrb[0].mxu0
      %3253 = vmatprep.mubr.bf16.mxu0 0
      %3254 = vmatmul.mubr.bf16.gmra.mrb[0].mxu0 %v2360
      %v3255 = vpop.f32.mrb[0].mxu0
      %v3256 = vadd.f32 0.0, %v3255
      %v3257 = vpop.f32.mrb[0].mxu0
      %v3258 = vpop.f32.mrb[0].mxu0
      %v3259 = vadd.f32 0.0, %v3258
      %v3260 = vpop.f32.mrb[0].mxu0
      %3261 = vmatprep.mubr.bf16.mxu0 0
      %3262 = vmatmul.mubr.bf16.gmra.mrb[0].mxu0 %v2361
      %v3263 = vpop.f32.mrb[0].mxu0
      %v3264 = vadd.f32 0.0, %v3263
      %v3265 = vpop.f32.mrb[0].mxu0
      %v3266 = vpop.f32.mrb[0].mxu0
      %v3267 = vadd.f32 0.0, %v3266
      %v3268 = vpop.f32.mrb[0].mxu0
      %3269 = vmatprep.mubr.bf16.mxu0 0
      %3270 = vmatmul.mubr.bf16.gmra.mrb[0].mxu0 %v2362
      %v3271 = vpop.f32.mrb[0].mxu0
      %v3272 = vadd.f32 0.0, %v3271
      %v3273 = vpop.f32.mrb[0].mxu0
      %v3274 = vpop.f32.mrb[0].mxu0
      %v3275 = vadd.f32 0.0, %v3274
      %v3276 = vpop.f32.mrb[0].mxu0
      %3277 = vmatprep.mubr.bf16.mxu0 0
      %3278 = vmatmul.mubr.bf16.gmra.mrb[0].mxu0 %v2363
      %v3279 = vpop.f32.mrb[0].mxu0
      %v3280 = vadd.f32 0.0, %v3279
      %v3281 = vpop.f32.mrb[0].mxu0
      %v3282 = vpop.f32.mrb[0].mxu0
      %v3283 = vadd.f32 0.0, %v3282
      %v3284 = vpop.f32.mrb[0].mxu0
      %3285 = vmatprep.mubr.bf16.mxu0 0
      %3286 = vmatmul.mubr.bf16.gmra.mrb[0].mxu0 %v2364
      %v3287 = vpop.f32.mrb[0].mxu0
      %v3288 = vadd.f32 0.0, %v3287
      %v3289 = vpop.f32.mrb[0].mxu0
      %v3290 = vpop.f32.mrb[0].mxu0
      %v3291 = vadd.f32 0.0, %v3290
      %v3292 = vpop.f32.mrb[0].mxu0
      %3293 = vdwg.mxu0
      %v3302 = vunpack.c.l.b16 %v2933
      %v3303 = vunpack.c.l.b16 %v2934
      %v3304 = vunpack.c.l.b16 %v2935
      %v3305 = vunpack.c.l.b16 %v2936
      %v3306 = vunpack.c.l.b16 %v2937
      %v3307 = vunpack.c.l.b16 %v2938
      %v3308 = vunpack.c.l.b16 %v2939
      %v3309 = vunpack.c.l.b16 %v2940
      %v3310 = vpack.c.b16 %v3303, %v3302
      %v3311 = vpack.c.b16 %v3305, %v3304
      %v3312 = vpack.c.b16 %v3307, %v3306
      %v3313 = vpack.c.b16 %v3309, %v3308
      %3318 = vmatprep.subr.bf16.mxu0 0
      %3319 = vmatpush1.bf16.msra.mxu0 %v3310
      %3320 = vmatprep.subr.bf16.mxu0 0
      %3321 = vmatpush1.bf16.msra.mxu0 %v3311
      %3322 = vmatprep.subr.bf16.mxu0 0
      %3323 = vmatpush1.bf16.msra.mxu0 %v3312
      %3324 = vmatprep.subr.bf16.mxu0 0
      %3325 = vmatpush1.bf16.msra.mxu0 %v3313
      %3326 = vmatprep.subr.bf16.mxu0 0
      %3327 = vmatpush1.bf16.msra.mxu0 0
      %3328 = vmatprep.subr.bf16.mxu0 0
      %3329 = vmatpush1.bf16.msra.mxu0 0
      %3330 = vmatprep.subr.bf16.mxu0 0
      %3331 = vmatpush1.bf16.msra.mxu0 0
      %3332 = vmatprep.subr.bf16.mxu0 0
      %3333 = vmatpush1.bf16.msra.mxu0 0
      %3334 = vmatprep.subr.bf16.mxu0 0
      %3335 = vmatpush1.bf16.msra.mxu0 0
      %3336 = vmatprep.subr.bf16.mxu0 0
      %3337 = vmatpush1.bf16.msra.mxu0 0
      %3338 = vmatprep.subr.bf16.mxu0 0
      %3339 = vmatpush1.bf16.msra.mxu0 0
      %3340 = vmatprep.subr.bf16.mxu0 0
      %3341 = vmatpush1.bf16.msra.mxu0 0
      %3342 = vmatprep.subr.bf16.mxu0 0
      %3343 = vmatpush1.bf16.msra.mxu0 0
      %3344 = vmatprep.subr.bf16.mxu0 0
      %3345 = vmatpush1.bf16.msra.mxu0 0
      %3346 = vmatprep.subr.bf16.mxu0 0
      %3347 = vmatpush1.bf16.msra.mxu0 0
      %3348 = vmatprep.subr.bf16.mxu0 0
      %3349 = vmatpush1.bf16.msra.mxu0 0
      %3350 = vmatprep.mubr.bf16.mxu0 0
      %3351 = vmatmul.mubr.bf16.gmra.mrb[0].mxu0 %v1885
      %v3352 = vpop.f32.mrb[0].mxu0
      %v3353 = vadd.f32 %v3040, %v3352
      %v3354 = vpop.f32.mrb[0].mxu0
      %v3355 = vpop.f32.mrb[0].mxu0
      %v3356 = vadd.f32 %v3043, %v3355
      %v3357 = vpop.f32.mrb[0].mxu0
      %3358 = vmatprep.mubr.bf16.mxu0 0
      %3359 = vmatmul.mubr.bf16.gmra.mrb[0].mxu0 %v1888
      %v3360 = vpop.f32.mrb[0].mxu0
      %v3361 = vadd.f32 %v3048, %v3360
      %v3362 = vpop.f32.mrb[0].mxu0
      %v3363 = vpop.f32.mrb[0].mxu0
      %v3364 = vadd.f32 %v3051, %v3363
      %v3365 = vpop.f32.mrb[0].mxu0
      %3366 = vmatprep.mubr.bf16.mxu0 0
      %3367 = vmatmul.mubr.bf16.gmra.mrb[0].mxu0 %v1891
      %v3368 = vpop.f32.mrb[0].mxu0
      %v3369 = vadd.f32 %v3056, %v3368
      %v3370 = vpop.f32.mrb[0].mxu0
      %v3371 = vpop.f32.mrb[0].mxu0
      %v3372 = vadd.f32 %v3059, %v3371
      %v3373 = vpop.f32.mrb[0].mxu0
      %3374 = vmatprep.mubr.bf16.mxu0 0
      %3375 = vmatmul.mubr.bf16.gmra.mrb[0].mxu0 %v1894
      %v3376 = vpop.f32.mrb[0].mxu0
      %v3377 = vadd.f32 %v3064, %v3376
      %v3378 = vpop.f32.mrb[0].mxu0
      %v3379 = vpop.f32.mrb[0].mxu0
      %v3380 = vadd.f32 %v3067, %v3379
      %v3381 = vpop.f32.mrb[0].mxu0
      %3382 = vmatprep.mubr.bf16.mxu0 0
      %3383 = vmatmul.mubr.bf16.gmra.mrb[0].mxu0 %v1897
      %v3384 = vpop.f32.mrb[0].mxu0
      %v3385 = vadd.f32 %v3072, %v3384
      %v3386 = vpop.f32.mrb[0].mxu0
      %v3387 = vpop.f32.mrb[0].mxu0
      %v3388 = vadd.f32 %v3075, %v3387
      %v3389 = vpop.f32.mrb[0].mxu0
      %3390 = vmatprep.mubr.bf16.mxu0 0
      %3391 = vmatmul.mubr.bf16.gmra.mrb[0].mxu0 %v1900
      %v3392 = vpop.f32.mrb[0].mxu0
      %v3393 = vadd.f32 %v3080, %v3392
      %v3394 = vpop.f32.mrb[0].mxu0
      %v3395 = vpop.f32.mrb[0].mxu0
      %v3396 = vadd.f32 %v3083, %v3395
      %v3397 = vpop.f32.mrb[0].mxu0
      %3398 = vmatprep.mubr.bf16.mxu0 0
      %3399 = vmatmul.mubr.bf16.gmra.mrb[0].mxu0 %v1903
      %v3400 = vpop.f32.mrb[0].mxu0
      %v3401 = vadd.f32 %v3088, %v3400
      %v3402 = vpop.f32.mrb[0].mxu0
      %v3403 = vpop.f32.mrb[0].mxu0
      %v3404 = vadd.f32 %v3091, %v3403
      %v3405 = vpop.f32.mrb[0].mxu0
      %3406 = vmatprep.mubr.bf16.mxu0 0
      %3407 = vmatmul.mubr.bf16.gmra.mrb[0].mxu0 %v1906
      %v3408 = vpop.f32.mrb[0].mxu0
      %v3409 = vadd.f32 %v3096, %v3408
      %v3410 = vpop.f32.mrb[0].mxu0
      %v3411 = vpop.f32.mrb[0].mxu0
      %v3412 = vadd.f32 %v3099, %v3411
      %v3413 = vpop.f32.mrb[0].mxu0
      %3414 = vmatprep.mubr.bf16.mxu0 0
      %3415 = vmatmul.mubr.bf16.gmra.mrb[0].mxu0 %v1909
      %v3416 = vpop.f32.mrb[0].mxu0
      %v3417 = vadd.f32 %v3104, %v3416
      %v3418 = vpop.f32.mrb[0].mxu0
      %v3419 = vpop.f32.mrb[0].mxu0
      %v3420 = vadd.f32 %v3107, %v3419
      %v3421 = vpop.f32.mrb[0].mxu0
      %3422 = vmatprep.mubr.bf16.mxu0 0
      %3423 = vmatmul.mubr.bf16.gmra.mrb[0].mxu0 %v1912
      %v3424 = vpop.f32.mrb[0].mxu0
      %v3425 = vadd.f32 %v3112, %v3424
      %v3426 = vpop.f32.mrb[0].mxu0
      %v3427 = vpop.f32.mrb[0].mxu0
      %v3428 = vadd.f32 %v3115, %v3427
      %v3429 = vpop.f32.mrb[0].mxu0
      %3430 = vmatprep.mubr.bf16.mxu0 0
      %3431 = vmatmul.mubr.bf16.gmra.mrb[0].mxu0 %v1915
      %v3432 = vpop.f32.mrb[0].mxu0
      %v3433 = vadd.f32 %v3120, %v3432
      %v3434 = vpop.f32.mrb[0].mxu0
      %v3435 = vpop.f32.mrb[0].mxu0
      %v3436 = vadd.f32 %v3123, %v3435
      %v3437 = vpop.f32.mrb[0].mxu0
      %3438 = vmatprep.mubr.bf16.mxu0 0
      %3439 = vmatmul.mubr.bf16.gmra.mrb[0].mxu0 %v1918
      %v3440 = vpop.f32.mrb[0].mxu0
      %v3441 = vadd.f32 %v3128, %v3440
      %v3442 = vpop.f32.mrb[0].mxu0
      %v3443 = vpop.f32.mrb[0].mxu0
      %v3444 = vadd.f32 %v3131, %v3443
      %v3445 = vpop.f32.mrb[0].mxu0
      %3446 = vmatprep.mubr.bf16.mxu0 0
      %3447 = vmatmul.mubr.bf16.gmra.mrb[0].mxu0 %v1921
      %v3448 = vpop.f32.mrb[0].mxu0
      %v3449 = vadd.f32 %v3136, %v3448
      %v3450 = vpop.f32.mrb[0].mxu0
      %v3451 = vpop.f32.mrb[0].mxu0
      %v3452 = vadd.f32 %v3139, %v3451
      %v3453 = vpop.f32.mrb[0].mxu0
      %3454 = vmatprep.mubr.bf16.mxu0 0
      %3455 = vmatmul.mubr.bf16.gmra.mrb[0].mxu0 %v1924
      %v3456 = vpop.f32.mrb[0].mxu0
      %v3457 = vadd.f32 %v3144, %v3456
      %v3458 = vpop.f32.mrb[0].mxu0
      %v3459 = vpop.f32.mrb[0].mxu0
      %v3460 = vadd.f32 %v3147, %v3459
      %v3461 = vpop.f32.mrb[0].mxu0
      %3462 = vmatprep.mubr.bf16.mxu0 0
      %3463 = vmatmul.mubr.bf16.gmra.mrb[0].mxu0 %v1927
      %v3464 = vpop.f32.mrb[0].mxu0
      %v3465 = vadd.f32 %v3152, %v3464
      %v3466 = vpop.f32.mrb[0].mxu0
      %v3467 = vpop.f32.mrb[0].mxu0
      %v3468 = vadd.f32 %v3155, %v3467
      %v3469 = vpop.f32.mrb[0].mxu0
      %3470 = vmatprep.mubr.bf16.mxu0 0
      %3471 = vmatmul.mubr.bf16.gmra.mrb[0].mxu0 %v1930
      %v3472 = vpop.f32.mrb[0].mxu0
      %v3473 = vadd.f32 %v3160, %v3472
      %v3474 = vpop.f32.mrb[0].mxu0
      %v3475 = vpop.f32.mrb[0].mxu0
      %v3476 = vadd.f32 %v3163, %v3475
      %v3477 = vpop.f32.mrb[0].mxu0
      %3478 = vmatprep.mubr.bf16.mxu0 0
      %3479 = vmatmul.mubr.bf16.gmra.mrb[0].mxu0 %v1933
      %v3480 = vpop.f32.mrb[0].mxu0
      %v3481 = vadd.f32 %v3168, %v3480
      %v3482 = vpop.f32.mrb[0].mxu0
      %v3483 = vpop.f32.mrb[0].mxu0
      %v3484 = vadd.f32 %v3171, %v3483
      %v3485 = vpop.f32.mrb[0].mxu0
      %3486 = vmatprep.mubr.bf16.mxu0 0
      %3487 = vmatmul.mubr.bf16.gmra.mrb[0].mxu0 %v1936
      %v3488 = vpop.f32.mrb[0].mxu0
      %v3489 = vadd.f32 %v3176, %v3488
      %v3490 = vpop.f32.mrb[0].mxu0
      %v3491 = vpop.f32.mrb[0].mxu0
      %v3492 = vadd.f32 %v3179, %v3491
      %v3493 = vpop.f32.mrb[0].mxu0
      %3494 = vmatprep.mubr.bf16.mxu0 0
      %3495 = vmatmul.mubr.bf16.gmra.mrb[0].mxu0 %v1939
      %v3496 = vpop.f32.mrb[0].mxu0
      %v3497 = vadd.f32 %v3184, %v3496
      %v3498 = vpop.f32.mrb[0].mxu0
      %v3499 = vpop.f32.mrb[0].mxu0
      %v3500 = vadd.f32 %v3187, %v3499
      %v3501 = vpop.f32.mrb[0].mxu0
      %3502 = vmatprep.mubr.bf16.mxu0 0
      %3503 = vmatmul.mubr.bf16.gmra.mrb[0].mxu0 %v1942
      %v3504 = vpop.f32.mrb[0].mxu0
      %v3505 = vadd.f32 %v3192, %v3504
      %v3506 = vpop.f32.mrb[0].mxu0
      %v3507 = vpop.f32.mrb[0].mxu0
      %v3508 = vadd.f32 %v3195, %v3507
      %v3509 = vpop.f32.mrb[0].mxu0
      %3510 = vmatprep.mubr.bf16.mxu0 0
      %3511 = vmatmul.mubr.bf16.gmra.mrb[0].mxu0 %v1945
      %v3512 = vpop.f32.mrb[0].mxu0
      %v3513 = vadd.f32 %v3200, %v3512
      %v3514 = vpop.f32.mrb[0].mxu0
      %v3515 = vpop.f32.mrb[0].mxu0
      %v3516 = vadd.f32 %v3203, %v3515
      %v3517 = vpop.f32.mrb[0].mxu0
      %3518 = vmatprep.mubr.bf16.mxu0 0
      %3519 = vmatmul.mubr.bf16.gmra.mrb[0].mxu0 %v1948
      %v3520 = vpop.f32.mrb[0].mxu0
      %v3521 = vadd.f32 %v3208, %v3520
      %v3522 = vpop.f32.mrb[0].mxu0
      %v3523 = vpop.f32.mrb[0].mxu0
      %v3524 = vadd.f32 %v3211, %v3523
      %v3525 = vpop.f32.mrb[0].mxu0
      %3526 = vmatprep.mubr.bf16.mxu0 0
      %3527 = vmatmul.mubr.bf16.gmra.mrb[0].mxu0 %v1951
      %v3528 = vpop.f32.mrb[0].mxu0
      %v3529 = vadd.f32 %v3216, %v3528
      %v3530 = vpop.f32.mrb[0].mxu0
      %v3531 = vpop.f32.mrb[0].mxu0
      %v3532 = vadd.f32 %v3219, %v3531
      %v3533 = vpop.f32.mrb[0].mxu0
      %3534 = vmatprep.mubr.bf16.mxu0 0
      %3535 = vmatmul.mubr.bf16.gmra.mrb[0].mxu0 %v1954
      %v3536 = vpop.f32.mrb[0].mxu0
      %v3537 = vadd.f32 %v3224, %v3536
      %v3538 = vpop.f32.mrb[0].mxu0
      %v3539 = vpop.f32.mrb[0].mxu0
      %v3540 = vadd.f32 %v3227, %v3539
      %v3541 = vpop.f32.mrb[0].mxu0
      %3542 = vmatprep.mubr.bf16.mxu0 0
      %3543 = vmatmul.mubr.bf16.gmra.mrb[0].mxu0 %v1957
      %v3544 = vpop.f32.mrb[0].mxu0
      %v3545 = vadd.f32 %v3232, %v3544
      %v3546 = vpop.f32.mrb[0].mxu0
      %v3547 = vpop.f32.mrb[0].mxu0
      %v3548 = vadd.f32 %v3235, %v3547
      %v3549 = vpop.f32.mrb[0].mxu0
      %3550 = vmatprep.mubr.bf16.mxu0 0
      %3551 = vmatmul.mubr.bf16.gmra.mrb[0].mxu0 %v1960
      %v3552 = vpop.f32.mrb[0].mxu0
      %v3553 = vadd.f32 %v3240, %v3552
      %v3554 = vpop.f32.mrb[0].mxu0
      %v3555 = vpop.f32.mrb[0].mxu0
      %v3556 = vadd.f32 %v3243, %v3555
      %v3557 = vpop.f32.mrb[0].mxu0
      %3558 = vmatprep.mubr.bf16.mxu0 0
      %3559 = vmatmul.mubr.bf16.gmra.mrb[0].mxu0 %v1963
      %v3560 = vpop.f32.mrb[0].mxu0
      %v3561 = vadd.f32 %v3248, %v3560
      %v3562 = vpop.f32.mrb[0].mxu0
      %v3563 = vpop.f32.mrb[0].mxu0
      %v3564 = vadd.f32 %v3251, %v3563
      %v3565 = vpop.f32.mrb[0].mxu0
      %3566 = vmatprep.mubr.bf16.mxu0 0
      %3567 = vmatmul.mubr.bf16.gmra.mrb[0].mxu0 %v1966
      %v3568 = vpop.f32.mrb[0].mxu0
      %v3569 = vadd.f32 %v3256, %v3568
      %v3570 = vpop.f32.mrb[0].mxu0
      %v3571 = vpop.f32.mrb[0].mxu0
      %v3572 = vadd.f32 %v3259, %v3571
      %v3573 = vpop.f32.mrb[0].mxu0
      %3574 = vmatprep.mubr.bf16.mxu0 0
      %3575 = vmatmul.mubr.bf16.gmra.mrb[0].mxu0 %v1969
      %v3576 = vpop.f32.mrb[0].mxu0
      %v3577 = vadd.f32 %v3264, %v3576
      %v3578 = vpop.f32.mrb[0].mxu0
      %v3579 = vpop.f32.mrb[0].mxu0
      %v3580 = vadd.f32 %v3267, %v3579
      %v3581 = vpop.f32.mrb[0].mxu0
      %3582 = vmatprep.mubr.bf16.mxu0 0
      %3583 = vmatmul.mubr.bf16.gmra.mrb[0].mxu0 %v1972
      %v3584 = vpop.f32.mrb[0].mxu0
      %v3585 = vadd.f32 %v3272, %v3584
      %v3586 = vpop.f32.mrb[0].mxu0
      %v3587 = vpop.f32.mrb[0].mxu0
      %v3588 = vadd.f32 %v3275, %v3587
      %v3589 = vpop.f32.mrb[0].mxu0
      %3590 = vmatprep.mubr.bf16.mxu0 0
      %3591 = vmatmul.mubr.bf16.gmra.mrb[0].mxu0 %v1975
      %v3592 = vpop.f32.mrb[0].mxu0
      %v3593 = vadd.f32 %v3280, %v3592
      %v3594 = vpop.f32.mrb[0].mxu0
      %v3595 = vpop.f32.mrb[0].mxu0
      %v3596 = vadd.f32 %v3283, %v3595
      %v3597 = vpop.f32.mrb[0].mxu0
      %3598 = vmatprep.mubr.bf16.mxu0 0
      %3599 = vmatmul.mubr.bf16.gmra.mrb[0].mxu0 %v1978
      %v3600 = vpop.f32.mrb[0].mxu0
      %v3601 = vadd.f32 %v3288, %v3600
      %v3602 = vpop.f32.mrb[0].mxu0
      %v3603 = vpop.f32.mrb[0].mxu0
      %v3604 = vadd.f32 %v3291, %v3603
      %v3605 = vpop.f32.mrb[0].mxu0
      %3606 = vdwg.mxu0
      %v3607 = vld [vmem:[%s10] sm:$0x1]
      %v3609 = vlaneseq
      %v3610 = vshrl.u32 %v3609, 7
      %v3611 = vsub.s32 0, %v3610
      %v3612 = vrot.slane %v3607, %v3611
      %v3614 = vadd.f32 %v3353, %v3612
      %v3615 = vadd.f32 %v3356, %v3612
      %v3616 = vadd.f32 %v3361, %v3612
      %v3617 = vadd.f32 %v3364, %v3612
      %v3618 = vadd.f32 %v3369, %v3612
      %v3619 = vadd.f32 %v3372, %v3612
      %v3620 = vadd.f32 %v3377, %v3612
      %v3621 = vadd.f32 %v3380, %v3612
      %v3622 = vadd.f32 %v3385, %v3612
      %v3623 = vadd.f32 %v3388, %v3612
      %v3624 = vadd.f32 %v3393, %v3612
      %v3625 = vadd.f32 %v3396, %v3612
      %v3626 = vadd.f32 %v3401, %v3612
      %v3627 = vadd.f32 %v3404, %v3612
      %v3628 = vadd.f32 %v3409, %v3612
      %v3629 = vadd.f32 %v3412, %v3612
      %v3630 = vadd.f32 %v3417, %v3612
      %v3631 = vadd.f32 %v3420, %v3612
      %v3632 = vadd.f32 %v3425, %v3612
      %v3633 = vadd.f32 %v3428, %v3612
      %v3634 = vadd.f32 %v3433, %v3612
      %v3635 = vadd.f32 %v3436, %v3612
      %v3636 = vadd.f32 %v3441, %v3612
      %v3637 = vadd.f32 %v3444, %v3612
      %v3638 = vadd.f32 %v3449, %v3612
      %v3639 = vadd.f32 %v3452, %v3612
      %v3640 = vadd.f32 %v3457, %v3612
      %v3641 = vadd.f32 %v3460, %v3612
      %v3642 = vadd.f32 %v3465, %v3612
      %v3643 = vadd.f32 %v3468, %v3612
      %v3644 = vadd.f32 %v3473, %v3612
      %v3645 = vadd.f32 %v3476, %v3612
      %v3646 = vadd.f32 %v3481, %v3612
      %v3647 = vadd.f32 %v3484, %v3612
      %v3648 = vadd.f32 %v3489, %v3612
      %v3649 = vadd.f32 %v3492, %v3612
      %v3650 = vadd.f32 %v3497, %v3612
      %v3651 = vadd.f32 %v3500, %v3612
      %v3652 = vadd.f32 %v3505, %v3612
      %v3653 = vadd.f32 %v3508, %v3612
      %v3654 = vadd.f32 %v3513, %v3612
      %v3655 = vadd.f32 %v3516, %v3612
      %v3656 = vadd.f32 %v3521, %v3612
      %v3657 = vadd.f32 %v3524, %v3612
      %v3658 = vadd.f32 %v3529, %v3612
      %v3659 = vadd.f32 %v3532, %v3612
      %v3660 = vadd.f32 %v3537, %v3612
      %v3661 = vadd.f32 %v3540, %v3612
      %v3662 = vadd.f32 %v3545, %v3612
      %v3663 = vadd.f32 %v3548, %v3612
      %v3664 = vadd.f32 %v3553, %v3612
      %v3665 = vadd.f32 %v3556, %v3612
      %v3666 = vadd.f32 %v3561, %v3612
      %v3667 = vadd.f32 %v3564, %v3612
      %v3668 = vadd.f32 %v3569, %v3612
      %v3669 = vadd.f32 %v3572, %v3612
      %v3670 = vadd.f32 %v3577, %v3612
      %v3671 = vadd.f32 %v3580, %v3612
      %v3672 = vadd.f32 %v3585, %v3612
      %v3673 = vadd.f32 %v3588, %v3612
      %v3674 = vadd.f32 %v3593, %v3612
      %v3675 = vadd.f32 %v3596, %v3612
      %v3676 = vadd.f32 %v3601, %v3612
      %v3677 = vadd.f32 %v3604, %v3612
      %v3680 = vunpack.c.l.s4 1966171168
      %v3681 = vunpack.c.0.s8 %v3680
      %v3682 = vlaneseq
      %v3683 = vshrl.u32 %v3682, 7
      %v3684 = vsub.s32 %v3681, %v3683
      %v3685 = vrot.slane %v2928, %v3684
      %v3686 = vcombine.high %v3685, %v3685
      %v3688 = vunpack.c.l.s4 1966171168
      %v3689 = vunpack.c.0.s8 %v3688
      %v3690 = vlaneseq
      %v3691 = vshrl.u32 %v3690, 7
      %v3692 = vsub.s32 %v3689, %v3691
      %v3693 = vrot.slane %v3685, %v3692
      %v3695 = vunpack.c.l.s4 1966171168
      %v3696 = vunpack.c.0.s8 %v3695
      %v3697 = vlaneseq
      %v3698 = vshrl.u32 %v3697, 7
      %v3699 = vsub.s32 %v3696, %v3698
      %v3700 = vrot.slane %v3686, %v3699
      %v3701 = vcombine.high %v3693, %v3693
      %v3702 = vcombine.high %v3700, %v3700
      %v3703 = vlaneseq
      %v3704 = vshrl.u32 %v3703, 7
      %v3705 = vsub.s32 0, %v3704
      %v3706 = vrot.slane %v3693, %v3705
      %v3707 = vlaneseq
      %v3708 = vshrl.u32 %v3707, 7
      %v3709 = vsub.s32 0, %v3708
      %v3710 = vrot.slane %v3700, %v3709
      %v3711 = vlaneseq
      %v3712 = vshrl.u32 %v3711, 7
      %v3713 = vsub.s32 0, %v3712
      %v3714 = vrot.slane %v3701, %v3713
      %v3715 = vlaneseq
      %v3716 = vshrl.u32 %v3715, 7
      %v3717 = vsub.s32 0, %v3716
      %v3718 = vrot.slane %v3702, %v3717
      %v3723 = vadd.f32 %v3614, %v3706
      %v3724 = vadd.f32 %v3615, %v3706
      %v3725 = vadd.f32 %v3616, %v3706
      %v3726 = vadd.f32 %v3617, %v3706
      %v3727 = vadd.f32 %v3618, %v3706
      %v3728 = vadd.f32 %v3619, %v3706
      %v3729 = vadd.f32 %v3620, %v3706
      %v3730 = vadd.f32 %v3621, %v3706
      %v3731 = vadd.f32 %v3622, %v3706
      %v3732 = vadd.f32 %v3623, %v3706
      %v3733 = vadd.f32 %v3624, %v3706
      %v3734 = vadd.f32 %v3625, %v3706
      %v3735 = vadd.f32 %v3626, %v3706
      %v3736 = vadd.f32 %v3627, %v3706
      %v3737 = vadd.f32 %v3628, %v3706
      %v3738 = vadd.f32 %v3629, %v3706
      %v3739 = vadd.f32 %v3630, %v3710
      %v3740 = vadd.f32 %v3631, %v3710
      %v3741 = vadd.f32 %v3632, %v3710
      %v3742 = vadd.f32 %v3633, %v3710
      %v3743 = vadd.f32 %v3634, %v3710
      %v3744 = vadd.f32 %v3635, %v3710
      %v3745 = vadd.f32 %v3636, %v3710
      %v3746 = vadd.f32 %v3637, %v3710
      %v3747 = vadd.f32 %v3638, %v3710
      %v3748 = vadd.f32 %v3639, %v3710
      %v3749 = vadd.f32 %v3640, %v3710
      %v3750 = vadd.f32 %v3641, %v3710
      %v3751 = vadd.f32 %v3642, %v3710
      %v3752 = vadd.f32 %v3643, %v3710
      %v3753 = vadd.f32 %v3644, %v3710
      %v3754 = vadd.f32 %v3645, %v3710
      %v3755 = vadd.f32 %v3646, %v3714
      %v3756 = vadd.f32 %v3647, %v3714
      %v3757 = vadd.f32 %v3648, %v3714
      %v3758 = vadd.f32 %v3649, %v3714
      %v3759 = vadd.f32 %v3650, %v3714
      %v3760 = vadd.f32 %v3651, %v3714
      %v3761 = vadd.f32 %v3652, %v3714
      %v3762 = vadd.f32 %v3653, %v3714
      %v3763 = vadd.f32 %v3654, %v3714
      %v3764 = vadd.f32 %v3655, %v3714
      %v3765 = vadd.f32 %v3656, %v3714
      %v3766 = vadd.f32 %v3657, %v3714
      %v3767 = vadd.f32 %v3658, %v3714
      %v3768 = vadd.f32 %v3659, %v3714
      %v3769 = vadd.f32 %v3660, %v3714
      %v3770 = vadd.f32 %v3661, %v3714
      %v3771 = vadd.f32 %v3662, %v3718
      %v3772 = vadd.f32 %v3663, %v3718
      %v3773 = vadd.f32 %v3664, %v3718
      %v3774 = vadd.f32 %v3665, %v3718
      %v3775 = vadd.f32 %v3666, %v3718
      %v3776 = vadd.f32 %v3667, %v3718
      %v3777 = vadd.f32 %v3668, %v3718
      %v3778 = vadd.f32 %v3669, %v3718
      %v3779 = vadd.f32 %v3670, %v3718
      %v3780 = vadd.f32 %v3671, %v3718
      %v3781 = vadd.f32 %v3672, %v3718
      %v3782 = vadd.f32 %v3673, %v3718
      %v3783 = vadd.f32 %v3674, %v3718
      %v3784 = vadd.f32 %v3675, %v3718
      %v3785 = vadd.f32 %v3676, %v3718
      %v3786 = vadd.f32 %v3677, %v3718
      %v3787 = vmax.f32 %v3723, 0.0
      %v3788 = vmax.f32 %v3724, 0.0
      %v3789 = vmax.f32 %v3725, 0.0
      %v3790 = vmax.f32 %v3726, 0.0
      %v3791 = vmax.f32 %v3727, 0.0
      %v3792 = vmax.f32 %v3728, 0.0
      %v3793 = vmax.f32 %v3729, 0.0
      %v3794 = vmax.f32 %v3730, 0.0
      %v3795 = vmax.f32 %v3731, 0.0
      %v3796 = vmax.f32 %v3732, 0.0
      %v3797 = vmax.f32 %v3733, 0.0
      %v3798 = vmax.f32 %v3734, 0.0
      %v3799 = vmax.f32 %v3735, 0.0
      %v3800 = vmax.f32 %v3736, 0.0
      %v3801 = vmax.f32 %v3737, 0.0
      %v3802 = vmax.f32 %v3738, 0.0
      %v3803 = vmax.f32 %v3739, 0.0
      %v3804 = vmax.f32 %v3740, 0.0
      %v3805 = vmax.f32 %v3741, 0.0
      %v3806 = vmax.f32 %v3742, 0.0
      %v3807 = vmax.f32 %v3743, 0.0
      %v3808 = vmax.f32 %v3744, 0.0
      %v3809 = vmax.f32 %v3745, 0.0
      %v3810 = vmax.f32 %v3746, 0.0
      %v3811 = vmax.f32 %v3747, 0.0
      %v3812 = vmax.f32 %v3748, 0.0
      %v3813 = vmax.f32 %v3749, 0.0
      %v3814 = vmax.f32 %v3750, 0.0
      %v3815 = vmax.f32 %v3751, 0.0
      %v3816 = vmax.f32 %v3752, 0.0
      %v3817 = vmax.f32 %v3753, 0.0
      %v3818 = vmax.f32 %v3754, 0.0
      %v3819 = vmax.f32 %v3755, 0.0
      %v3820 = vmax.f32 %v3756, 0.0
      %v3821 = vmax.f32 %v3757, 0.0
      %v3822 = vmax.f32 %v3758, 0.0
      %v3823 = vmax.f32 %v3759, 0.0
      %v3824 = vmax.f32 %v3760, 0.0
      %v3825 = vmax.f32 %v3761, 0.0
      %v3826 = vmax.f32 %v3762, 0.0
      %v3827 = vmax.f32 %v3763, 0.0
      %v3828 = vmax.f32 %v3764, 0.0
      %v3829 = vmax.f32 %v3765, 0.0
      %v3830 = vmax.f32 %v3766, 0.0
      %v3831 = vmax.f32 %v3767, 0.0
      %v3832 = vmax.f32 %v3768, 0.0
      %v3833 = vmax.f32 %v3769, 0.0
      %v3834 = vmax.f32 %v3770, 0.0
      %v3835 = vmax.f32 %v3771, 0.0
      %v3836 = vmax.f32 %v3772, 0.0
      %v3837 = vmax.f32 %v3773, 0.0
      %v3838 = vmax.f32 %v3774, 0.0
      %v3839 = vmax.f32 %v3775, 0.0
      %v3840 = vmax.f32 %v3776, 0.0
      %v3841 = vmax.f32 %v3777, 0.0
      %v3842 = vmax.f32 %v3778, 0.0
      %v3843 = vmax.f32 %v3779, 0.0
      %v3844 = vmax.f32 %v3780, 0.0
      %v3845 = vmax.f32 %v3781, 0.0
      %v3846 = vmax.f32 %v3782, 0.0
      %v3847 = vmax.f32 %v3783, 0.0
      %v3848 = vmax.f32 %v3784, 0.0
      %v3849 = vmax.f32 %v3785, 0.0
      %v3850 = vmax.f32 %v3786, 0.0
      %v3851 = vpack.c.bf16 %v3788, %v3787
      %v3852 = vpack.c.bf16 %v3790, %v3789
      %v3853 = vpack.c.bf16 %v3792, %v3791
      %v3854 = vpack.c.bf16 %v3794, %v3793
      %v3855 = vpack.c.bf16 %v3796, %v3795
      %v3856 = vpack.c.bf16 %v3798, %v3797
      %v3857 = vpack.c.bf16 %v3800, %v3799
      %v3858 = vpack.c.bf16 %v3802, %v3801
      %v3859 = vpack.c.bf16 %v3804, %v3803
      %v3860 = vpack.c.bf16 %v3806, %v3805
      %v3861 = vpack.c.bf16 %v3808, %v3807
      %v3862 = vpack.c.bf16 %v3810, %v3809
      %v3863 = vpack.c.bf16 %v3812, %v3811
      %v3864 = vpack.c.bf16 %v3814, %v3813
      %v3865 = vpack.c.bf16 %v3816, %v3815
      %v3866 = vpack.c.bf16 %v3818, %v3817
      %v3867 = vpack.c.bf16 %v3820, %v3819
      %v3868 = vpack.c.bf16 %v3822, %v3821
      %v3869 = vpack.c.bf16 %v3824, %v3823
      %v3870 = vpack.c.bf16 %v3826, %v3825
      %v3871 = vpack.c.bf16 %v3828, %v3827
      %v3872 = vpack.c.bf16 %v3830, %v3829
      %v3873 = vpack.c.bf16 %v3832, %v3831
      %v3874 = vpack.c.bf16 %v3834, %v3833
      %v3875 = vpack.c.bf16 %v3836, %v3835
      %v3876 = vpack.c.bf16 %v3838, %v3837
      %v3877 = vpack.c.bf16 %v3840, %v3839
      %v3878 = vpack.c.bf16 %v3842, %v3841
      %v3879 = vpack.c.bf16 %v3844, %v3843
      %v3880 = vpack.c.bf16 %v3846, %v3845
      %v3881 = vpack.c.bf16 %v3848, %v3847
      %v3882 = vpack.c.bf16 %v3850, %v3849
      %v3883 = vld [vmem:[%s11] sm:$0x7]
      %v3884 = vld [vmem:[%s12] sm:$0x1f]
      %3886 = vset.pattern.permute.xlu0 0
      %3887 = vperm.xlu0 %3886, %v3884
      %v3888 = vpop.permute.xlu0 %3887
      %3890 = vmatprep.subr.bf16.mxu0 0
      %3891 = vmatpush1.bf16.xpose.msra.mxu0 %v3851
      %3892 = vmatprep.subr.bf16.mxu0 0
      %3893 = vmatpush1.bf16.xpose.msra.mxu0 %v3852
      %3894 = vmatprep.subr.bf16.mxu0 0
      %3895 = vmatpush1.bf16.xpose.msra.mxu0 %v3853
      %3896 = vmatprep.subr.bf16.mxu0 0
      %3897 = vmatpush1.bf16.xpose.msra.mxu0 %v3854
      %3898 = vmatprep.subr.bf16.mxu0 0
      %3899 = vmatpush1.bf16.xpose.msra.mxu0 %v3855
      %3900 = vmatprep.subr.bf16.mxu0 0
      %3901 = vmatpush1.bf16.xpose.msra.mxu0 %v3856
      %3902 = vmatprep.subr.bf16.mxu0 0
      %3903 = vmatpush1.bf16.xpose.msra.mxu0 %v3857
      %3904 = vmatprep.subr.bf16.mxu0 0
      %3905 = vmatpush1.bf16.xpose.msra.mxu0 %v3858
      %3906 = vmatprep.subr.bf16.mxu0 0
      %3907 = vmatpush1.bf16.xpose.msra.mxu0 %v3859
      %3908 = vmatprep.subr.bf16.mxu0 0
      %3909 = vmatpush1.bf16.xpose.msra.mxu0 %v3860
      %3910 = vmatprep.subr.bf16.mxu0 0
      %3911 = vmatpush1.bf16.xpose.msra.mxu0 %v3861
      %3912 = vmatprep.subr.bf16.mxu0 0
      %3913 = vmatpush1.bf16.xpose.msra.mxu0 %v3862
      %3914 = vmatprep.subr.bf16.mxu0 0
      %3915 = vmatpush1.bf16.xpose.msra.mxu0 %v3863
      %3916 = vmatprep.subr.bf16.mxu0 0
      %3917 = vmatpush1.bf16.xpose.msra.mxu0 %v3864
      %3918 = vmatprep.subr.bf16.mxu0 0
      %3919 = vmatpush1.bf16.xpose.msra.mxu0 %v3865
      %3920 = vmatprep.subr.bf16.mxu0 0
      %3921 = vmatpush1.bf16.xpose.msra.mxu0 %v3866
      %3922 = vmatprep.mubr.bf16.mxu0 0
      %3923 = vmatmul.mubr.bf16.gmra.mrb[0].mxu0 %v3883
      %v3924 = vpop.f32.mrb[0].mxu0
      %v3925 = vadd.f32 %v3888, %v3924
      %v3926 = vpop.f32.mrb[0].mxu0
      %v3927 = vadd.f32 %v3888, %v3926
      %v3928 = vpop.f32.mrb[0].mxu0
      %v3929 = vpop.f32.mrb[0].mxu0
      %3930 = vdwg.mxu0
      %3931 = vmatprep.subr.bf16.mxu0 0
      %3932 = vmatpush1.bf16.xpose.msra.mxu0 %v3867
      %3933 = vmatprep.subr.bf16.mxu0 0
      %3934 = vmatpush1.bf16.xpose.msra.mxu0 %v3868
      %3935 = vmatprep.subr.bf16.mxu0 0
      %3936 = vmatpush1.bf16.xpose.msra.mxu0 %v3869
      %3937 = vmatprep.subr.bf16.mxu0 0
      %3938 = vmatpush1.bf16.xpose.msra.mxu0 %v3870
      %3939 = vmatprep.subr.bf16.mxu0 0
      %3940 = vmatpush1.bf16.xpose.msra.mxu0 %v3871
      %3941 = vmatprep.subr.bf16.mxu0 0
      %3942 = vmatpush1.bf16.xpose.msra.mxu0 %v3872
      %3943 = vmatprep.subr.bf16.mxu0 0
      %3944 = vmatpush1.bf16.xpose.msra.mxu0 %v3873
      %3945 = vmatprep.subr.bf16.mxu0 0
      %3946 = vmatpush1.bf16.xpose.msra.mxu0 %v3874
      %3947 = vmatprep.subr.bf16.mxu0 0
      %3948 = vmatpush1.bf16.xpose.msra.mxu0 %v3875
      %3949 = vmatprep.subr.bf16.mxu0 0
      %3950 = vmatpush1.bf16.xpose.msra.mxu0 %v3876
      %3951 = vmatprep.subr.bf16.mxu0 0
      %3952 = vmatpush1.bf16.xpose.msra.mxu0 %v3877
      %3953 = vmatprep.subr.bf16.mxu0 0
      %3954 = vmatpush1.bf16.xpose.msra.mxu0 %v3878
      %3955 = vmatprep.subr.bf16.mxu0 0
      %3956 = vmatpush1.bf16.xpose.msra.mxu0 %v3879
      %3957 = vmatprep.subr.bf16.mxu0 0
      %3958 = vmatpush1.bf16.xpose.msra.mxu0 %v3880
      %3959 = vmatprep.subr.bf16.mxu0 0
      %3960 = vmatpush1.bf16.xpose.msra.mxu0 %v3881
      %3961 = vmatprep.subr.bf16.mxu0 0
      %3962 = vmatpush1.bf16.xpose.msra.mxu0 %v3882
      %3963 = vmatprep.mubr.bf16.mxu0 0
      %3964 = vmatmul.mubr.bf16.gmra.mrb[0].mxu0 %v3883
      %v3965 = vpop.f32.mrb[0].mxu0
      %v3966 = vadd.f32 %v3888, %v3965
      %v3967 = vpop.f32.mrb[0].mxu0
      %v3968 = vadd.f32 %v3888, %v3967
      %v3969 = vpop.f32.mrb[0].mxu0
      %v3970 = vpop.f32.mrb[0].mxu0
      %3971 = vdwg.mxu0
      %3972 = vst [vmem:[%s445] sm:$0x1f] %v3925
      %s3973 = scalar_lea.vmem %s445, 8
      %3974 = vst [vmem:[%s3973] sm:$0x1f] %v3927
      %s3975 = scalar_lea.vmem %s445, 16
      %3976 = vst [vmem:[%s3975] sm:$0x1f] %v3966
      %s3977 = scalar_lea.vmem %s445, 24
      %3978 = vst [vmem:[%s3977] sm:$0x1f] %v3968
      %s3979 = smul.u32 4, %s24
      %p3980 = scmp.lt.s32.totalorder %s3979, 7
      %s3981 = scalar_select %p3980, %s3979, 7
      %s3982 = smul.addr %s3981, 8
      %s3983 = scalar_lea.vmem %s13, %s3982
      // Predicated region
      $region73: #{tpu_custom_call.1} parent=71 // pred_check
        %p3984 = pneg %p320
      $region74: #{tpu_custom_call.1} parent=71 // pred_check_branch
        %3986 = sbr.rel (%p3984) target = $region76
      $region75: #{tpu_custom_call.1} parent=71 // pred_region
        %s3987 = smul.u32 4, %s24
      $region76: #{tpu_custom_call.1} parent=71 // pred_fallthru
        _
    $region72: #{tpu_custom_call.1} parent=5 // pred_fallthru
      _
    %p3988 = scmp.le.s32.totalorder 2, %s19
    // Predicated region
    $region77: #{tpu_custom_call.1} parent=5 // pred_check
      %p3989 = pneg %p3988
    $region78: #{tpu_custom_call.1} parent=5 // pred_check_branch
      %3991 = sbr.rel (%p3989) target = $region80
    $region79: #{tpu_custom_call.1} parent=5 // pred_region
      %s3992 = ssub.s32 %s19, 2
      // Predicated region
      $region81: #{tpu_custom_call.1} parent=79 // pred_check
        %p3993 = pneg %p326
      $region82: #{tpu_custom_call.1} parent=79 // pred_check_branch
        %3995 = sbr.rel (%p3993) target = $region84
      $region83: #{tpu_custom_call.1} parent=79 // pred_region
        %s3996 = smul.u32 4, %s25
        %p3997 = scmp.lt.s32.totalorder %s3996, 7
        %s3998 = scalar_select %p3997, %s3996, 7
        %s3999 = smul.addr %s3998, 8
        %s4000 = scalar_lea.vmem %s13, %s3999
      $region84: #{tpu_custom_call.1} parent=79 // pred_fallthru
        _
    $region80: #{tpu_custom_call.1} parent=5 // pred_fallthru
      _
  $region6: #{tpu_custom_call.1} parent=0 // loop_footer
    %s23 = sadd.s32 1, %s19
  $region7: #{tpu_custom_call.1} parent=0 // loop_footer_branch
    %18 = sbr.rel target = $region3
  $region8: #{tpu_custom_call.1} parent=0 // loop_exit
    _

</llo_original>
